<compile_context>
chip_gen: v5e
topology: v5e:2x2
jax: 0.10.0
libtpu: 0.0.40
codegen_flags: <defaults>
</compile_context>

<pallas_src>
import functools

import jax
import jax.numpy as jnp
from jax.experimental import pallas as pl
from jax.experimental.pallas import tpu as pltpu

BN_EPS = 1e-5


def _round_up(x, m):
    return (x + m - 1) // m * m


def _out_size(size, k, s, p, d):
    return (size + 2 * p - d * (k - 1) - 1) // s + 1


def _window(arr3, i0, j0, oh, ow, sh, sw):
    """Static (strided) window arr3[i0::sh, j0::sw, :] of extent (oh, ow)."""
    h_hi = i0 + (oh - 1) * sh + 1
    w_hi = j0 + (ow - 1) * sw + 1
    strides = None if (sh == 1 and sw == 1) else (sh, sw, 1)
    return jax.lax.slice(arr3, (i0, j0, 0), (h_hi, w_hi, arr3.shape[2]), strides)


# --------------------------------------------------------------------------
# Kernel 1: fused conv (bias) + max-pool + partial BN statistics.
# Grid: (N,)  -- "parallel" (independent per batch element).
# --------------------------------------------------------------------------
def _conv_pool_stats_kernel(x_ref, w_ref, b_ref,
                            pool_ref, psum_ref, psumsq_ref,
                            buf_ref, *,
                            kh, kw, sh, sw, ph, pw, dh, dw,
                            oh, ow, oh2, ow2, cin_p, cout_p):
    # ---- Conv2d: accumulate over the KH*KW window positions (unrolled) ----
    x = x_ref[0]                                       # (HP, WP, cin_p) bf16
    acc = jnp.zeros((oh * ow, cout_p), jnp.float32)
    for k in range(kh * kw):
        ki, kj = divmod(k, kw)
        xk = _window(x, ki * dh, kj * dw, oh, ow, sh, sw)       # (oh, ow, cin_p)
        xk2 = xk.reshape(oh * ow, cin_p)
        acc = acc + jnp.dot(xk2, w_ref[k],
                            preferred_element_type=jnp.float32)  # MXU, f32 acc
    conv = (acc + b_ref[...]).reshape(oh, ow, cout_p)            # + bias (f32)

    # ---- MaxPool2d: -inf padded ring in VMEM scratch, windows unrolled ----
    buf_ref[...] = jnp.full((oh + 2 * ph, ow + 2 * pw, cout_p),
                            -jnp.inf, jnp.float32)
    buf_ref[ph:ph + oh, pw:pw + ow, :] = conv
    padded = buf_ref[...]
    pooled = _window(padded, 0, 0, oh2, ow2, sh, sw)
    for k in range(1, kh * kw):
        ki, kj = divmod(k, kw)
        pooled = jnp.maximum(pooled,
                             _window(padded, ki * dh, kj * dw, oh2, ow2, sh, sw))
    pool_ref[0] = pooled                                          # (oh2, ow2, cout_p)

    # ---- Partial BatchNorm statistics for this grid step ----
    p2 = pooled.reshape(oh2 * ow2, cout_p)
    psum_ref[0] = jnp.sum(p2, axis=0, keepdims=True)              # (1, cout_p)
    psumsq_ref[0] = jnp.sum(p2 * p2, axis=0, keepdims=True)


# --------------------------------------------------------------------------
# Kernel 2: normalize + affine + ReLU, tiled over the flattened rows.
# --------------------------------------------------------------------------
def _bn_relu_kernel(p_ref, scale_ref, shift_ref, o_ref):
    o_ref[...] = jnp.maximum(p_ref[...] * scale_ref[...] + shift_ref[...], 0.0)


# --------------------------------------------------------------------------
# Wrapper
# --------------------------------------------------------------------------
@functools.partial(jax.jit, static_argnames=("kernels", "strides", "paddings", "dilations"))
def conv2d_block(x_nchw, w_hwio, bias, gamma, beta,
                 kernels, strides, paddings, dilations):
    """Forward pass of Conv2dBlock (NCHW in / NCHW out)."""
    kh, kw = kernels
    sh, sw = strides
    ph, pw = paddings
    dh, dw = dilations

    n, cin, h, w = x_nchw.shape
    cout = w_hwio.shape[-1]
    cin_p = _round_up(cin, 8)        # sublane alignment for the matmul K dim
    cout_p = _round_up(cout, 128)    # lane-dense output / MXU N dim

    oh = _out_size(h, kh, sh, ph, dh)
    ow = _out_size(w, kw, sw, pw, dw)
    oh2 = _out_size(oh, kh, sh, ph, dh)
    ow2 = _out_size(ow, kw, sw, pw, dw)
    hp, wp = h + 2 * ph, w + 2 * pw

    # NHWC, zero spatial pad, zero channel pad, bf16 for the MXU.
    x_nhwc = jnp.transpose(x_nchw, (0, 2, 3, 1)).astype(jnp.float32)
    x_pad = jnp.pad(x_nhwc, ((0, 0), (ph, ph), (pw, pw), (0, cin_p - cin))
                    ).astype(jnp.bfloat16)
    w_k = jnp.pad(w_hwio.astype(jnp.float32),
                  ((0, 0), (0, 0), (0, cin_p - cin), (0, cout_p - cout))
                  ).reshape(kh * kw, cin_p, cout_p).astype(jnp.bfloat16)
    b_p = jnp.pad(bias.astype(jnp.float32), ((0, cout_p - cout),)).reshape(1, cout_p)

    kernel_ab = functools.partial(
        _conv_pool_stats_kernel,
        kh=kh, kw=kw, sh=sh, sw=sw, ph=ph, pw=pw, dh=dh, dw=dw,
        oh=oh, ow=ow, oh2=oh2, ow2=ow2, cin_p=cin_p, cout_p=cout_p)

    pooled, psum, psumsq = pl.pallas_call(
        kernel_ab,
        grid=(n,),
        in_specs=[
            pl.BlockSpec((1, hp, wp, cin_p), lambda i: (i, 0, 0, 0)),
            pl.BlockSpec((kh * kw, cin_p, cout_p), lambda i: (0, 0, 0)),
            pl.BlockSpec((1, cout_p), lambda i: (0, 0)),
        ],
        out_specs=(
            pl.BlockSpec((1, oh2, ow2, cout_p), lambda i: (i, 0, 0, 0)),
            pl.BlockSpec((1, 1, cout_p), lambda i: (i, 0, 0)),
            pl.BlockSpec((1, 1, cout_p), lambda i: (i, 0, 0)),
        ),
        out_shape=(
            jax.ShapeDtypeStruct((n, oh2, ow2, cout_p), jnp.float32),
            jax.ShapeDtypeStruct((n, 1, cout_p), jnp.float32),
            jax.ShapeDtypeStruct((n, 1, cout_p), jnp.float32),
        ),
        scratch_shapes=[pltpu.VMEM((oh + 2 * ph, ow + 2 * pw, cout_p), jnp.float32)],
        compiler_params=pltpu.CompilerParams(
            dimension_semantics=("parallel",),
            vmem_limit_bytes=32 * 1024 * 1024),
    )(x_pad, w_k, b_p)

    # --- Combine per-step partial stats (tiny (N,1,Cpad) reduce) and fold
    #     BatchNorm (training-mode batch stats, biased var) into scale/shift.
    m2 = n * oh2 * ow2
    total = jnp.sum(psum, axis=0)                       # (1, cout_p)
    total_sq = jnp.sum(psumsq, axis=0)
    mean = total / m2
    var = jnp.maximum(total_sq / m2 - mean * mean, 0.0)
    gamma_p = jnp.pad(gamma.astype(jnp.float32), ((0, cout_p - cout),)).reshape(1, cout_p)
    beta_p = jnp.pad(beta.astype(jnp.float32), ((0, cout_p - cout),)).reshape(1, cout_p)
    scale = gamma_p * jax.lax.rsqrt(var + BN_EPS)
    shift = beta_p - mean * scale

    # --- Normalize + affine + ReLU, tiled over rows (lane-dense 128 channels).
    pooled2d = pooled.reshape(m2, cout_p)
    tm = 512 if m2 >= 4096 else 128        # bigger tiles for real problem sizes
    m2_pad = _round_up(m2, tm)
    if m2_pad != m2:
        pooled2d = jnp.pad(pooled2d, ((0, m2_pad - m2), (0, 0)))

    out2d = pl.pallas_call(
        _bn_relu_kernel,
        grid=(m2_pad // tm,),
        in_specs=[
            pl.BlockSpec((tm, cout_p), lambda i: (i, 0)),
            pl.BlockSpec((1, cout_p), lambda i: (0, 0)),
            pl.BlockSpec((1, cout_p), lambda i: (0, 0)),
        ],
        out_specs=pl.BlockSpec((tm, cout_p), lambda i: (i, 0)),
        out_shape=jax.ShapeDtypeStruct((m2_pad, cout_p), jnp.float32),
        compiler_params=pltpu.CompilerParams(
            dimension_semantics=("parallel",),
            vmem_limit_bytes=32 * 1024 * 1024),
    )(pooled2d, scale, shift)

    out = out2d[:m2].reshape(n, oh2, ow2, cout_p)[..., :cout]
    return jnp.transpose(out, (0, 3, 1, 2))             # back to NCHW


# --------------------------------------------------------------------------
# Pure-JAX reference (for a self-check)
# --------------------------------------------------------------------------
def _reference(x_nchw, w_hwio, bias, gamma, beta, kernels, strides, paddings, dilations):
    kh, kw = kernels
    sh, sw = strides
    ph, pw = paddings
    dh, dw = dilations
    w_oihw = jnp.transpose(w_hwio, (3, 2, 0, 1))
    conv = jax.lax.conv_general_dilated(
        x_nchw, w_oihw, window_strides=(sh, sw),
        padding=((ph, ph), (pw, pw)), rhs_dilation=(dh, dw),
        dimension_numbers=("NCHW", "OIHW", "NCHW"),
        precision=jax.lax.Precision.HIGHEST,
    ) + bias.reshape(1, -1, 1, 1)
    pooled = jax.lax.reduce_window(
        conv, -jnp.inf, jax.lax.max,
        window_dimensions=(1, 1, kh, kw),
        window_strides=(1, 1, sh, sw),
        padding=((0, 0), (0, 0), (ph, ph), (pw, pw)),
        window_dilation=(1, 1, dh, dw),
    )
    mean = pooled.mean(axis=(0, 2, 3), keepdims=True)
    var = ((pooled - mean) ** 2).mean(axis=(0, 2, 3), keepdims=True)
    xhat = (pooled - mean) * jax.lax.rsqrt(var + BN_EPS)
    y = xhat * gamma.reshape(1, -1, 1, 1) + beta.reshape(1, -1, 1, 1)
    return jnp.maximum(y, 0.0)


# --------------------------------------------------------------------------
if __name__ == "__main__":
    conv_filters_in = 4
    conv_filters_out = 8
    conv_kernels = (3, 3)
    conv_strides = (1, 1)
    paddings = (1, 1)
    dilations = (1, 1)

    key = jax.random.PRNGKey(0)
    kx, kw_, kb = jax.random.split(key, 3)

    x = jax.random.normal(kx, (2, conv_filters_in, 16, 16), dtype=jnp.float32)
    fan_in = conv_filters_in * conv_kernels[0] * conv_kernels[1]
    bound = 1.0 / (fan_in ** 0.5)
    w = jax.random.uniform(kw_, (conv_kernels[0], conv_kernels[1],
                                 conv_filters_in, conv_filters_out),
                           minval=-bound, maxval=bound, dtype=jnp.float32)
    b = jax.random.uniform(kb, (conv_filters_out,), minval=-bound, maxval=bound,
                           dtype=jnp.float32)
    gamma = jnp.ones((conv_filters_out,), jnp.float32)   # BatchNorm default init
    beta = jnp.zeros((conv_filters_out,), jnp.float32)

    out = conv2d_block(x, w, b, gamma, beta,
                       kernels=conv_kernels, strides=conv_strides,
                       paddings=paddings, dilations=dilations)
    out = jax.block_until_ready(out)

    # Reference on bf16-rounded conv inputs (the kernel feeds the MXU bf16 with
    # f32 accumulation, per the perf review), f32 everywhere else.
    x_q = x.astype(jnp.bfloat16).astype(jnp.float32)
    w_q = w.astype(jnp.bfloat16).astype(jnp.float32)
    ref = _reference(x_q, w_q, b, gamma, beta, conv_kernels, conv_strides,
                     paddings, dilations)
    assert out.shape == ref.shape, (out.shape, ref.shape)
    assert jnp.allclose(out, ref, atol=2e-3, rtol=2e-3), \
        float(jnp.max(jnp.abs(out - ref)))

    # TODO(synk): BatchNorm running_mean/running_var buffer updates (stateful
    # tracking) are not modeled; training-mode batch statistics are used.
    print("KERNEL_OK")
</pallas_src>

<mosaic_0001>
module attributes {stable_mosaic.version = 11 : i64} {
  func.func @_bn_relu_kernel(%arg0: i32, %arg1: memref<128x128xf32, #tpu.memory_space<vmem>>, %arg2: memref<1x128xf32, #tpu.memory_space<vmem>>, %arg3: memref<1x128xf32, #tpu.memory_space<vmem>>, %arg4: memref<128x128xf32, #tpu.memory_space<vmem>>) attributes {dimension_semantics = [#tpu.dimension_semantics<parallel>], iteration_bounds = array<i64: 4>, scalar_prefetch = 0 : i64, scratch_operands = 0 : i64, tpu.core_type = #tpu.core_type<tc>, window_params = [{transform_indices = @transform_0, window_bounds = array<i64: 128, 128>}, {pipeline_mode = #tpu.pipeline_mode<synchronous>, transform_indices = @transform_1, window_bounds = array<i64: 1, 128>}, {pipeline_mode = #tpu.pipeline_mode<synchronous>, transform_indices = @transform_2, window_bounds = array<i64: 1, 128>}, {transform_indices = @transform_3, window_bounds = array<i64: 128, 128>}]} {
    %c0 = arith.constant 0 : index
    %c0_0 = arith.constant 0 : index
    %0 = vector.load %arg1[%c0, %c0_0] : memref<128x128xf32, #tpu.memory_space<vmem>>, vector<128x128xf32>
    %c0_1 = arith.constant 0 : index
    %c0_2 = arith.constant 0 : index
    %1 = vector.load %arg2[%c0_1, %c0_2] : memref<1x128xf32, #tpu.memory_space<vmem>>, vector<1x128xf32>
    %2 = vector.broadcast %1 : vector<1x128xf32> to vector<128x128xf32>
    %3 = arith.mulf %0, %2 : vector<128x128xf32>
    %c0_3 = arith.constant 0 : index
    %c0_4 = arith.constant 0 : index
    %4 = vector.load %arg3[%c0_3, %c0_4] : memref<1x128xf32, #tpu.memory_space<vmem>>, vector<1x128xf32>
    %5 = vector.broadcast %4 : vector<1x128xf32> to vector<128x128xf32>
    %6 = arith.addf %3, %5 : vector<128x128xf32>
    %cst = arith.constant 0.000000e+00 : f32
    %7 = vector.broadcast %cst : f32 to vector<128x128xf32>
    %8 = arith.maximumf %6, %7 : vector<128x128xf32>
    %c0_5 = arith.constant 0 : index
    %c0_6 = arith.constant 0 : index
    %9 = vector.load %arg4[%c0_5, %c0_6] : memref<128x128xf32, #tpu.memory_space<vmem>>, vector<128x128xf32>
    tpu.vector_store %arg4[%c0_5, %c0_6], %8 {strides = array<i32>} : memref<128x128xf32, #tpu.memory_space<vmem>>, vector<128x128xf32>,
    return
  }
  func.func @transform_0(%arg0: i32) -> (i32, i32) {
    %c0_i32 = arith.constant 0 : i32
    %c0_i32_0 = arith.constant 0 : i32
    return %arg0, %c0_i32 : i32, i32
  }
  func.func @transform_1(%arg0: i32) -> (i32, i32) {
    %c0_i32 = arith.constant 0 : i32
    %c0_i32_0 = arith.constant 0 : i32
    %c0_i32_1 = arith.constant 0 : i32
    return %c0_i32, %c0_i32_0 : i32, i32
  }
  func.func @transform_2(%arg0: i32) -> (i32, i32) {
    %c0_i32 = arith.constant 0 : i32
    %c0_i32_0 = arith.constant 0 : i32
    %c0_i32_1 = arith.constant 0 : i32
    return %c0_i32, %c0_i32_0 : i32, i32
  }
  func.func @transform_3(%arg0: i32) -> (i32, i32) {
    %c0_i32 = arith.constant 0 : i32
    %c0_i32_0 = arith.constant 0 : i32
    return %arg0, %c0_i32 : i32, i32
  }
}

module attributes {stable_mosaic.version = 11 : i64} {
  func.func @_conv_pool_stats_kernel(%arg0: i32, %arg1: memref<1x18x18x8xbf16, #tpu.memory_space<vmem>>, %arg2: memref<9x8x128xbf16, #tpu.memory_space<vmem>>, %arg3: memref<1x128xf32, #tpu.memory_space<vmem>>, %arg4: memref<1x16x16x128xf32, #tpu.memory_space<vmem>>, %arg5: memref<1x1x128xf32, #tpu.memory_space<vmem>>, %arg6: memref<1x1x128xf32, #tpu.memory_space<vmem>>, %arg7: memref<18x18x128xf32, #tpu.memory_space<vmem>>) attributes {dimension_semantics = [#tpu.dimension_semantics<parallel>], iteration_bounds = array<i64: 2>, scalar_prefetch = 0 : i64, scratch_operands = 1 : i64, tpu.core_type = #tpu.core_type<tc>, window_params = [{transform_indices = @transform_0, window_bounds = array<i64: 1, 18, 18, 8>}, {pipeline_mode = #tpu.pipeline_mode<synchronous>, transform_indices = @transform_1, window_bounds = array<i64: 9, 8, 128>}, {pipeline_mode = #tpu.pipeline_mode<synchronous>, transform_indices = @transform_2, window_bounds = array<i64: 1, 128>}, {transform_indices = @transform_3, window_bounds = array<i64: 1, 16, 16, 128>}, {transform_indices = @transform_4, window_bounds = array<i64: 1, 1, 128>}, {transform_indices = @transform_5, window_bounds = array<i64: 1, 1, 128>}]} {
    %c0 = arith.constant 0 : index
    %c0_0 = arith.constant 0 : index
    %c0_1 = arith.constant 0 : index
    %c0_2 = arith.constant 0 : index
    %0 = vector.load %arg1[%c0, %c0_0, %c0_1, %c0_2] : memref<1x18x18x8xbf16, #tpu.memory_space<vmem>>, vector<1x18x18x8xbf16>
    %1 = vector.shape_cast %0 : vector<1x18x18x8xbf16> to vector<18x18x8xbf16>
    %cst = arith.constant 0.000000e+00 : f32
    %2 = vector.broadcast %cst : f32 to vector<256x128xf32>
    %3 = vector.extract_strided_slice %1 {offsets = [0, 0, 0], sizes = [16, 16, 8], strides = [1, 1, 1]} : vector<18x18x8xbf16> to vector<16x16x8xbf16>
    %4 = vector.shape_cast %3 : vector<16x16x8xbf16> to vector<256x8xbf16>
    %c0_3 = arith.constant 0 : index
    %c0_4 = arith.constant 0 : index
    %c0_5 = arith.constant 0 : index
    %5 = vector.load %arg2[%c0_3, %c0_4, %c0_5] : memref<9x8x128xbf16, #tpu.memory_space<vmem>>, vector<1x8x128xbf16>
    %6 = vector.shape_cast %5 : vector<1x8x128xbf16> to vector<8x128xbf16>
    %cst_6 = arith.constant dense<0.000000e+00> : vector<256x128xf32>
    %7 = tpu.matmul %4, %6, %cst_6 {dimension_numbers = #tpu.dot_dimension_numbers<[1], [0], [0], [1], [0, 0, 1, 1], [], []>} : vector<256x8xbf16>, vector<8x128xbf16>, vector<256x128xf32> -> vector<256x128xf32>
    %8 = arith.addf %2, %7 : vector<256x128xf32>
    %9 = vector.extract_strided_slice %1 {offsets = [0, 1, 0], sizes = [16, 16, 8], strides = [1, 1, 1]} : vector<18x18x8xbf16> to vector<16x16x8xbf16>
    %10 = vector.shape_cast %9 : vector<16x16x8xbf16> to vector<256x8xbf16>
    %c1 = arith.constant 1 : index
    %c0_7 = arith.constant 0 : index
    %c0_8 = arith.constant 0 : index
    %11 = vector.load %arg2[%c1, %c0_7, %c0_8] : memref<9x8x128xbf16, #tpu.memory_space<vmem>>, vector<1x8x128xbf16>
    %12 = vector.shape_cast %11 : vector<1x8x128xbf16> to vector<8x128xbf16>
    %cst_9 = arith.constant dense<0.000000e+00> : vector<256x128xf32>
    %13 = tpu.matmul %10, %12, %cst_9 {dimension_numbers = #tpu.dot_dimension_numbers<[1], [0], [0], [1], [0, 0, 1, 1], [], []>} : vector<256x8xbf16>, vector<8x128xbf16>, vector<256x128xf32> -> vector<256x128xf32>
    %14 = arith.addf %8, %13 : vector<256x128xf32>
    %15 = vector.extract_strided_slice %1 {offsets = [0, 2, 0], sizes = [16, 16, 8], strides = [1, 1, 1]} : vector<18x18x8xbf16> to vector<16x16x8xbf16>
    %16 = vector.shape_cast %15 : vector<16x16x8xbf16> to vector<256x8xbf16>
    %c2 = arith.constant 2 : index
    %c0_10 = arith.constant 0 : index
    %c0_11 = arith.constant 0 : index
    %17 = vector.load %arg2[%c2, %c0_10, %c0_11] : memref<9x8x128xbf16, #tpu.memory_space<vmem>>, vector<1x8x128xbf16>
    %18 = vector.shape_cast %17 : vector<1x8x128xbf16> to vector<8x128xbf16>
    %cst_12 = arith.constant dense<0.000000e+00> : vector<256x128xf32>
    %19 = tpu.matmul %16, %18, %cst_12 {dimension_numbers = #tpu.dot_dimension_numbers<[1], [0], [0], [1], [0, 0, 1, 1], [], []>} : vector<256x8xbf16>, vector<8x128xbf16>, vector<256x128xf32> -> vector<256x128xf32>
    %20 = arith.addf %14, %19 : vector<256x128xf32>
    %21 = vector.extract_strided_slice %1 {offsets = [1, 0, 0], sizes = [16, 16, 8], strides = [1, 1, 1]} : vector<18x18x8xbf16> to vector<16x16x8xbf16>
    %22 = vector.shape_cast %21 : vector<16x16x8xbf16> to vector<256x8xbf16>
    %c3 = arith.constant 3 : index
    %c0_13 = arith.constant 0 : index
    %c0_14 = arith.constant 0 : index
    %23 = vector.load %arg2[%c3, %c0_13, %c0_14] : memref<9x8x128xbf16, #tpu.memory_space<vmem>>, vector<1x8x128xbf16>
    %24 = vector.shape_cast %23 : vector<1x8x128xbf16> to vector<8x128xbf16>
    %cst_15 = arith.constant dense<0.000000e+00> : vector<256x128xf32>
    %25 = tpu.matmul %22, %24, %cst_15 {dimension_numbers = #tpu.dot_dimension_numbers<[1], [0], [0], [1], [0, 0, 1, 1], [], []>} : vector<256x8xbf16>, vector<8x128xbf16>, vector<256x128xf32> -> vector<256x128xf32>
    %26 = arith.addf %20, %25 : vector<256x128xf32>
    %27 = vector.extract_strided_slice %1 {offsets = [1, 1, 0], sizes = [16, 16, 8], strides = [1, 1, 1]} : vector<18x18x8xbf16> to vector<16x16x8xbf16>
    %28 = vector.shape_cast %27 : vector<16x16x8xbf16> to vector<256x8xbf16>
    %c4 = arith.constant 4 : index
    %c0_16 = arith.constant 0 : index
    %c0_17 = arith.constant 0 : index
    %29 = vector.load %arg2[%c4, %c0_16, %c0_17] : memref<9x8x128xbf16, #tpu.memory_space<vmem>>, vector<1x8x128xbf16>
    %30 = vector.shape_cast %29 : vector<1x8x128xbf16> to vector<8x128xbf16>
    %cst_18 = arith.constant dense<0.000000e+00> : vector<256x128xf32>
    %31 = tpu.matmul %28, %30, %cst_18 {dimension_numbers = #tpu.dot_dimension_numbers<[1], [0], [0], [1], [0, 0, 1, 1], [], []>} : vector<256x8xbf16>, vector<8x128xbf16>, vector<256x128xf32> -> vector<256x128xf32>
    %32 = arith.addf %26, %31 : vector<256x128xf32>
    %33 = vector.extract_strided_slice %1 {offsets = [1, 2, 0], sizes = [16, 16, 8], strides = [1, 1, 1]} : vector<18x18x8xbf16> to vector<16x16x8xbf16>
    %34 = vector.shape_cast %33 : vector<16x16x8xbf16> to vector<256x8xbf16>
    %c5 = arith.constant 5 : index
    %c0_19 = arith.constant 0 : index
    %c0_20 = arith.constant 0 : index
    %35 = vector.load %arg2[%c5, %c0_19, %c0_20] : memref<9x8x128xbf16, #tpu.memory_space<vmem>>, vector<1x8x128xbf16>
    %36 = vector.shape_cast %35 : vector<1x8x128xbf16> to vector<8x128xbf16>
    %cst_21 = arith.constant dense<0.000000e+00> : vector<256x128xf32>
    %37 = tpu.matmul %34, %36, %cst_21 {dimension_numbers = #tpu.dot_dimension_numbers<[1], [0], [0], [1], [0, 0, 1, 1], [], []>} : vector<256x8xbf16>, vector<8x128xbf16>, vector<256x128xf32> -> vector<256x128xf32>
    %38 = arith.addf %32, %37 : vector<256x128xf32>
    %39 = vector.extract_strided_slice %1 {offsets = [2, 0, 0], sizes = [16, 16, 8], strides = [1, 1, 1]} : vector<18x18x8xbf16> to vector<16x16x8xbf16>
    %40 = vector.shape_cast %39 : vector<16x16x8xbf16> to vector<256x8xbf16>
    %c6 = arith.constant 6 : index
    %c0_22 = arith.constant 0 : index
    %c0_23 = arith.constant 0 : index
    %41 = vector.load %arg2[%c6, %c0_22, %c0_23] : memref<9x8x128xbf16, #tpu.memory_space<vmem>>, vector<1x8x128xbf16>
    %42 = vector.shape_cast %41 : vector<1x8x128xbf16> to vector<8x128xbf16>
    %cst_24 = arith.constant dense<0.000000e+00> : vector<256x128xf32>
    %43 = tpu.matmul %40, %42, %cst_24 {dimension_numbers = #tpu.dot_dimension_numbers<[1], [0], [0], [1], [0, 0, 1, 1], [], []>} : vector<256x8xbf16>, vector<8x128xbf16>, vector<256x128xf32> -> vector<256x128xf32>
    %44 = arith.addf %38, %43 : vector<256x128xf32>
    %45 = vector.extract_strided_slice %1 {offsets = [2, 1, 0], sizes = [16, 16, 8], strides = [1, 1, 1]} : vector<18x18x8xbf16> to vector<16x16x8xbf16>
    %46 = vector.shape_cast %45 : vector<16x16x8xbf16> to vector<256x8xbf16>
    %c7 = arith.constant 7 : index
    %c0_25 = arith.constant 0 : index
    %c0_26 = arith.constant 0 : index
    %47 = vector.load %arg2[%c7, %c0_25, %c0_26] : memref<9x8x128xbf16, #tpu.memory_space<vmem>>, vector<1x8x128xbf16>
    %48 = vector.shape_cast %47 : vector<1x8x128xbf16> to vector<8x128xbf16>
    %cst_27 = arith.constant dense<0.000000e+00> : vector<256x128xf32>
    %49 = tpu.matmul %46, %48, %cst_27 {dimension_numbers = #tpu.dot_dimension_numbers<[1], [0], [0], [1], [0, 0, 1, 1], [], []>} : vector<256x8xbf16>, vector<8x128xbf16>, vector<256x128xf32> -> vector<256x128xf32>
    %50 = arith.addf %44, %49 : vector<256x128xf32>
    %51 = vector.extract_strided_slice %1 {offsets = [2, 2, 0], sizes = [16, 16, 8], strides = [1, 1, 1]} : vector<18x18x8xbf16> to vector<16x16x8xbf16>
    %52 = vector.shape_cast %51 : vector<16x16x8xbf16> to vector<256x8xbf16>
    %c8 = arith.constant 8 : index
    %c0_28 = arith.constant 0 : index
    %c0_29 = arith.constant 0 : index
    %53 = vector.load %arg2[%c8, %c0_28, %c0_29] : memref<9x8x128xbf16, #tpu.memory_space<vmem>>, vector<1x8x128xbf16>
    %54 = vector.shape_cast %53 : vector<1x8x128xbf16> to vector<8x128xbf16>
    %cst_30 = arith.constant dense<0.000000e+00> : vector<256x128xf32>
    %55 = tpu.matmul %52, %54, %cst_30 {dimension_numbers = #tpu.dot_dimension_numbers<[1], [0], [0], [1], [0, 0, 1, 1], [], []>} : vector<256x8xbf16>, vector<8x128xbf16>, vector<256x128xf32> -> vector<256x128xf32>
    %56 = arith.addf %50, %55 : vector<256x128xf32>
    %c0_31 = arith.constant 0 : index
    %c0_32 = arith.constant 0 : index
    %57 = vector.load %arg3[%c0_31, %c0_32] : memref<1x128xf32, #tpu.memory_space<vmem>>, vector<1x128xf32>
    %58 = vector.broadcast %57 : vector<1x128xf32> to vector<256x128xf32>
    %59 = arith.addf %56, %58 : vector<256x128xf32>
    %60 = vector.shape_cast %59 : vector<256x128xf32> to vector<16x16x128xf32>
    %cst_33 = arith.constant 0xFF800000 : f32
    %61 = vector.broadcast %cst_33 : f32 to vector<18x18x128xf32>
    %c0_34 = arith.constant 0 : index
    %c0_35 = arith.constant 0 : index
    %c0_36 = arith.constant 0 : index
    %62 = vector.load %arg7[%c0_34, %c0_35, %c0_36] : memref<18x18x128xf32, #tpu.memory_space<vmem>>, vector<18x18x128xf32>
    tpu.vector_store %arg7[%c0_34, %c0_35, %c0_36], %61 {strides = array<i32>} : memref<18x18x128xf32, #tpu.memory_space<vmem>>, vector<18x18x128xf32>,
    %c1_37 = arith.constant 1 : index
    %c1_38 = arith.constant 1 : index
    %c0_39 = arith.constant 0 : index
    %63 = vector.load %arg7[%c1_37, %c1_38, %c0_39] : memref<18x18x128xf32, #tpu.memory_space<vmem>>, vector<16x16x128xf32>
    tpu.vector_store %arg7[%c1_37, %c1_38, %c0_39], %60 {strides = array<i32>} : memref<18x18x128xf32, #tpu.memory_space<vmem>>, vector<16x16x128xf32>,
    %c0_40 = arith.constant 0 : index
    %c0_41 = arith.constant 0 : index
    %c0_42 = arith.constant 0 : index
    %64 = vector.load %arg7[%c0_40, %c0_41, %c0_42] : memref<18x18x128xf32, #tpu.memory_space<vmem>>, vector<18x18x128xf32>
    %65 = vector.extract_strided_slice %64 {offsets = [0, 0, 0], sizes = [16, 16, 128], strides = [1, 1, 1]} : vector<18x18x128xf32> to vector<16x16x128xf32>
    %66 = vector.extract_strided_slice %64 {offsets = [0, 1, 0], sizes = [16, 16, 128], strides = [1, 1, 1]} : vector<18x18x128xf32> to vector<16x16x128xf32>
    %67 = arith.maximumf %65, %66 : vector<16x16x128xf32>
    %68 = vector.extract_strided_slice %64 {offsets = [0, 2, 0], sizes = [16, 16, 128], strides = [1, 1, 1]} : vector<18x18x128xf32> to vector<16x16x128xf32>
    %69 = arith.maximumf %67, %68 : vector<16x16x128xf32>
    %70 = vector.extract_strided_slice %64 {offsets = [1, 0, 0], sizes = [16, 16, 128], strides = [1, 1, 1]} : vector<18x18x128xf32> to vector<16x16x128xf32>
    %71 = arith.maximumf %69, %70 : vector<16x16x128xf32>
    %72 = vector.extract_strided_slice %64 {offsets = [1, 1, 0], sizes = [16, 16, 128], strides = [1, 1, 1]} : vector<18x18x128xf32> to vector<16x16x128xf32>
    %73 = arith.maximumf %71, %72 : vector<16x16x128xf32>
    %74 = vector.extract_strided_slice %64 {offsets = [1, 2, 0], sizes = [16, 16, 128], strides = [1, 1, 1]} : vector<18x18x128xf32> to vector<16x16x128xf32>
    %75 = arith.maximumf %73, %74 : vector<16x16x128xf32>
    %76 = vector.extract_strided_slice %64 {offsets = [2, 0, 0], sizes = [16, 16, 128], strides = [1, 1, 1]} : vector<18x18x128xf32> to vector<16x16x128xf32>
    %77 = arith.maximumf %75, %76 : vector<16x16x128xf32>
    %78 = vector.extract_strided_slice %64 {offsets = [2, 1, 0], sizes = [16, 16, 128], strides = [1, 1, 1]} : vector<18x18x128xf32> to vector<16x16x128xf32>
    %79 = arith.maximumf %77, %78 : vector<16x16x128xf32>
    %80 = vector.extract_strided_slice %64 {offsets = [2, 2, 0], sizes = [16, 16, 128], strides = [1, 1, 1]} : vector<18x18x128xf32> to vector<16x16x128xf32>
    %81 = arith.maximumf %79, %80 : vector<16x16x128xf32>
    %c0_43 = arith.constant 0 : index
    %c0_44 = arith.constant 0 : index
    %c0_45 = arith.constant 0 : index
    %c0_46 = arith.constant 0 : index
    %82 = vector.load %arg4[%c0_43, %c0_44, %c0_45, %c0_46] : memref<1x16x16x128xf32, #tpu.memory_space<vmem>>, vector<1x16x16x128xf32>
    %83 = vector.shape_cast %82 : vector<1x16x16x128xf32> to vector<16x16x128xf32>
    %84 = vector.shape_cast %81 : vector<16x16x128xf32> to vector<1x16x16x128xf32>
    tpu.vector_store %arg4[%c0_43, %c0_44, %c0_45, %c0_46], %84 {strides = array<i32>} : memref<1x16x16x128xf32, #tpu.memory_space<vmem>>, vector<1x16x16x128xf32>,
    %85 = vector.shape_cast %81 : vector<16x16x128xf32> to vector<256x128xf32>
    %cst_47 = arith.constant dense<0.000000e+00> : vector<128xf32>
    %86 = vector.multi_reduction <add>, %85, %cst_47 [0] : vector<256x128xf32> to vector<128xf32>
    %87 = vector.shape_cast %86 : vector<128xf32> to vector<1x128xf32>
    %c0_48 = arith.constant 0 : index
    %c0_49 = arith.constant 0 : index
    %c0_50 = arith.constant 0 : index
    %88 = vector.load %arg5[%c0_48, %c0_49, %c0_50] : memref<1x1x128xf32, #tpu.memory_space<vmem>>, vector<1x1x128xf32>
    %89 = vector.shape_cast %88 : vector<1x1x128xf32> to vector<1x128xf32>
    %90 = vector.shape_cast %87 : vector<1x128xf32> to vector<1x1x128xf32>
    tpu.vector_store %arg5[%c0_48, %c0_49, %c0_50], %90 {strides = array<i32>} : memref<1x1x128xf32, #tpu.memory_space<vmem>>, vector<1x1x128xf32>,
    %91 = arith.mulf %85, %85 : vector<256x128xf32>
    %cst_51 = arith.constant dense<0.000000e+00> : vector<128xf32>
    %92 = vector.multi_reduction <add>, %91, %cst_51 [0] : vector<256x128xf32> to vector<128xf32>
    %93 = vector.shape_cast %92 : vector<128xf32> to vector<1x128xf32>
    %c0_52 = arith.constant 0 : index
    %c0_53 = arith.constant 0 : index
    %c0_54 = arith.constant 0 : index
    %94 = vector.load %arg6[%c0_52, %c0_53, %c0_54] : memref<1x1x128xf32, #tpu.memory_space<vmem>>, vector<1x1x128xf32>
    %95 = vector.shape_cast %94 : vector<1x1x128xf32> to vector<1x128xf32>
    %96 = vector.shape_cast %93 : vector<1x128xf32> to vector<1x1x128xf32>
    tpu.vector_store %arg6[%c0_52, %c0_53, %c0_54], %96 {strides = array<i32>} : memref<1x1x128xf32, #tpu.memory_space<vmem>>, vector<1x1x128xf32>,
    return
  }
  func.func @transform_0(%arg0: i32) -> (i32, i32, i32, i32) {
    %c0_i32 = arith.constant 0 : i32
    %c0_i32_0 = arith.constant 0 : i32
    %c0_i32_1 = arith.constant 0 : i32
    %c0_i32_2 = arith.constant 0 : i32
    return %arg0, %c0_i32, %c0_i32_0, %c0_i32_1 : i32, i32, i32, i32
  }
  func.func @transform_1(%arg0: i32) -> (i32, i32, i32) {
    %c0_i32 = arith.constant 0 : i32
    %c0_i32_0 = arith.constant 0 : i32
    %c0_i32_1 = arith.constant 0 : i32
    %c0_i32_2 = arith.constant 0 : i32
    return %c0_i32, %c0_i32_0, %c0_i32_1 : i32, i32, i32
  }
  func.func @transform_2(%arg0: i32) -> (i32, i32) {
    %c0_i32 = arith.constant 0 : i32
    %c0_i32_0 = arith.constant 0 : i32
    %c0_i32_1 = arith.constant 0 : i32
    return %c0_i32, %c0_i32_0 : i32, i32
  }
  func.func @transform_3(%arg0: i32) -> (i32, i32, i32, i32) {
    %c0_i32 = arith.constant 0 : i32
    %c0_i32_0 = arith.constant 0 : i32
    %c0_i32_1 = arith.constant 0 : i32
    %c0_i32_2 = arith.constant 0 : i32
    return %arg0, %c0_i32, %c0_i32_0, %c0_i32_1 : i32, i32, i32, i32
  }
  func.func @transform_4(%arg0: i32) -> (i32, i32, i32) {
    %c0_i32 = arith.constant 0 : i32
    %c0_i32_0 = arith.constant 0 : i32
    %c0_i32_1 = arith.constant 0 : i32
    return %arg0, %c0_i32, %c0_i32_0 : i32, i32, i32
  }
  func.func @transform_5(%arg0: i32) -> (i32, i32, i32) {
    %c0_i32 = arith.constant 0 : i32
    %c0_i32_0 = arith.constant 0 : i32
    %c0_i32_1 = arith.constant 0 : i32
    return %arg0, %c0_i32, %c0_i32_0 : i32, i32, i32
  }
}

</mosaic_0001>

<llo_original>
// kernel: conv2d_block.3
$region0: #{conv2d_block.3}
  #allocation0 [shape = 'u32[]', space=smem, size = 0x4, offset = 0x4, fixed_abs, tag = 'smem constant byte address 0x4 - core index']
  #allocation1 [shape = 'u32[72,128]{1,0:T(1,128)}', space=vmem, size = 0x9000, scoped, tag = 'internal scratch']
  %s0 = inlined_call_operand.vmem [shape: f32[512,128], index: 0, kind: input, shape index: {}]
  %s1 = inlined_call_operand.vmem [shape: f32[1,128], index: 1, kind: input, shape index: {}]
  %s2 = inlined_call_operand.vmem [shape: f32[1,128], index: 2, kind: input, shape index: {}]
  %s3 = inlined_call_operand.vmem [shape: f32[512,128], index: 3, kind: output, shape index: {}]
  %s4 = sld [smem:[#allocation0]]
  $region45: #{conv2d_block.3} parent=0
    _
  %s6 = ssub.s32 1, %s4
  %s7 = scalar_select 0, %s6, %s4
  loop: start=0, step=1, limit=6
  $region2: #{conv2d_block.3} parent=0 // loop_pre_header
    _
  $region3: #{conv2d_block.3} parent=0 // loop_header
    %s9 = sphi 0, %s13
    %p10 = scmp.ge.s32.totalorder %s9, 6
    %s19 = sphi 0, %s21
    %s22 = sphi 0, %s19
    %s23 = sphi 0, %s22
    %s39 = sphi 0, %s23
    %s43 = sphi 0, %s43
    %s45 = sphi 0, %s43
    %s46 = sphi 0, %s45
    %s60 = sphi 0, %s46
    %s64 = sphi 0, %s64
    %s66 = sphi 0, %s64
    %s67 = sphi 0, %s66
    %s81 = sphi 0, %s67
    %s87 = sphi 0, %s89
    %s90 = sphi 0, %s87
    %s91 = sphi 0, %s90
    %s107 = sphi 0, %s91
  $region4: #{conv2d_block.3} parent=0 // loop_header_branch
    %12 = sbr.rel (%p10) target = $region8
  $region5: #{conv2d_block.3} parent=0 // loop_body
    %s14 = ssub.s32 %s9, 1
    %s15 = ssub.s32 %s9, 2
    %s16 = sadd.s32 %s9, 1
    %s17 = ssub.s32 %s9, %s16
    %p18 = scmp.eq.s32.totalorder %s17, 0
    %s20 = sadd.s32 %s19, 1
    %s21 = scalar_select %p18, %s19, %s20
    %p24 = pneg %p18
    %p25 = scmp.eq.s32.totalorder %s9, 3
    %p26 = por %p24, %p25
    %p27 = scmp.ne.s32.totalorder %s19, %s22
    %p28 = scmp.eq.s32.totalorder %s9, 0
    %p29 = por %p27, %p28
    %p30 = scmp.ne.s32.totalorder %s19, %s22
    %p31 = scmp.eq.s32.totalorder %s14, 3
    %p32 = por %p30, %p31
    %p33 = scmp.ne.s32.totalorder %s22, %s23
    %p34 = scmp.eq.s32.totalorder %s14, 0
    %p35 = por %p33, %p34
    %p36 = scmp.ne.s32.totalorder %s22, %s23
    %p37 = scmp.eq.s32.totalorder %s15, 3
    %p38 = por %p36, %p37
    %p40 = scmp.ne.s32.totalorder %s23, %s39
    %p41 = scmp.eq.s32.totalorder %s15, 0
    %p42 = por %p40, %p41
    %s44 = sadd.s32 %s43, 1
    %p47 = scmp.eq.s32.totalorder %s9, 3
    %p48 = scmp.ne.s32.totalorder %s43, %s45
    %p49 = scmp.eq.s32.totalorder %s9, 0
    %p50 = por %p48, %p49
    %p51 = scmp.ne.s32.totalorder %s43, %s45
    %p52 = scmp.eq.s32.totalorder %s14, 3
    %p53 = por %p51, %p52
    %p54 = scmp.ne.s32.totalorder %s45, %s46
    %p55 = scmp.eq.s32.totalorder %s14, 0
    %p56 = por %p54, %p55
    %p57 = scmp.ne.s32.totalorder %s45, %s46
    %p58 = scmp.eq.s32.totalorder %s15, 3
    %p59 = por %p57, %p58
    %p61 = scmp.ne.s32.totalorder %s46, %s60
    %p62 = scmp.eq.s32.totalorder %s15, 0
    %p63 = por %p61, %p62
    %s65 = sadd.s32 %s64, 1
    %p68 = scmp.eq.s32.totalorder %s9, 3
    %p69 = scmp.ne.s32.totalorder %s64, %s66
    %p70 = scmp.eq.s32.totalorder %s9, 0
    %p71 = por %p69, %p70
    %p72 = scmp.ne.s32.totalorder %s64, %s66
    %p73 = scmp.eq.s32.totalorder %s14, 3
    %p74 = por %p72, %p73
    %p75 = scmp.ne.s32.totalorder %s66, %s67
    %p76 = scmp.eq.s32.totalorder %s14, 0
    %p77 = por %p75, %p76
    %p78 = scmp.ne.s32.totalorder %s66, %s67
    %p79 = scmp.eq.s32.totalorder %s15, 3
    %p80 = por %p78, %p79
    %p82 = scmp.ne.s32.totalorder %s67, %s81
    %p83 = scmp.eq.s32.totalorder %s15, 0
    %p84 = por %p82, %p83
    %s85 = ssub.s32 %s9, %s16
    %p86 = scmp.eq.s32.totalorder %s85, 0
    %s88 = sadd.s32 %s87, 1
    %s89 = scalar_select %p86, %s87, %s88
    %p92 = pneg %p86
    %p93 = scmp.eq.s32.totalorder %s9, 3
    %p94 = por %p92, %p93
    %p95 = scmp.ne.s32.totalorder %s87, %s90
    %p96 = scmp.eq.s32.totalorder %s9, 0
    %p97 = por %p95, %p96
    %p98 = scmp.ne.s32.totalorder %s87, %s90
    %p99 = scmp.eq.s32.totalorder %s14, 3
    %p100 = por %p98, %p99
    %p101 = scmp.ne.s32.totalorder %s90, %s91
    %p102 = scmp.eq.s32.totalorder %s14, 0
    %p103 = por %p101, %p102
    %p104 = scmp.ne.s32.totalorder %s90, %s91
    %p105 = scmp.eq.s32.totalorder %s15, 3
    %p106 = por %p104, %p105
    %p108 = scmp.ne.s32.totalorder %s91, %s107
    %p109 = scmp.eq.s32.totalorder %s15, 0
    %p110 = por %p108, %p109
    %p111 = scmp.le.s32.totalorder 1, %s9
    %p112 = scmp.lt.s32.totalorder %s9, 5
    %p113 = pnand %p111, %p112
    %p114 = pneg %p113
    // Predicated region
    $region9: #{conv2d_block.3} parent=5 // pred_check
      _
    $region10: #{conv2d_block.3} parent=5 // pred_check_branch
      %116 = sbr.rel (%p113) target = $region12
    $region11: #{conv2d_block.3} parent=5 // pred_region
      %s117 = ssub.s32 %s9, 1
      // Predicated region
      $region13: #{conv2d_block.3} parent=11 // pred_check
        %p118 = pneg %p56
      $region14: #{conv2d_block.3} parent=11 // pred_check_branch
        %120 = sbr.rel (%p118) target = $region16
      $region15: #{conv2d_block.3} parent=11 // pred_region
        _
      $region16: #{conv2d_block.3} parent=11 // pred_fallthru
        _
      // Predicated region
      $region17: #{conv2d_block.3} parent=11 // pred_check
        %p121 = pneg %p77
      $region18: #{conv2d_block.3} parent=11 // pred_check_branch
        %123 = sbr.rel (%p121) target = $region20
      $region19: #{conv2d_block.3} parent=11 // pred_region
        _
      $region20: #{conv2d_block.3} parent=11 // pred_fallthru
        _
    $region12: #{conv2d_block.3} parent=5 // pred_fallthru
      _
    %p124 = scmp.lt.s32.totalorder %s9, 4
    // Predicated region
    $region21: #{conv2d_block.3} parent=5 // pred_check
      %p125 = pneg %p124
    $region22: #{conv2d_block.3} parent=5 // pred_check_branch
      %127 = sbr.rel (%p125) target = $region24
    $region23: #{conv2d_block.3} parent=5 // pred_region
      // Predicated region
      $region25: #{conv2d_block.3} parent=23 // pred_check
        %p128 = pneg %p29
      $region26: #{conv2d_block.3} parent=23 // pred_check_branch
        %130 = sbr.rel (%p128) target = $region28
      $region27: #{conv2d_block.3} parent=23 // pred_region
        %s131 = smul.u32 16, %s9
        %p132 = scmp.lt.s32.totalorder %s131, 63
        %s133 = scalar_select %p132, %s131, 63
        %s134 = smul.addr %s133, 8
        %s135 = scalar_lea.vmem %s0, %s134
        %s136 = smul.u32 16, %s9
      $region28: #{conv2d_block.3} parent=23 // pred_fallthru
        _
    $region24: #{conv2d_block.3} parent=5 // pred_fallthru
      _
    %p137 = scmp.le.s32.totalorder 1, %s9
    %p138 = scmp.lt.s32.totalorder %s9, 5
    %p139 = pnand %p137, %p138
    %p140 = pneg %p139
    // Predicated region
    $region29: #{conv2d_block.3} parent=5 // pred_check
      _
    $region30: #{conv2d_block.3} parent=5 // pred_check_branch
      %142 = sbr.rel (%p139) target = $region32
    $region31: #{conv2d_block.3} parent=5 // pred_region
      %s143 = ssub.s32 %s9, 1
      %s144 = smul.u32 16, %s14
      %p145 = scmp.lt.s32.totalorder %s144, 63
      %s146 = scalar_select %p145, %s144, 63
      %s147 = smul.addr %s146, 8
      %s148 = scalar_lea.vmem %s0, %s147
      %p149 = pneg %p35
      %p150 = pneg %p32
      %p151 = pneg %p56
      %p152 = pneg %p53
      %p153 = pneg %p77
      %p154 = pneg %p74
      %p155 = pneg %p103
      %p156 = pneg %p100
      %s157 = smul.u32 16, %s14
      %p158 = scmp.lt.s32.totalorder %s157, 63
      %s159 = scalar_select %p158, %s157, 63
      %s160 = smul.addr %s159, 8
      %s161 = scalar_lea.vmem %s3, %s160
      %s162 = smul.u32 16, %s14
      %p163 = scmp.lt.s32.totalorder %s162, 63
      %s164 = scalar_select %p163, %s162, 63
      %s165 = smul.addr %s164, 8
      %s166 = scalar_lea.vmem %s0, %s165
      %s167 = smul.u32 16, %s14
      %s168 = smul.u32 16, %s14
      %p169 = scmp.lt.s32.totalorder %s168, 63
      %s170 = scalar_select %p169, %s168, 63
      %s171 = smul.addr %s170, 8
      %s172 = scalar_lea.vmem %s3, %s171
      %s173 = smul.u32 16, %s14
      %v174 = vld [vmem:[%s166] sm:$0xff]
      %v175 = vld [vmem:[%s166 + $0x8] sm:$0xff]
      %v176 = vld [vmem:[%s166 + $0x10] sm:$0xff]
      %v177 = vld [vmem:[%s166 + $0x18] sm:$0xff]
      %v178 = vld [vmem:[%s166 + $0x20] sm:$0xff]
      %v179 = vld [vmem:[%s166 + $0x28] sm:$0xff]
      %v180 = vld [vmem:[%s166 + $0x30] sm:$0xff]
      %v181 = vld [vmem:[%s166 + $0x38] sm:$0xff]
      %v182 = vld [vmem:[%s166 + $0x40] sm:$0xff]
      %v183 = vld [vmem:[%s166 + $0x48] sm:$0xff]
      %v184 = vld [vmem:[%s166 + $0x50] sm:$0xff]
      %v185 = vld [vmem:[%s166 + $0x58] sm:$0xff]
      %v186 = vld [vmem:[%s166 + $0x60] sm:$0xff]
      %v187 = vld [vmem:[%s166 + $0x68] sm:$0xff]
      %v188 = vld [vmem:[%s166 + $0x70] sm:$0xff]
      %v189 = vld [vmem:[%s166 + $0x78] sm:$0xff]
      %v190 = vld [vmem:[%s1] sm:$0x1]
      %v192 = vperm.slane %v190, 0
      %v194 = vmul.f32 %v174, %v192
      %v195 = vmul.f32 %v175, %v192
      %v196 = vmul.f32 %v176, %v192
      %v197 = vmul.f32 %v177, %v192
      %v198 = vmul.f32 %v178, %v192
      %v199 = vmul.f32 %v179, %v192
      %v200 = vmul.f32 %v180, %v192
      %v201 = vmul.f32 %v181, %v192
      %v202 = vmul.f32 %v182, %v192
      %v203 = vmul.f32 %v183, %v192
      %v204 = vmul.f32 %v184, %v192
      %v205 = vmul.f32 %v185, %v192
      %v206 = vmul.f32 %v186, %v192
      %v207 = vmul.f32 %v187, %v192
      %v208 = vmul.f32 %v188, %v192
      %v209 = vmul.f32 %v189, %v192
      %v210 = vld [vmem:[%s2] sm:$0x1]
      %v212 = vperm.slane %v210, 0
      %v214 = vadd.f32 %v194, %v212
      %v215 = vadd.f32 %v195, %v212
      %v216 = vadd.f32 %v196, %v212
      %v217 = vadd.f32 %v197, %v212
      %v218 = vadd.f32 %v198, %v212
      %v219 = vadd.f32 %v199, %v212
      %v220 = vadd.f32 %v200, %v212
      %v221 = vadd.f32 %v201, %v212
      %v222 = vadd.f32 %v202, %v212
      %v223 = vadd.f32 %v203, %v212
      %v224 = vadd.f32 %v204, %v212
      %v225 = vadd.f32 %v205, %v212
      %v226 = vadd.f32 %v206, %v212
      %v227 = vadd.f32 %v207, %v212
      %v228 = vadd.f32 %v208, %v212
      %v229 = vadd.f32 %v209, %v212
      %v230 = vmax.f32 %v214, 0.0
      %v231 = vmax.f32 %v215, 0.0
      %v232 = vmax.f32 %v216, 0.0
      %v233 = vmax.f32 %v217, 0.0
      %v234 = vmax.f32 %v218, 0.0
      %v235 = vmax.f32 %v219, 0.0
      %v236 = vmax.f32 %v220, 0.0
      %v237 = vmax.f32 %v221, 0.0
      %v238 = vmax.f32 %v222, 0.0
      %v239 = vmax.f32 %v223, 0.0
      %v240 = vmax.f32 %v224, 0.0
      %v241 = vmax.f32 %v225, 0.0
      %v242 = vmax.f32 %v226, 0.0
      %v243 = vmax.f32 %v227, 0.0
      %v244 = vmax.f32 %v228, 0.0
      %v245 = vmax.f32 %v229, 0.0
      %246 = vst [vmem:[%s172] sm:$0xff] %v230
      %247 = vst [vmem:[%s172 + $0x8] sm:$0xff] %v231
      %248 = vst [vmem:[%s172 + $0x10] sm:$0xff] %v232
      %249 = vst [vmem:[%s172 + $0x18] sm:$0xff] %v233
      %250 = vst [vmem:[%s172 + $0x20] sm:$0xff] %v234
      %251 = vst [vmem:[%s172 + $0x28] sm:$0xff] %v235
      %252 = vst [vmem:[%s172 + $0x30] sm:$0xff] %v236
      %253 = vst [vmem:[%s172 + $0x38] sm:$0xff] %v237
      %254 = vst [vmem:[%s172 + $0x40] sm:$0xff] %v238
      %255 = vst [vmem:[%s172 + $0x48] sm:$0xff] %v239
      %256 = vst [vmem:[%s172 + $0x50] sm:$0xff] %v240
      %257 = vst [vmem:[%s172 + $0x58] sm:$0xff] %v241
      %258 = vst [vmem:[%s172 + $0x60] sm:$0xff] %v242
      %259 = vst [vmem:[%s172 + $0x68] sm:$0xff] %v243
      %260 = vst [vmem:[%s172 + $0x70] sm:$0xff] %v244
      %261 = vst [vmem:[%s172 + $0x78] sm:$0xff] %v245
      %s262 = smul.u32 16, %s14
      %p263 = scmp.lt.s32.totalorder %s262, 63
      %s264 = scalar_select %p263, %s262, 63
      %s265 = smul.addr %s264, 8
      %s266 = scalar_lea.vmem %s3, %s265
      // Predicated region
      $region33: #{conv2d_block.3} parent=31 // pred_check
        %p267 = pneg %p100
      $region34: #{conv2d_block.3} parent=31 // pred_check_branch
        %269 = sbr.rel (%p267) target = $region36
      $region35: #{conv2d_block.3} parent=31 // pred_region
        %s270 = smul.u32 16, %s14
      $region36: #{conv2d_block.3} parent=31 // pred_fallthru
        _
    $region32: #{conv2d_block.3} parent=5 // pred_fallthru
      _
    %p271 = scmp.le.s32.totalorder 2, %s9
    // Predicated region
    $region37: #{conv2d_block.3} parent=5 // pred_check
      %p272 = pneg %p271
    $region38: #{conv2d_block.3} parent=5 // pred_check_branch
      %274 = sbr.rel (%p272) target = $region40
    $region39: #{conv2d_block.3} parent=5 // pred_region
      %s275 = ssub.s32 %s9, 2
      // Predicated region
      $region41: #{conv2d_block.3} parent=39 // pred_check
        %p276 = pneg %p106
      $region42: #{conv2d_block.3} parent=39 // pred_check_branch
        %278 = sbr.rel (%p276) target = $region44
      $region43: #{conv2d_block.3} parent=39 // pred_region
        %s279 = smul.u32 16, %s15
        %p280 = scmp.lt.s32.totalorder %s279, 63
        %s281 = scalar_select %p280, %s279, 63
        %s282 = smul.addr %s281, 8
        %s283 = scalar_lea.vmem %s3, %s282
      $region44: #{conv2d_block.3} parent=39 // pred_fallthru
        _
    $region40: #{conv2d_block.3} parent=5 // pred_fallthru
      _
  $region6: #{conv2d_block.3} parent=0 // loop_footer
    %s13 = sadd.s32 1, %s9
  $region7: #{conv2d_block.3} parent=0 // loop_footer_branch
    %8 = sbr.rel target = $region3
  $region8: #{conv2d_block.3} parent=0 // loop_exit
    _

// kernel: conv2d_block.2
$region0: #{conv2d_block.2}
  #allocation0 [shape = 'u32[]', space=smem, size = 0x4, offset = 0x4, fixed_abs, tag = 'smem constant byte address 0x4 - core index']
  #allocation1 [shape = 'u32[72,128]{1,0:T(1,128)}', space=vmem, size = 0x9000, scoped, tag = 'internal scratch']
  #allocation2 [shape = 'f32[18,18,128]{2,1,0:T(8,128)}', space=vmem, size = 0x36000, scoped, tag = 'scratch operand']
  %s0 = inlined_call_operand.vmem [shape: bf16[2,18,18,8], index: 0, kind: input, shape index: {}]
  %s1 = inlined_call_operand.vmem [shape: bf16[9,8,128], index: 1, kind: input, shape index: {}]
  %s2 = inlined_call_operand.vmem [shape: f32[1,128], index: 2, kind: input, shape index: {}]
  %s3 = inlined_call_operand.vmem [shape: f32[2,16,16,128], index: 3, kind: output, shape index: {0}]
  %s4 = inlined_call_operand.vmem [shape: f32[2,1,128], index: 4, kind: output, shape index: {1}]
  %s5 = inlined_call_operand.vmem [shape: f32[2,1,128], index: 5, kind: output, shape index: {2}]
  %6 = xla_tuple %s3, %s4, %s5
  %s7 = sld [smem:[#allocation0]]
  $region61: #{conv2d_block.2} parent=0
    _
  %s9 = ssub.s32 1, %s7
  %s10 = scalar_select 0, %s9, %s7
  loop: start=0, step=1, limit=4
  $region2: #{conv2d_block.2} parent=0 // loop_pre_header
    _
  $region3: #{conv2d_block.2} parent=0 // loop_header
    %s12 = sphi 0, %s16
    %p13 = scmp.ge.s32.totalorder %s12, 4
    %s22 = sphi 0, %s24
    %s25 = sphi 0, %s22
    %s26 = sphi 0, %s25
    %s42 = sphi 0, %s26
    %s46 = sphi 0, %s46
    %s48 = sphi 0, %s46
    %s49 = sphi 0, %s48
    %s63 = sphi 0, %s49
    %s67 = sphi 0, %s67
    %s69 = sphi 0, %s67
    %s70 = sphi 0, %s69
    %s84 = sphi 0, %s70
    %s90 = sphi 0, %s92
    %s93 = sphi 0, %s90
    %s94 = sphi 0, %s93
    %s110 = sphi 0, %s94
    %s116 = sphi 0, %s118
    %s119 = sphi 0, %s116
    %s120 = sphi 0, %s119
    %s136 = sphi 0, %s120
    %s142 = sphi 0, %s144
    %s145 = sphi 0, %s142
    %s146 = sphi 0, %s145
    %s162 = sphi 0, %s146
  $region4: #{conv2d_block.2} parent=0 // loop_header_branch
    %15 = sbr.rel (%p13) target = $region8
  $region5: #{conv2d_block.2} parent=0 // loop_body
    %s17 = ssub.s32 %s12, 1
    %s18 = ssub.s32 %s12, 2
    %s19 = sadd.s32 %s12, 1
    %s20 = ssub.s32 %s12, %s19
    %p21 = scmp.eq.s32.totalorder %s20, 0
    %s23 = sadd.s32 %s22, 1
    %s24 = scalar_select %p21, %s22, %s23
    %p27 = pneg %p21
    %p28 = scmp.eq.s32.totalorder %s12, 1
    %p29 = por %p27, %p28
    %p30 = scmp.ne.s32.totalorder %s22, %s25
    %p31 = scmp.eq.s32.totalorder %s12, 0
    %p32 = por %p30, %p31
    %p33 = scmp.ne.s32.totalorder %s22, %s25
    %p34 = scmp.eq.s32.totalorder %s17, 1
    %p35 = por %p33, %p34
    %p36 = scmp.ne.s32.totalorder %s25, %s26
    %p37 = scmp.eq.s32.totalorder %s17, 0
    %p38 = por %p36, %p37
    %p39 = scmp.ne.s32.totalorder %s25, %s26
    %p40 = scmp.eq.s32.totalorder %s18, 1
    %p41 = por %p39, %p40
    %p43 = scmp.ne.s32.totalorder %s26, %s42
    %p44 = scmp.eq.s32.totalorder %s18, 0
    %p45 = por %p43, %p44
    %s47 = sadd.s32 %s46, 1
    %p50 = scmp.eq.s32.totalorder %s12, 1
    %p51 = scmp.ne.s32.totalorder %s46, %s48
    %p52 = scmp.eq.s32.totalorder %s12, 0
    %p53 = por %p51, %p52
    %p54 = scmp.ne.s32.totalorder %s46, %s48
    %p55 = scmp.eq.s32.totalorder %s17, 1
    %p56 = por %p54, %p55
    %p57 = scmp.ne.s32.totalorder %s48, %s49
    %p58 = scmp.eq.s32.totalorder %s17, 0
    %p59 = por %p57, %p58
    %p60 = scmp.ne.s32.totalorder %s48, %s49
    %p61 = scmp.eq.s32.totalorder %s18, 1
    %p62 = por %p60, %p61
    %p64 = scmp.ne.s32.totalorder %s49, %s63
    %p65 = scmp.eq.s32.totalorder %s18, 0
    %p66 = por %p64, %p65
    %s68 = sadd.s32 %s67, 1
    %p71 = scmp.eq.s32.totalorder %s12, 1
    %p72 = scmp.ne.s32.totalorder %s67, %s69
    %p73 = scmp.eq.s32.totalorder %s12, 0
    %p74 = por %p72, %p73
    %p75 = scmp.ne.s32.totalorder %s67, %s69
    %p76 = scmp.eq.s32.totalorder %s17, 1
    %p77 = por %p75, %p76
    %p78 = scmp.ne.s32.totalorder %s69, %s70
    %p79 = scmp.eq.s32.totalorder %s17, 0
    %p80 = por %p78, %p79
    %p81 = scmp.ne.s32.totalorder %s69, %s70
    %p82 = scmp.eq.s32.totalorder %s18, 1
    %p83 = por %p81, %p82
    %p85 = scmp.ne.s32.totalorder %s70, %s84
    %p86 = scmp.eq.s32.totalorder %s18, 0
    %p87 = por %p85, %p86
    %s88 = ssub.s32 %s12, %s19
    %p89 = scmp.eq.s32.totalorder %s88, 0
    %s91 = sadd.s32 %s90, 1
    %s92 = scalar_select %p89, %s90, %s91
    %p95 = pneg %p89
    %p96 = scmp.eq.s32.totalorder %s12, 1
    %p97 = por %p95, %p96
    %p98 = scmp.ne.s32.totalorder %s90, %s93
    %p99 = scmp.eq.s32.totalorder %s12, 0
    %p100 = por %p98, %p99
    %p101 = scmp.ne.s32.totalorder %s90, %s93
    %p102 = scmp.eq.s32.totalorder %s17, 1
    %p103 = por %p101, %p102
    %p104 = scmp.ne.s32.totalorder %s93, %s94
    %p105 = scmp.eq.s32.totalorder %s17, 0
    %p106 = por %p104, %p105
    %p107 = scmp.ne.s32.totalorder %s93, %s94
    %p108 = scmp.eq.s32.totalorder %s18, 1
    %p109 = por %p107, %p108
    %p111 = scmp.ne.s32.totalorder %s94, %s110
    %p112 = scmp.eq.s32.totalorder %s18, 0
    %p113 = por %p111, %p112
    %s114 = ssub.s32 %s12, %s19
    %p115 = scmp.eq.s32.totalorder %s114, 0
    %s117 = sadd.s32 %s116, 1
    %s118 = scalar_select %p115, %s116, %s117
    %p121 = pneg %p115
    %p122 = scmp.eq.s32.totalorder %s12, 1
    %p123 = por %p121, %p122
    %p124 = scmp.ne.s32.totalorder %s116, %s119
    %p125 = scmp.eq.s32.totalorder %s12, 0
    %p126 = por %p124, %p125
    %p127 = scmp.ne.s32.totalorder %s116, %s119
    %p128 = scmp.eq.s32.totalorder %s17, 1
    %p129 = por %p127, %p128
    %p130 = scmp.ne.s32.totalorder %s119, %s120
    %p131 = scmp.eq.s32.totalorder %s17, 0
    %p132 = por %p130, %p131
    %p133 = scmp.ne.s32.totalorder %s119, %s120
    %p134 = scmp.eq.s32.totalorder %s18, 1
    %p135 = por %p133, %p134
    %p137 = scmp.ne.s32.totalorder %s120, %s136
    %p138 = scmp.eq.s32.totalorder %s18, 0
    %p139 = por %p137, %p138
    %s140 = ssub.s32 %s12, %s19
    %p141 = scmp.eq.s32.totalorder %s140, 0
    %s143 = sadd.s32 %s142, 1
    %s144 = scalar_select %p141, %s142, %s143
    %p147 = pneg %p141
    %p148 = scmp.eq.s32.totalorder %s12, 1
    %p149 = por %p147, %p148
    %p150 = scmp.ne.s32.totalorder %s142, %s145
    %p151 = scmp.eq.s32.totalorder %s12, 0
    %p152 = por %p150, %p151
    %p153 = scmp.ne.s32.totalorder %s142, %s145
    %p154 = scmp.eq.s32.totalorder %s17, 1
    %p155 = por %p153, %p154
    %p156 = scmp.ne.s32.totalorder %s145, %s146
    %p157 = scmp.eq.s32.totalorder %s17, 0
    %p158 = por %p156, %p157
    %p159 = scmp.ne.s32.totalorder %s145, %s146
    %p160 = scmp.eq.s32.totalorder %s18, 1
    %p161 = por %p159, %p160
    %p163 = scmp.ne.s32.totalorder %s146, %s162
    %p164 = scmp.eq.s32.totalorder %s18, 0
    %p165 = por %p163, %p164
    %p166 = scmp.le.s32.totalorder 1, %s12
    %p167 = scmp.lt.s32.totalorder %s12, 3
    %p168 = pnand %p166, %p167
    %p169 = pneg %p168
    // Predicated region
    $region9: #{conv2d_block.2} parent=5 // pred_check
      _
    $region10: #{conv2d_block.2} parent=5 // pred_check_branch
      %171 = sbr.rel (%p168) target = $region12
    $region11: #{conv2d_block.2} parent=5 // pred_region
      %s172 = ssub.s32 %s12, 1
      // Predicated region
      $region13: #{conv2d_block.2} parent=11 // pred_check
        %p173 = pneg %p59
      $region14: #{conv2d_block.2} parent=11 // pred_check_branch
        %175 = sbr.rel (%p173) target = $region16
      $region15: #{conv2d_block.2} parent=11 // pred_region
        _
      $region16: #{conv2d_block.2} parent=11 // pred_fallthru
        _
      // Predicated region
      $region17: #{conv2d_block.2} parent=11 // pred_check
        %p176 = pneg %p80
      $region18: #{conv2d_block.2} parent=11 // pred_check_branch
        %178 = sbr.rel (%p176) target = $region20
      $region19: #{conv2d_block.2} parent=11 // pred_region
        _
      $region20: #{conv2d_block.2} parent=11 // pred_fallthru
        _
    $region12: #{conv2d_block.2} parent=5 // pred_fallthru
      _
    %p179 = scmp.lt.s32.totalorder %s12, 2
    // Predicated region
    $region21: #{conv2d_block.2} parent=5 // pred_check
      %p180 = pneg %p179
    $region22: #{conv2d_block.2} parent=5 // pred_check_branch
      %182 = sbr.rel (%p180) target = $region24
    $region23: #{conv2d_block.2} parent=5 // pred_region
      // Predicated region
      $region25: #{conv2d_block.2} parent=23 // pred_check
        %p183 = pneg %p32
      $region26: #{conv2d_block.2} parent=23 // pred_check_branch
        %185 = sbr.rel (%p183) target = $region28
      $region27: #{conv2d_block.2} parent=23 // pred_region
        %p186 = scmp.lt.s32.totalorder %s12, 1
        %s187 = scalar_select %p186, %s12, 1
        %s188 = smul.addr %s187, 54
        %s189 = smul.addr %s188, 4
        %s190 = scalar_lea.vmem %s0, %s189
      $region28: #{conv2d_block.2} parent=23 // pred_fallthru
        _
    $region24: #{conv2d_block.2} parent=5 // pred_fallthru
      _
    %p191 = scmp.le.s32.totalorder 1, %s12
    %p192 = scmp.lt.s32.totalorder %s12, 3
    %p193 = pnand %p191, %p192
    %p194 = pneg %p193
    // Predicated region
    $region29: #{conv2d_block.2} parent=5 // pred_check
      _
    $region30: #{conv2d_block.2} parent=5 // pred_check_branch
      %196 = sbr.rel (%p193) target = $region32
    $region31: #{conv2d_block.2} parent=5 // pred_region
      %s197 = ssub.s32 %s12, 1
      %p198 = scmp.lt.s32.totalorder %s17, 1
      %s199 = scalar_select %p198, %s17, 1
      %s200 = smul.addr %s199, 54
      %s201 = smul.addr %s200, 4
      %s202 = scalar_lea.vmem %s0, %s201
      %p203 = pneg %p38
      %p204 = pneg %p35
      %p205 = pneg %p59
      %p206 = pneg %p56
      %p207 = pneg %p80
      %p208 = pneg %p77
      %p209 = pneg %p106
      %p210 = pneg %p103
      %p211 = scmp.lt.s32.totalorder %s17, 1
      %s212 = scalar_select %p211, %s17, 1
      %s213 = smul.addr %s212, 32
      %s214 = smul.addr %s213, 8
      %s215 = scalar_lea.vmem %s3, %s214
      %p216 = pneg %p132
      %p217 = pneg %p129
      %p218 = scmp.lt.s32.totalorder %s17, 1
      %s219 = scalar_select %p218, %s17, 1
      %s220 = scalar_lea.vmem %s4, %s219
      %p221 = pneg %p158
      %p222 = pneg %p155
      %p223 = scmp.lt.s32.totalorder %s17, 1
      %s224 = scalar_select %p223, %s17, 1
      %s225 = scalar_lea.vmem %s5, %s224
      %p226 = scmp.lt.s32.totalorder %s17, 1
      %s227 = scalar_select %p226, %s17, 1
      %s228 = smul.addr %s227, 54
      %s229 = smul.addr %s228, 4
      %s230 = scalar_lea.vmem %s0, %s229
      %p231 = scmp.lt.s32.totalorder %s17, 1
      %s232 = scalar_select %p231, %s17, 1
      %s233 = smul.addr %s232, 32
      %s234 = smul.addr %s233, 8
      %s235 = scalar_lea.vmem %s3, %s234
      %p236 = scmp.lt.s32.totalorder %s17, 1
      %s237 = scalar_select %p236, %s17, 1
      %s238 = scalar_lea.vmem %s4, %s237
      %p239 = scmp.lt.s32.totalorder %s17, 1
      %s240 = scalar_select %p239, %s17, 1
      %s241 = scalar_lea.vmem %s5, %s240
      %v243 = vld [vmem:[%s230] sm:$0xf]
      %v244 = vld [vmem:[%s230 + $0x4] sm:$0xf]
      %v245 = vld [vmem:[%s230 + $0x8] sm:$0x1]
      %v246 = vld [vmem:[%s230 + $0xc] sm:$0xf]
      %v247 = vld [vmem:[%s230 + $0x10] sm:$0xf]
      %v248 = vld [vmem:[%s230 + $0x14] sm:$0x1]
      %v249 = vld [vmem:[%s230 + $0x18] sm:$0xf]
      %v250 = vld [vmem:[%s230 + $0x1c] sm:$0xf]
      %v251 = vld [vmem:[%s230 + $0x20] sm:$0x1]
      %v252 = vld [vmem:[%s230 + $0x24] sm:$0xf]
      %v253 = vld [vmem:[%s230 + $0x28] sm:$0xf]
      %v254 = vld [vmem:[%s230 + $0x2c] sm:$0x1]
      %v255 = vld [vmem:[%s230 + $0x30] sm:$0xf]
      %v256 = vld [vmem:[%s230 + $0x34] sm:$0xf]
      %v257 = vld [vmem:[%s230 + $0x38] sm:$0x1]
      %v258 = vld [vmem:[%s230 + $0x3c] sm:$0xf]
      %v259 = vld [vmem:[%s230 + $0x40] sm:$0xf]
      %v260 = vld [vmem:[%s230 + $0x44] sm:$0x1]
      %v261 = vld [vmem:[%s230 + $0x48] sm:$0xf]
      %v262 = vld [vmem:[%s230 + $0x4c] sm:$0xf]
      %v263 = vld [vmem:[%s230 + $0x50] sm:$0x1]
      %v264 = vld [vmem:[%s230 + $0x54] sm:$0xf]
      %v265 = vld [vmem:[%s230 + $0x58] sm:$0xf]
      %v266 = vld [vmem:[%s230 + $0x5c] sm:$0x1]
      %v267 = vld [vmem:[%s230 + $0x60] sm:$0xf]
      %v268 = vld [vmem:[%s230 + $0x64] sm:$0xf]
      %v269 = vld [vmem:[%s230 + $0x68] sm:$0x1]
      %v270 = vld [vmem:[%s230 + $0x6c] sm:$0xf]
      %v271 = vld [vmem:[%s230 + $0x70] sm:$0xf]
      %v272 = vld [vmem:[%s230 + $0x74] sm:$0x1]
      %v273 = vld [vmem:[%s230 + $0x78] sm:$0xf]
      %v274 = vld [vmem:[%s230 + $0x7c] sm:$0xf]
      %v275 = vld [vmem:[%s230 + $0x80] sm:$0x1]
      %v276 = vld [vmem:[%s230 + $0x84] sm:$0xf]
      %v277 = vld [vmem:[%s230 + $0x88] sm:$0xf]
      %v278 = vld [vmem:[%s230 + $0x8c] sm:$0x1]
      %v279 = vld [vmem:[%s230 + $0x90] sm:$0xf]
      %v280 = vld [vmem:[%s230 + $0x94] sm:$0xf]
      %v281 = vld [vmem:[%s230 + $0x98] sm:$0x1]
      %v282 = vld [vmem:[%s230 + $0x9c] sm:$0xf]
      %v283 = vld [vmem:[%s230 + $0xa0] sm:$0xf]
      %v284 = vld [vmem:[%s230 + $0xa4] sm:$0x1]
      %v285 = vld [vmem:[%s230 + $0xa8] sm:$0xf]
      %v286 = vld [vmem:[%s230 + $0xac] sm:$0xf]
      %v287 = vld [vmem:[%s230 + $0xb0] sm:$0x1]
      %v288 = vld [vmem:[%s230 + $0xb4] sm:$0xf]
      %v289 = vld [vmem:[%s230 + $0xb8] sm:$0xf]
      %v290 = vld [vmem:[%s230 + $0xbc] sm:$0x1]
      %v291 = vld [vmem:[%s230 + $0xc0] sm:$0xf]
      %v292 = vld [vmem:[%s230 + $0xc4] sm:$0xf]
      %v293 = vld [vmem:[%s230 + $0xc8] sm:$0x1]
      %v294 = vld [vmem:[%s230 + $0xcc] sm:$0xf]
      %v295 = vld [vmem:[%s230 + $0xd0] sm:$0xf]
      %v296 = vld [vmem:[%s230 + $0xd4] sm:$0x1]
      %v297 = vld [vmem:[%s1] sm:$0xf]
      %vm298 = vsmask.f32 3328
      %vm299 = vsmask.f32 7440
      %vm300 = vmor %vm298, %vm299
      %v302 = vshrl.u32 %v243, 16
      %v304 = vrot.slane %v302, 4
      %v305 = vshll.u32 %v243, 16
      %v307 = vrot.slane %v305, 5
      %v308 = vor.u32 %v304, %v307
      %v309 = vrot.slane %v308, 4
      %v311 = vshll.u32 %v244, 16
      %v313 = vrot.slane %v311, 5
      %v314 = vsel %vm300, %v309, %v313
      %v315 = vshrl.u32 %v244, 16
      %v317 = vrot.slane %v315, 4
      %v318 = vor.u32 %v317, %v313
      %v319 = vrot.slane %v318, 4
      %v321 = vshll.u32 %v245, 16
      %v323 = vrot.slane %v321, 5
      %v324 = vsel %vm300, %v319, %v323
      %v326 = vshrl.u32 %v246, 16
      %v328 = vrot.slane %v326, 4
      %v329 = vshll.u32 %v246, 16
      %v331 = vrot.slane %v329, 5
      %v332 = vor.u32 %v328, %v331
      %v333 = vrot.slane %v332, 4
      %v335 = vshll.u32 %v247, 16
      %v337 = vrot.slane %v335, 5
      %v338 = vsel %vm300, %v333, %v337
      %v339 = vshrl.u32 %v247, 16
      %v341 = vrot.slane %v339, 4
      %v342 = vor.u32 %v341, %v337
      %v343 = vrot.slane %v342, 4
      %v345 = vshll.u32 %v248, 16
      %v347 = vrot.slane %v345, 5
      %v348 = vsel %vm300, %v343, %v347
      %v350 = vshrl.u32 %v249, 16
      %v352 = vrot.slane %v350, 4
      %v353 = vshll.u32 %v249, 16
      %v355 = vrot.slane %v353, 5
      %v356 = vor.u32 %v352, %v355
      %v357 = vrot.slane %v356, 4
      %v359 = vshll.u32 %v250, 16
      %v361 = vrot.slane %v359, 5
      %v362 = vsel %vm300, %v357, %v361
      %v363 = vshrl.u32 %v250, 16
      %v365 = vrot.slane %v363, 4
      %v366 = vor.u32 %v365, %v361
      %v367 = vrot.slane %v366, 4
      %v369 = vshll.u32 %v251, 16
      %v371 = vrot.slane %v369, 5
      %v372 = vsel %vm300, %v367, %v371
      %v374 = vshrl.u32 %v252, 16
      %v376 = vrot.slane %v374, 4
      %v377 = vshll.u32 %v252, 16
      %v379 = vrot.slane %v377, 5
      %v380 = vor.u32 %v376, %v379
      %v381 = vrot.slane %v380, 4
      %v383 = vshll.u32 %v253, 16
      %v385 = vrot.slane %v383, 5
      %v386 = vsel %vm300, %v381, %v385
      %v387 = vshrl.u32 %v253, 16
      %v389 = vrot.slane %v387, 4
      %v390 = vor.u32 %v389, %v385
      %v391 = vrot.slane %v390, 4
      %v393 = vshll.u32 %v254, 16
      %v395 = vrot.slane %v393, 5
      %v396 = vsel %vm300, %v391, %v395
      %v398 = vshrl.u32 %v255, 16
      %v400 = vrot.slane %v398, 4
      %v401 = vshll.u32 %v255, 16
      %v403 = vrot.slane %v401, 5
      %v404 = vor.u32 %v400, %v403
      %v405 = vrot.slane %v404, 4
      %v407 = vshll.u32 %v256, 16
      %v409 = vrot.slane %v407, 5
      %v410 = vsel %vm300, %v405, %v409
      %v411 = vshrl.u32 %v256, 16
      %v413 = vrot.slane %v411, 4
      %v414 = vor.u32 %v413, %v409
      %v415 = vrot.slane %v414, 4
      %v417 = vshll.u32 %v257, 16
      %v419 = vrot.slane %v417, 5
      %v420 = vsel %vm300, %v415, %v419
      %v422 = vshrl.u32 %v258, 16
      %v424 = vrot.slane %v422, 4
      %v425 = vshll.u32 %v258, 16
      %v427 = vrot.slane %v425, 5
      %v428 = vor.u32 %v424, %v427
      %v429 = vrot.slane %v428, 4
      %v431 = vshll.u32 %v259, 16
      %v433 = vrot.slane %v431, 5
      %v434 = vsel %vm300, %v429, %v433
      %v435 = vshrl.u32 %v259, 16
      %v437 = vrot.slane %v435, 4
      %v438 = vor.u32 %v437, %v433
      %v439 = vrot.slane %v438, 4
      %v441 = vshll.u32 %v260, 16
      %v443 = vrot.slane %v441, 5
      %v444 = vsel %vm300, %v439, %v443
      %v446 = vshrl.u32 %v261, 16
      %v448 = vrot.slane %v446, 4
      %v449 = vshll.u32 %v261, 16
      %v451 = vrot.slane %v449, 5
      %v452 = vor.u32 %v448, %v451
      %v453 = vrot.slane %v452, 4
      %v455 = vshll.u32 %v262, 16
      %v457 = vrot.slane %v455, 5
      %v458 = vsel %vm300, %v453, %v457
      %v459 = vshrl.u32 %v262, 16
      %v461 = vrot.slane %v459, 4
      %v462 = vor.u32 %v461, %v457
      %v463 = vrot.slane %v462, 4
      %v465 = vshll.u32 %v263, 16
      %v467 = vrot.slane %v465, 5
      %v468 = vsel %vm300, %v463, %v467
      %v470 = vshrl.u32 %v264, 16
      %v472 = vrot.slane %v470, 4
      %v473 = vshll.u32 %v264, 16
      %v475 = vrot.slane %v473, 5
      %v476 = vor.u32 %v472, %v475
      %v477 = vrot.slane %v476, 4
      %v479 = vshll.u32 %v265, 16
      %v481 = vrot.slane %v479, 5
      %v482 = vsel %vm300, %v477, %v481
      %v483 = vshrl.u32 %v265, 16
      %v485 = vrot.slane %v483, 4
      %v486 = vor.u32 %v485, %v481
      %v487 = vrot.slane %v486, 4
      %v489 = vshll.u32 %v266, 16
      %v491 = vrot.slane %v489, 5
      %v492 = vsel %vm300, %v487, %v491
      %v494 = vshrl.u32 %v267, 16
      %v496 = vrot.slane %v494, 4
      %v497 = vshll.u32 %v267, 16
      %v499 = vrot.slane %v497, 5
      %v500 = vor.u32 %v496, %v499
      %v501 = vrot.slane %v500, 4
      %v503 = vshll.u32 %v268, 16
      %v505 = vrot.slane %v503, 5
      %v506 = vsel %vm300, %v501, %v505
      %v507 = vshrl.u32 %v268, 16
      %v509 = vrot.slane %v507, 4
      %v510 = vor.u32 %v509, %v505
      %v511 = vrot.slane %v510, 4
      %v513 = vshll.u32 %v269, 16
      %v515 = vrot.slane %v513, 5
      %v516 = vsel %vm300, %v511, %v515
      %v518 = vshrl.u32 %v270, 16
      %v520 = vrot.slane %v518, 4
      %v521 = vshll.u32 %v270, 16
      %v523 = vrot.slane %v521, 5
      %v524 = vor.u32 %v520, %v523
      %v525 = vrot.slane %v524, 4
      %v527 = vshll.u32 %v271, 16
      %v529 = vrot.slane %v527, 5
      %v530 = vsel %vm300, %v525, %v529
      %v531 = vshrl.u32 %v271, 16
      %v533 = vrot.slane %v531, 4
      %v534 = vor.u32 %v533, %v529
      %v535 = vrot.slane %v534, 4
      %v537 = vshll.u32 %v272, 16
      %v539 = vrot.slane %v537, 5
      %v540 = vsel %vm300, %v535, %v539
      %v542 = vshrl.u32 %v273, 16
      %v544 = vrot.slane %v542, 4
      %v545 = vshll.u32 %v273, 16
      %v547 = vrot.slane %v545, 5
      %v548 = vor.u32 %v544, %v547
      %v549 = vrot.slane %v548, 4
      %v551 = vshll.u32 %v274, 16
      %v553 = vrot.slane %v551, 5
      %v554 = vsel %vm300, %v549, %v553
      %v555 = vshrl.u32 %v274, 16
      %v557 = vrot.slane %v555, 4
      %v558 = vor.u32 %v557, %v553
      %v559 = vrot.slane %v558, 4
      %v561 = vshll.u32 %v275, 16
      %v563 = vrot.slane %v561, 5
      %v564 = vsel %vm300, %v559, %v563
      %v566 = vshrl.u32 %v276, 16
      %v568 = vrot.slane %v566, 4
      %v569 = vshll.u32 %v276, 16
      %v571 = vrot.slane %v569, 5
      %v572 = vor.u32 %v568, %v571
      %v573 = vrot.slane %v572, 4
      %v575 = vshll.u32 %v277, 16
      %v577 = vrot.slane %v575, 5
      %v578 = vsel %vm300, %v573, %v577
      %v579 = vshrl.u32 %v277, 16
      %v581 = vrot.slane %v579, 4
      %v582 = vor.u32 %v581, %v577
      %v583 = vrot.slane %v582, 4
      %v585 = vshll.u32 %v278, 16
      %v587 = vrot.slane %v585, 5
      %v588 = vsel %vm300, %v583, %v587
      %v590 = vshrl.u32 %v279, 16
      %v592 = vrot.slane %v590, 4
      %v593 = vshll.u32 %v279, 16
      %v595 = vrot.slane %v593, 5
      %v596 = vor.u32 %v592, %v595
      %v597 = vrot.slane %v596, 4
      %v599 = vshll.u32 %v280, 16
      %v601 = vrot.slane %v599, 5
      %v602 = vsel %vm300, %v597, %v601
      %v603 = vshrl.u32 %v280, 16
      %v605 = vrot.slane %v603, 4
      %v606 = vor.u32 %v605, %v601
      %v607 = vrot.slane %v606, 4
      %v609 = vshll.u32 %v281, 16
      %v611 = vrot.slane %v609, 5
      %v612 = vsel %vm300, %v607, %v611
      %v614 = vshrl.u32 %v282, 16
      %v616 = vrot.slane %v614, 4
      %v617 = vshll.u32 %v282, 16
      %v619 = vrot.slane %v617, 5
      %v620 = vor.u32 %v616, %v619
      %v621 = vrot.slane %v620, 4
      %v623 = vshll.u32 %v283, 16
      %v625 = vrot.slane %v623, 5
      %v626 = vsel %vm300, %v621, %v625
      %v627 = vshrl.u32 %v283, 16
      %v629 = vrot.slane %v627, 4
      %v630 = vor.u32 %v629, %v625
      %v631 = vrot.slane %v630, 4
      %v633 = vshll.u32 %v284, 16
      %v635 = vrot.slane %v633, 5
      %v636 = vsel %vm300, %v631, %v635
      %v638 = vshrl.u32 %v285, 16
      %v640 = vrot.slane %v638, 4
      %v641 = vshll.u32 %v285, 16
      %v643 = vrot.slane %v641, 5
      %v644 = vor.u32 %v640, %v643
      %v645 = vrot.slane %v644, 4
      %v647 = vshll.u32 %v286, 16
      %v649 = vrot.slane %v647, 5
      %v650 = vsel %vm300, %v645, %v649
      %v651 = vshrl.u32 %v286, 16
      %v653 = vrot.slane %v651, 4
      %v654 = vor.u32 %v653, %v649
      %v655 = vrot.slane %v654, 4
      %v657 = vshll.u32 %v287, 16
      %v659 = vrot.slane %v657, 5
      %v660 = vsel %vm300, %v655, %v659
      %v662 = vshrl.u32 %v288, 16
      %v664 = vrot.slane %v662, 4
      %v665 = vshll.u32 %v288, 16
      %v667 = vrot.slane %v665, 5
      %v668 = vor.u32 %v664, %v667
      %v669 = vrot.slane %v668, 4
      %v671 = vshll.u32 %v289, 16
      %v673 = vrot.slane %v671, 5
      %v674 = vsel %vm300, %v669, %v673
      %v675 = vshrl.u32 %v289, 16
      %v677 = vrot.slane %v675, 4
      %v678 = vor.u32 %v677, %v673
      %v679 = vrot.slane %v678, 4
      %v681 = vshll.u32 %v290, 16
      %v683 = vrot.slane %v681, 5
      %v684 = vsel %vm300, %v679, %v683
      %s685 = scalar_lea.vmem %s1, 4
      %v686 = vld [vmem:[%s685] sm:$0xf]
      %v687 = vunpack.c.l.b16 %v314
      %v688 = vunpack.c.l.b16 %v324
      %v689 = vunpack.c.l.b16 %v338
      %v690 = vunpack.c.l.b16 %v348
      %v691 = vunpack.c.l.b16 %v362
      %v692 = vunpack.c.l.b16 %v372
      %v693 = vunpack.c.l.b16 %v386
      %v694 = vunpack.c.l.b16 %v396
      %v695 = vunpack.c.l.b16 %v410
      %v696 = vunpack.c.l.b16 %v420
      %v697 = vunpack.c.l.b16 %v434
      %v698 = vunpack.c.l.b16 %v444
      %v699 = vunpack.c.l.b16 %v458
      %v700 = vunpack.c.l.b16 %v468
      %v701 = vunpack.c.l.b16 %v482
      %v702 = vunpack.c.l.b16 %v492
      %v703 = vunpack.c.l.b16 %v506
      %v704 = vunpack.c.l.b16 %v516
      %v705 = vunpack.c.l.b16 %v530
      %v706 = vunpack.c.l.b16 %v540
      %v707 = vunpack.c.l.b16 %v554
      %v708 = vunpack.c.l.b16 %v564
      %v709 = vunpack.c.l.b16 %v578
      %v710 = vunpack.c.l.b16 %v588
      %v711 = vunpack.c.l.b16 %v602
      %v712 = vunpack.c.l.b16 %v612
      %v713 = vunpack.c.l.b16 %v626
      %v714 = vunpack.c.l.b16 %v636
      %v715 = vunpack.c.l.b16 %v650
      %v716 = vunpack.c.l.b16 %v660
      %v717 = vunpack.c.l.b16 %v674
      %v718 = vunpack.c.l.b16 %v684
      %v719 = vpack.c.b16 %v688, %v687
      %v720 = vpack.c.b16 %v690, %v689
      %v721 = vpack.c.b16 %v692, %v691
      %v722 = vpack.c.b16 %v694, %v693
      %v723 = vpack.c.b16 %v696, %v695
      %v724 = vpack.c.b16 %v698, %v697
      %v725 = vpack.c.b16 %v700, %v699
      %v726 = vpack.c.b16 %v702, %v701
      %v727 = vpack.c.b16 %v704, %v703
      %v728 = vpack.c.b16 %v706, %v705
      %v729 = vpack.c.b16 %v708, %v707
      %v730 = vpack.c.b16 %v710, %v709
      %v731 = vpack.c.b16 %v712, %v711
      %v732 = vpack.c.b16 %v714, %v713
      %v733 = vpack.c.b16 %v716, %v715
      %v734 = vpack.c.b16 %v718, %v717
      %vm735 = vcmask 64512
      %v737 = vsel %vm735, %v719, 0
      %v740 = vsel %vm735, %v720, 0
      %v743 = vsel %vm735, %v721, 0
      %v746 = vsel %vm735, %v722, 0
      %v749 = vsel %vm735, %v723, 0
      %v752 = vsel %vm735, %v724, 0
      %v755 = vsel %vm735, %v725, 0
      %v758 = vsel %vm735, %v726, 0
      %v761 = vsel %vm735, %v727, 0
      %v764 = vsel %vm735, %v728, 0
      %v767 = vsel %vm735, %v729, 0
      %v770 = vsel %vm735, %v730, 0
      %v773 = vsel %vm735, %v731, 0
      %v776 = vsel %vm735, %v732, 0
      %v779 = vsel %vm735, %v733, 0
      %v782 = vsel %vm735, %v734, 0
      %vm784 = vcmask 1043456
      %v786 = vsel %vm784, %v686, 0
      %788 = vmatpush.bf16.msra.mxu0 0
      %789 = vmatpush.bf16.msra.mxu0 0
      %790 = vmatpush.bf16.msra.mxu0 0
      %791 = vmatpush.bf16.msra.mxu0 0
      %792 = vmatpush.bf16.msra.mxu0 0
      %793 = vmatpush.bf16.msra.mxu0 0
      %794 = vmatpush.bf16.msra.mxu0 0
      %795 = vmatpush.bf16.msra.mxu0 %v786
      %796 = vmatmul.bf16.gmra.mxu0 %v737
      %v797 = vpop.f32.mrf.mxu0
      %v798 = vadd.f32 0.0, %v797
      %v799 = vpop.f32.mrf.mxu0
      %v800 = vadd.f32 0.0, %v799
      %801 = vmatmul.bf16.gmra.mxu0 %v740
      %v802 = vpop.f32.mrf.mxu0
      %v803 = vadd.f32 0.0, %v802
      %v804 = vpop.f32.mrf.mxu0
      %v805 = vadd.f32 0.0, %v804
      %806 = vmatmul.bf16.gmra.mxu0 %v743
      %v807 = vpop.f32.mrf.mxu0
      %v808 = vadd.f32 0.0, %v807
      %v809 = vpop.f32.mrf.mxu0
      %v810 = vadd.f32 0.0, %v809
      %811 = vmatmul.bf16.gmra.mxu0 %v746
      %v812 = vpop.f32.mrf.mxu0
      %v813 = vadd.f32 0.0, %v812
      %v814 = vpop.f32.mrf.mxu0
      %v815 = vadd.f32 0.0, %v814
      %816 = vmatmul.bf16.gmra.mxu0 %v749
      %v817 = vpop.f32.mrf.mxu0
      %v818 = vadd.f32 0.0, %v817
      %v819 = vpop.f32.mrf.mxu0
      %v820 = vadd.f32 0.0, %v819
      %821 = vmatmul.bf16.gmra.mxu0 %v752
      %v822 = vpop.f32.mrf.mxu0
      %v823 = vadd.f32 0.0, %v822
      %v824 = vpop.f32.mrf.mxu0
      %v825 = vadd.f32 0.0, %v824
      %826 = vmatmul.bf16.gmra.mxu0 %v755
      %v827 = vpop.f32.mrf.mxu0
      %v828 = vadd.f32 0.0, %v827
      %v829 = vpop.f32.mrf.mxu0
      %v830 = vadd.f32 0.0, %v829
      %831 = vmatmul.bf16.gmra.mxu0 %v758
      %v832 = vpop.f32.mrf.mxu0
      %v833 = vadd.f32 0.0, %v832
      %v834 = vpop.f32.mrf.mxu0
      %v835 = vadd.f32 0.0, %v834
      %836 = vmatmul.bf16.gmra.mxu0 %v761
      %v837 = vpop.f32.mrf.mxu0
      %v838 = vadd.f32 0.0, %v837
      %v839 = vpop.f32.mrf.mxu0
      %v840 = vadd.f32 0.0, %v839
      %841 = vmatmul.bf16.gmra.mxu0 %v764
      %v842 = vpop.f32.mrf.mxu0
      %v843 = vadd.f32 0.0, %v842
      %v844 = vpop.f32.mrf.mxu0
      %v845 = vadd.f32 0.0, %v844
      %846 = vmatmul.bf16.gmra.mxu0 %v767
      %v847 = vpop.f32.mrf.mxu0
      %v848 = vadd.f32 0.0, %v847
      %v849 = vpop.f32.mrf.mxu0
      %v850 = vadd.f32 0.0, %v849
      %851 = vmatmul.bf16.gmra.mxu0 %v770
      %v852 = vpop.f32.mrf.mxu0
      %v853 = vadd.f32 0.0, %v852
      %v854 = vpop.f32.mrf.mxu0
      %v855 = vadd.f32 0.0, %v854
      %856 = vmatmul.bf16.gmra.mxu0 %v773
      %v857 = vpop.f32.mrf.mxu0
      %v858 = vadd.f32 0.0, %v857
      %v859 = vpop.f32.mrf.mxu0
      %v860 = vadd.f32 0.0, %v859
      %861 = vmatmul.bf16.gmra.mxu0 %v776
      %v862 = vpop.f32.mrf.mxu0
      %v863 = vadd.f32 0.0, %v862
      %v864 = vpop.f32.mrf.mxu0
      %v865 = vadd.f32 0.0, %v864
      %866 = vmatmul.bf16.gmra.mxu0 %v779
      %v867 = vpop.f32.mrf.mxu0
      %v868 = vadd.f32 0.0, %v867
      %v869 = vpop.f32.mrf.mxu0
      %v870 = vadd.f32 0.0, %v869
      %871 = vmatmul.bf16.gmra.mxu0 %v782
      %v872 = vpop.f32.mrf.mxu0
      %v873 = vadd.f32 0.0, %v872
      %v874 = vpop.f32.mrf.mxu0
      %v875 = vadd.f32 0.0, %v874
      %876 = vdwg.mxu0
      %v909 = vunpack.c.l.b16 %v243
      %v910 = vunpack.c.l.b16 %v244
      %v911 = vunpack.c.l.b16 %v246
      %v912 = vunpack.c.l.b16 %v247
      %v913 = vunpack.c.l.b16 %v249
      %v914 = vunpack.c.l.b16 %v250
      %v915 = vunpack.c.l.b16 %v252
      %v916 = vunpack.c.l.b16 %v253
      %v917 = vunpack.c.l.b16 %v255
      %v918 = vunpack.c.l.b16 %v256
      %v919 = vunpack.c.l.b16 %v258
      %v920 = vunpack.c.l.b16 %v259
      %v921 = vunpack.c.l.b16 %v261
      %v922 = vunpack.c.l.b16 %v262
      %v923 = vunpack.c.l.b16 %v264
      %v924 = vunpack.c.l.b16 %v265
      %v925 = vunpack.c.l.b16 %v267
      %v926 = vunpack.c.l.b16 %v268
      %v927 = vunpack.c.l.b16 %v270
      %v928 = vunpack.c.l.b16 %v271
      %v929 = vunpack.c.l.b16 %v273
      %v930 = vunpack.c.l.b16 %v274
      %v931 = vunpack.c.l.b16 %v276
      %v932 = vunpack.c.l.b16 %v277
      %v933 = vunpack.c.l.b16 %v279
      %v934 = vunpack.c.l.b16 %v280
      %v935 = vunpack.c.l.b16 %v282
      %v936 = vunpack.c.l.b16 %v283
      %v937 = vunpack.c.l.b16 %v285
      %v938 = vunpack.c.l.b16 %v286
      %v939 = vunpack.c.l.b16 %v288
      %v940 = vunpack.c.l.b16 %v289
      %v941 = vpack.c.b16 %v910, %v909
      %v942 = vpack.c.b16 %v912, %v911
      %v943 = vpack.c.b16 %v914, %v913
      %v944 = vpack.c.b16 %v916, %v915
      %v945 = vpack.c.b16 %v918, %v917
      %v946 = vpack.c.b16 %v920, %v919
      %v947 = vpack.c.b16 %v922, %v921
      %v948 = vpack.c.b16 %v924, %v923
      %v949 = vpack.c.b16 %v926, %v925
      %v950 = vpack.c.b16 %v928, %v927
      %v951 = vpack.c.b16 %v930, %v929
      %v952 = vpack.c.b16 %v932, %v931
      %v953 = vpack.c.b16 %v934, %v933
      %v954 = vpack.c.b16 %v936, %v935
      %v955 = vpack.c.b16 %v938, %v937
      %v956 = vpack.c.b16 %v940, %v939
      %v958 = vsel %vm735, %v941, 0
      %v961 = vsel %vm735, %v942, 0
      %v964 = vsel %vm735, %v943, 0
      %v967 = vsel %vm735, %v944, 0
      %v970 = vsel %vm735, %v945, 0
      %v973 = vsel %vm735, %v946, 0
      %v976 = vsel %vm735, %v947, 0
      %v979 = vsel %vm735, %v948, 0
      %v982 = vsel %vm735, %v949, 0
      %v985 = vsel %vm735, %v950, 0
      %v988 = vsel %vm735, %v951, 0
      %v991 = vsel %vm735, %v952, 0
      %v994 = vsel %vm735, %v953, 0
      %v997 = vsel %vm735, %v954, 0
      %v1000 = vsel %vm735, %v955, 0
      %v1003 = vsel %vm735, %v956, 0
      %v1006 = vsel %vm784, %v297, 0
      %1008 = vmatpush.bf16.msra.mxu0 0
      %1009 = vmatpush.bf16.msra.mxu0 0
      %1010 = vmatpush.bf16.msra.mxu0 0
      %1011 = vmatpush.bf16.msra.mxu0 0
      %1012 = vmatpush.bf16.msra.mxu0 0
      %1013 = vmatpush.bf16.msra.mxu0 0
      %1014 = vmatpush.bf16.msra.mxu0 0
      %1015 = vmatpush.bf16.msra.mxu0 %v1006
      %1016 = vmatmul.bf16.gmra.mxu0 %v958
      %v1017 = vpop.f32.mrf.mxu0
      %v1018 = vadd.f32 %v798, %v1017
      %v1019 = vpop.f32.mrf.mxu0
      %v1020 = vadd.f32 %v800, %v1019
      %1021 = vmatmul.bf16.gmra.mxu0 %v961
      %v1022 = vpop.f32.mrf.mxu0
      %v1023 = vadd.f32 %v803, %v1022
      %v1024 = vpop.f32.mrf.mxu0
      %v1025 = vadd.f32 %v805, %v1024
      %1026 = vmatmul.bf16.gmra.mxu0 %v964
      %v1027 = vpop.f32.mrf.mxu0
      %v1028 = vadd.f32 %v808, %v1027
      %v1029 = vpop.f32.mrf.mxu0
      %v1030 = vadd.f32 %v810, %v1029
      %1031 = vmatmul.bf16.gmra.mxu0 %v967
      %v1032 = vpop.f32.mrf.mxu0
      %v1033 = vadd.f32 %v813, %v1032
      %v1034 = vpop.f32.mrf.mxu0
      %v1035 = vadd.f32 %v815, %v1034
      %1036 = vmatmul.bf16.gmra.mxu0 %v970
      %v1037 = vpop.f32.mrf.mxu0
      %v1038 = vadd.f32 %v818, %v1037
      %v1039 = vpop.f32.mrf.mxu0
      %v1040 = vadd.f32 %v820, %v1039
      %1041 = vmatmul.bf16.gmra.mxu0 %v973
      %v1042 = vpop.f32.mrf.mxu0
      %v1043 = vadd.f32 %v823, %v1042
      %v1044 = vpop.f32.mrf.mxu0
      %v1045 = vadd.f32 %v825, %v1044
      %1046 = vmatmul.bf16.gmra.mxu0 %v976
      %v1047 = vpop.f32.mrf.mxu0
      %v1048 = vadd.f32 %v828, %v1047
      %v1049 = vpop.f32.mrf.mxu0
      %v1050 = vadd.f32 %v830, %v1049
      %1051 = vmatmul.bf16.gmra.mxu0 %v979
      %v1052 = vpop.f32.mrf.mxu0
      %v1053 = vadd.f32 %v833, %v1052
      %v1054 = vpop.f32.mrf.mxu0
      %v1055 = vadd.f32 %v835, %v1054
      %1056 = vmatmul.bf16.gmra.mxu0 %v982
      %v1057 = vpop.f32.mrf.mxu0
      %v1058 = vadd.f32 %v838, %v1057
      %v1059 = vpop.f32.mrf.mxu0
      %v1060 = vadd.f32 %v840, %v1059
      %1061 = vmatmul.bf16.gmra.mxu0 %v985
      %v1062 = vpop.f32.mrf.mxu0
      %v1063 = vadd.f32 %v843, %v1062
      %v1064 = vpop.f32.mrf.mxu0
      %v1065 = vadd.f32 %v845, %v1064
      %1066 = vmatmul.bf16.gmra.mxu0 %v988
      %v1067 = vpop.f32.mrf.mxu0
      %v1068 = vadd.f32 %v848, %v1067
      %v1069 = vpop.f32.mrf.mxu0
      %v1070 = vadd.f32 %v850, %v1069
      %1071 = vmatmul.bf16.gmra.mxu0 %v991
      %v1072 = vpop.f32.mrf.mxu0
      %v1073 = vadd.f32 %v853, %v1072
      %v1074 = vpop.f32.mrf.mxu0
      %v1075 = vadd.f32 %v855, %v1074
      %1076 = vmatmul.bf16.gmra.mxu0 %v994
      %v1077 = vpop.f32.mrf.mxu0
      %v1078 = vadd.f32 %v858, %v1077
      %v1079 = vpop.f32.mrf.mxu0
      %v1080 = vadd.f32 %v860, %v1079
      %1081 = vmatmul.bf16.gmra.mxu0 %v997
      %v1082 = vpop.f32.mrf.mxu0
      %v1083 = vadd.f32 %v863, %v1082
      %v1084 = vpop.f32.mrf.mxu0
      %v1085 = vadd.f32 %v865, %v1084
      %1086 = vmatmul.bf16.gmra.mxu0 %v1000
      %v1087 = vpop.f32.mrf.mxu0
      %v1088 = vadd.f32 %v868, %v1087
      %v1089 = vpop.f32.mrf.mxu0
      %v1090 = vadd.f32 %v870, %v1089
      %1091 = vmatmul.bf16.gmra.mxu0 %v1003
      %v1092 = vpop.f32.mrf.mxu0
      %v1093 = vadd.f32 %v873, %v1092
      %v1094 = vpop.f32.mrf.mxu0
      %v1095 = vadd.f32 %v875, %v1094
      %1096 = vdwg.mxu0
      %vm1113 = vcmask 1042432
      %vm1114 = vcmask 1046532
      %vm1115 = vmor %vm1113, %vm1114
      %v1116 = vrot.slane %v243, 5
      %v1117 = vrot.slane %v1116, 4
      %v1118 = vrot.slane %v244, 5
      %v1119 = vsel %vm1115, %v1117, %v1118
      %v1120 = vrot.slane %v1118, 4
      %v1121 = vrot.slane %v245, 5
      %v1122 = vsel %vm1115, %v1120, %v1121
      %v1123 = vrot.slane %v246, 5
      %v1124 = vrot.slane %v1123, 4
      %v1125 = vrot.slane %v247, 5
      %v1126 = vsel %vm1115, %v1124, %v1125
      %v1127 = vrot.slane %v1125, 4
      %v1128 = vrot.slane %v248, 5
      %v1129 = vsel %vm1115, %v1127, %v1128
      %v1130 = vrot.slane %v249, 5
      %v1131 = vrot.slane %v1130, 4
      %v1132 = vrot.slane %v250, 5
      %v1133 = vsel %vm1115, %v1131, %v1132
      %v1134 = vrot.slane %v1132, 4
      %v1135 = vrot.slane %v251, 5
      %v1136 = vsel %vm1115, %v1134, %v1135
      %v1137 = vrot.slane %v252, 5
      %v1138 = vrot.slane %v1137, 4
      %v1139 = vrot.slane %v253, 5
      %v1140 = vsel %vm1115, %v1138, %v1139
      %v1141 = vrot.slane %v1139, 4
      %v1142 = vrot.slane %v254, 5
      %v1143 = vsel %vm1115, %v1141, %v1142
      %v1144 = vrot.slane %v255, 5
      %v1145 = vrot.slane %v1144, 4
      %v1146 = vrot.slane %v256, 5
      %v1147 = vsel %vm1115, %v1145, %v1146
      %v1148 = vrot.slane %v1146, 4
      %v1149 = vrot.slane %v257, 5
      %v1150 = vsel %vm1115, %v1148, %v1149
      %v1151 = vrot.slane %v258, 5
      %v1152 = vrot.slane %v1151, 4
      %v1153 = vrot.slane %v259, 5
      %v1154 = vsel %vm1115, %v1152, %v1153
      %v1155 = vrot.slane %v1153, 4
      %v1156 = vrot.slane %v260, 5
      %v1157 = vsel %vm1115, %v1155, %v1156
      %v1158 = vrot.slane %v261, 5
      %v1159 = vrot.slane %v1158, 4
      %v1160 = vrot.slane %v262, 5
      %v1161 = vsel %vm1115, %v1159, %v1160
      %v1162 = vrot.slane %v1160, 4
      %v1163 = vrot.slane %v263, 5
      %v1164 = vsel %vm1115, %v1162, %v1163
      %v1165 = vrot.slane %v264, 5
      %v1166 = vrot.slane %v1165, 4
      %v1167 = vrot.slane %v265, 5
      %v1168 = vsel %vm1115, %v1166, %v1167
      %v1169 = vrot.slane %v1167, 4
      %v1170 = vrot.slane %v266, 5
      %v1171 = vsel %vm1115, %v1169, %v1170
      %v1172 = vrot.slane %v267, 5
      %v1173 = vrot.slane %v1172, 4
      %v1174 = vrot.slane %v268, 5
      %v1175 = vsel %vm1115, %v1173, %v1174
      %v1176 = vrot.slane %v1174, 4
      %v1177 = vrot.slane %v269, 5
      %v1178 = vsel %vm1115, %v1176, %v1177
      %v1179 = vrot.slane %v270, 5
      %v1180 = vrot.slane %v1179, 4
      %v1181 = vrot.slane %v271, 5
      %v1182 = vsel %vm1115, %v1180, %v1181
      %v1183 = vrot.slane %v1181, 4
      %v1184 = vrot.slane %v272, 5
      %v1185 = vsel %vm1115, %v1183, %v1184
      %v1186 = vrot.slane %v273, 5
      %v1187 = vrot.slane %v1186, 4
      %v1188 = vrot.slane %v274, 5
      %v1189 = vsel %vm1115, %v1187, %v1188
      %v1190 = vrot.slane %v1188, 4
      %v1191 = vrot.slane %v275, 5
      %v1192 = vsel %vm1115, %v1190, %v1191
      %v1193 = vrot.slane %v276, 5
      %v1194 = vrot.slane %v1193, 4
      %v1195 = vrot.slane %v277, 5
      %v1196 = vsel %vm1115, %v1194, %v1195
      %v1197 = vrot.slane %v1195, 4
      %v1198 = vrot.slane %v278, 5
      %v1199 = vsel %vm1115, %v1197, %v1198
      %v1200 = vrot.slane %v279, 5
      %v1201 = vrot.slane %v1200, 4
      %v1202 = vrot.slane %v280, 5
      %v1203 = vsel %vm1115, %v1201, %v1202
      %v1204 = vrot.slane %v1202, 4
      %v1205 = vrot.slane %v281, 5
      %v1206 = vsel %vm1115, %v1204, %v1205
      %v1207 = vrot.slane %v282, 5
      %v1208 = vrot.slane %v1207, 4
      %v1209 = vrot.slane %v283, 5
      %v1210 = vsel %vm1115, %v1208, %v1209
      %v1211 = vrot.slane %v1209, 4
      %v1212 = vrot.slane %v284, 5
      %v1213 = vsel %vm1115, %v1211, %v1212
      %v1214 = vrot.slane %v285, 5
      %v1215 = vrot.slane %v1214, 4
      %v1216 = vrot.slane %v286, 5
      %v1217 = vsel %vm1115, %v1215, %v1216
      %v1218 = vrot.slane %v1216, 4
      %v1219 = vrot.slane %v287, 5
      %v1220 = vsel %vm1115, %v1218, %v1219
      %v1221 = vrot.slane %v288, 5
      %v1222 = vrot.slane %v1221, 4
      %v1223 = vrot.slane %v289, 5
      %v1224 = vsel %vm1115, %v1222, %v1223
      %v1225 = vrot.slane %v1223, 4
      %v1226 = vrot.slane %v290, 5
      %v1227 = vsel %vm1115, %v1225, %v1226
      %s1228 = scalar_lea.vmem %s1, 8
      %v1229 = vld [vmem:[%s1228] sm:$0xf]
      %v1230 = vunpack.c.l.b16 %v1119
      %v1231 = vunpack.c.l.b16 %v1122
      %v1232 = vunpack.c.l.b16 %v1126
      %v1233 = vunpack.c.l.b16 %v1129
      %v1234 = vunpack.c.l.b16 %v1133
      %v1235 = vunpack.c.l.b16 %v1136
      %v1236 = vunpack.c.l.b16 %v1140
      %v1237 = vunpack.c.l.b16 %v1143
      %v1238 = vunpack.c.l.b16 %v1147
      %v1239 = vunpack.c.l.b16 %v1150
      %v1240 = vunpack.c.l.b16 %v1154
      %v1241 = vunpack.c.l.b16 %v1157
      %v1242 = vunpack.c.l.b16 %v1161
      %v1243 = vunpack.c.l.b16 %v1164
      %v1244 = vunpack.c.l.b16 %v1168
      %v1245 = vunpack.c.l.b16 %v1171
      %v1246 = vunpack.c.l.b16 %v1175
      %v1247 = vunpack.c.l.b16 %v1178
      %v1248 = vunpack.c.l.b16 %v1182
      %v1249 = vunpack.c.l.b16 %v1185
      %v1250 = vunpack.c.l.b16 %v1189
      %v1251 = vunpack.c.l.b16 %v1192
      %v1252 = vunpack.c.l.b16 %v1196
      %v1253 = vunpack.c.l.b16 %v1199
      %v1254 = vunpack.c.l.b16 %v1203
      %v1255 = vunpack.c.l.b16 %v1206
      %v1256 = vunpack.c.l.b16 %v1210
      %v1257 = vunpack.c.l.b16 %v1213
      %v1258 = vunpack.c.l.b16 %v1217
      %v1259 = vunpack.c.l.b16 %v1220
      %v1260 = vunpack.c.l.b16 %v1224
      %v1261 = vunpack.c.l.b16 %v1227
      %v1262 = vpack.c.b16 %v1231, %v1230
      %v1263 = vpack.c.b16 %v1233, %v1232
      %v1264 = vpack.c.b16 %v1235, %v1234
      %v1265 = vpack.c.b16 %v1237, %v1236
      %v1266 = vpack.c.b16 %v1239, %v1238
      %v1267 = vpack.c.b16 %v1241, %v1240
      %v1268 = vpack.c.b16 %v1243, %v1242
      %v1269 = vpack.c.b16 %v1245, %v1244
      %v1270 = vpack.c.b16 %v1247, %v1246
      %v1271 = vpack.c.b16 %v1249, %v1248
      %v1272 = vpack.c.b16 %v1251, %v1250
      %v1273 = vpack.c.b16 %v1253, %v1252
      %v1274 = vpack.c.b16 %v1255, %v1254
      %v1275 = vpack.c.b16 %v1257, %v1256
      %v1276 = vpack.c.b16 %v1259, %v1258
      %v1277 = vpack.c.b16 %v1261, %v1260
      %v1279 = vsel %vm735, %v1262, 0
      %v1282 = vsel %vm735, %v1263, 0
      %v1285 = vsel %vm735, %v1264, 0
      %v1288 = vsel %vm735, %v1265, 0
      %v1291 = vsel %vm735, %v1266, 0
      %v1294 = vsel %vm735, %v1267, 0
      %v1297 = vsel %vm735, %v1268, 0
      %v1300 = vsel %vm735, %v1269, 0
      %v1303 = vsel %vm735, %v1270, 0
      %v1306 = vsel %vm735, %v1271, 0
      %v1309 = vsel %vm735, %v1272, 0
      %v1312 = vsel %vm735, %v1273, 0
      %v1315 = vsel %vm735, %v1274, 0
      %v1318 = vsel %vm735, %v1275, 0
      %v1321 = vsel %vm735, %v1276, 0
      %v1324 = vsel %vm735, %v1277, 0
      %v1327 = vsel %vm784, %v1229, 0
      %1329 = vmatpush.bf16.msra.mxu0 0
      %1330 = vmatpush.bf16.msra.mxu0 0
      %1331 = vmatpush.bf16.msra.mxu0 0
      %1332 = vmatpush.bf16.msra.mxu0 0
      %1333 = vmatpush.bf16.msra.mxu0 0
      %1334 = vmatpush.bf16.msra.mxu0 0
      %1335 = vmatpush.bf16.msra.mxu0 0
      %1336 = vmatpush.bf16.msra.mxu0 %v1327
      %1337 = vmatmul.bf16.gmra.mxu0 %v1279
      %v1338 = vpop.f32.mrf.mxu0
      %v1339 = vadd.f32 0.0, %v1338
      %v1340 = vpop.f32.mrf.mxu0
      %v1341 = vadd.f32 0.0, %v1340
      %1342 = vmatmul.bf16.gmra.mxu0 %v1282
      %v1343 = vpop.f32.mrf.mxu0
      %v1344 = vadd.f32 0.0, %v1343
      %v1345 = vpop.f32.mrf.mxu0
      %v1346 = vadd.f32 0.0, %v1345
      %1347 = vmatmul.bf16.gmra.mxu0 %v1285
      %v1348 = vpop.f32.mrf.mxu0
      %v1349 = vadd.f32 0.0, %v1348
      %v1350 = vpop.f32.mrf.mxu0
      %v1351 = vadd.f32 0.0, %v1350
      %1352 = vmatmul.bf16.gmra.mxu0 %v1288
      %v1353 = vpop.f32.mrf.mxu0
      %v1354 = vadd.f32 0.0, %v1353
      %v1355 = vpop.f32.mrf.mxu0
      %v1356 = vadd.f32 0.0, %v1355
      %1357 = vmatmul.bf16.gmra.mxu0 %v1291
      %v1358 = vpop.f32.mrf.mxu0
      %v1359 = vadd.f32 0.0, %v1358
      %v1360 = vpop.f32.mrf.mxu0
      %v1361 = vadd.f32 0.0, %v1360
      %1362 = vmatmul.bf16.gmra.mxu0 %v1294
      %v1363 = vpop.f32.mrf.mxu0
      %v1364 = vadd.f32 0.0, %v1363
      %v1365 = vpop.f32.mrf.mxu0
      %v1366 = vadd.f32 0.0, %v1365
      %1367 = vmatmul.bf16.gmra.mxu0 %v1297
      %v1368 = vpop.f32.mrf.mxu0
      %v1369 = vadd.f32 0.0, %v1368
      %v1370 = vpop.f32.mrf.mxu0
      %v1371 = vadd.f32 0.0, %v1370
      %1372 = vmatmul.bf16.gmra.mxu0 %v1300
      %v1373 = vpop.f32.mrf.mxu0
      %v1374 = vadd.f32 0.0, %v1373
      %v1375 = vpop.f32.mrf.mxu0
      %v1376 = vadd.f32 0.0, %v1375
      %1377 = vmatmul.bf16.gmra.mxu0 %v1303
      %v1378 = vpop.f32.mrf.mxu0
      %v1379 = vadd.f32 0.0, %v1378
      %v1380 = vpop.f32.mrf.mxu0
      %v1381 = vadd.f32 0.0, %v1380
      %1382 = vmatmul.bf16.gmra.mxu0 %v1306
      %v1383 = vpop.f32.mrf.mxu0
      %v1384 = vadd.f32 0.0, %v1383
      %v1385 = vpop.f32.mrf.mxu0
      %v1386 = vadd.f32 0.0, %v1385
      %1387 = vmatmul.bf16.gmra.mxu0 %v1309
      %v1388 = vpop.f32.mrf.mxu0
      %v1389 = vadd.f32 0.0, %v1388
      %v1390 = vpop.f32.mrf.mxu0
      %v1391 = vadd.f32 0.0, %v1390
      %1392 = vmatmul.bf16.gmra.mxu0 %v1312
      %v1393 = vpop.f32.mrf.mxu0
      %v1394 = vadd.f32 0.0, %v1393
      %v1395 = vpop.f32.mrf.mxu0
      %v1396 = vadd.f32 0.0, %v1395
      %1397 = vmatmul.bf16.gmra.mxu0 %v1315
      %v1398 = vpop.f32.mrf.mxu0
      %v1399 = vadd.f32 0.0, %v1398
      %v1400 = vpop.f32.mrf.mxu0
      %v1401 = vadd.f32 0.0, %v1400
      %1402 = vmatmul.bf16.gmra.mxu0 %v1318
      %v1403 = vpop.f32.mrf.mxu0
      %v1404 = vadd.f32 0.0, %v1403
      %v1405 = vpop.f32.mrf.mxu0
      %v1406 = vadd.f32 0.0, %v1405
      %1407 = vmatmul.bf16.gmra.mxu0 %v1321
      %v1408 = vpop.f32.mrf.mxu0
      %v1409 = vadd.f32 0.0, %v1408
      %v1410 = vpop.f32.mrf.mxu0
      %v1411 = vadd.f32 0.0, %v1410
      %1412 = vmatmul.bf16.gmra.mxu0 %v1324
      %v1413 = vpop.f32.mrf.mxu0
      %v1414 = vadd.f32 0.0, %v1413
      %v1415 = vpop.f32.mrf.mxu0
      %v1416 = vadd.f32 0.0, %v1415
      %1417 = vdwg.mxu0
      %v1418 = vadd.f32 %v1018, %v1339
      %v1419 = vadd.f32 %v1020, %v1341
      %v1420 = vadd.f32 %v1023, %v1344
      %v1421 = vadd.f32 %v1025, %v1346
      %v1422 = vadd.f32 %v1028, %v1349
      %v1423 = vadd.f32 %v1030, %v1351
      %v1424 = vadd.f32 %v1033, %v1354
      %v1425 = vadd.f32 %v1035, %v1356
      %v1426 = vadd.f32 %v1038, %v1359
      %v1427 = vadd.f32 %v1040, %v1361
      %v1428 = vadd.f32 %v1043, %v1364
      %v1429 = vadd.f32 %v1045, %v1366
      %v1430 = vadd.f32 %v1048, %v1369
      %v1431 = vadd.f32 %v1050, %v1371
      %v1432 = vadd.f32 %v1053, %v1374
      %v1433 = vadd.f32 %v1055, %v1376
      %v1434 = vadd.f32 %v1058, %v1379
      %v1435 = vadd.f32 %v1060, %v1381
      %v1436 = vadd.f32 %v1063, %v1384
      %v1437 = vadd.f32 %v1065, %v1386
      %v1438 = vadd.f32 %v1068, %v1389
      %v1439 = vadd.f32 %v1070, %v1391
      %v1440 = vadd.f32 %v1073, %v1394
      %v1441 = vadd.f32 %v1075, %v1396
      %v1442 = vadd.f32 %v1078, %v1399
      %v1443 = vadd.f32 %v1080, %v1401
      %v1444 = vadd.f32 %v1083, %v1404
      %v1445 = vadd.f32 %v1085, %v1406
      %v1446 = vadd.f32 %v1088, %v1409
      %v1447 = vadd.f32 %v1090, %v1411
      %v1448 = vadd.f32 %v1093, %v1414
      %v1449 = vadd.f32 %v1095, %v1416
      %s1450 = scalar_lea.vmem %s1, 12
      %v1451 = vld [vmem:[%s1450] sm:$0xf]
      %v1454 = vunpack.c.l.b16 %v291
      %v1455 = vunpack.c.l.b16 %v292
      %v1456 = vpack.c.b16 %v1455, %v1454
      %v1458 = vsel %vm735, %v1456, 0
      %v1461 = vsel %vm784, %v1451, 0
      %1463 = vmatpush.bf16.msra.mxu0 0
      %1464 = vmatpush.bf16.msra.mxu0 0
      %1465 = vmatpush.bf16.msra.mxu0 0
      %1466 = vmatpush.bf16.msra.mxu0 0
      %1467 = vmatpush.bf16.msra.mxu0 0
      %1468 = vmatpush.bf16.msra.mxu0 0
      %1469 = vmatpush.bf16.msra.mxu0 0
      %1470 = vmatpush.bf16.msra.mxu0 %v1461
      %1471 = vmatmul.bf16.gmra.mxu0 %v961
      %v1472 = vpop.f32.mrf.mxu0
      %v1473 = vadd.f32 0.0, %v1472
      %v1474 = vpop.f32.mrf.mxu0
      %v1475 = vadd.f32 0.0, %v1474
      %1476 = vmatmul.bf16.gmra.mxu0 %v964
      %v1477 = vpop.f32.mrf.mxu0
      %v1478 = vadd.f32 0.0, %v1477
      %v1479 = vpop.f32.mrf.mxu0
      %v1480 = vadd.f32 0.0, %v1479
      %1481 = vmatmul.bf16.gmra.mxu0 %v967
      %v1482 = vpop.f32.mrf.mxu0
      %v1483 = vadd.f32 0.0, %v1482
      %v1484 = vpop.f32.mrf.mxu0
      %v1485 = vadd.f32 0.0, %v1484
      %1486 = vmatmul.bf16.gmra.mxu0 %v970
      %v1487 = vpop.f32.mrf.mxu0
      %v1488 = vadd.f32 0.0, %v1487
      %v1489 = vpop.f32.mrf.mxu0
      %v1490 = vadd.f32 0.0, %v1489
      %1491 = vmatmul.bf16.gmra.mxu0 %v973
      %v1492 = vpop.f32.mrf.mxu0
      %v1493 = vadd.f32 0.0, %v1492
      %v1494 = vpop.f32.mrf.mxu0
      %v1495 = vadd.f32 0.0, %v1494
      %1496 = vmatmul.bf16.gmra.mxu0 %v976
      %v1497 = vpop.f32.mrf.mxu0
      %v1498 = vadd.f32 0.0, %v1497
      %v1499 = vpop.f32.mrf.mxu0
      %v1500 = vadd.f32 0.0, %v1499
      %1501 = vmatmul.bf16.gmra.mxu0 %v979
      %v1502 = vpop.f32.mrf.mxu0
      %v1503 = vadd.f32 0.0, %v1502
      %v1504 = vpop.f32.mrf.mxu0
      %v1505 = vadd.f32 0.0, %v1504
      %1506 = vmatmul.bf16.gmra.mxu0 %v982
      %v1507 = vpop.f32.mrf.mxu0
      %v1508 = vadd.f32 0.0, %v1507
      %v1509 = vpop.f32.mrf.mxu0
      %v1510 = vadd.f32 0.0, %v1509
      %1511 = vmatmul.bf16.gmra.mxu0 %v985
      %v1512 = vpop.f32.mrf.mxu0
      %v1513 = vadd.f32 0.0, %v1512
      %v1514 = vpop.f32.mrf.mxu0
      %v1515 = vadd.f32 0.0, %v1514
      %1516 = vmatmul.bf16.gmra.mxu0 %v988
      %v1517 = vpop.f32.mrf.mxu0
      %v1518 = vadd.f32 0.0, %v1517
      %v1519 = vpop.f32.mrf.mxu0
      %v1520 = vadd.f32 0.0, %v1519
      %1521 = vmatmul.bf16.gmra.mxu0 %v991
      %v1522 = vpop.f32.mrf.mxu0
      %v1523 = vadd.f32 0.0, %v1522
      %v1524 = vpop.f32.mrf.mxu0
      %v1525 = vadd.f32 0.0, %v1524
      %1526 = vmatmul.bf16.gmra.mxu0 %v994
      %v1527 = vpop.f32.mrf.mxu0
      %v1528 = vadd.f32 0.0, %v1527
      %v1529 = vpop.f32.mrf.mxu0
      %v1530 = vadd.f32 0.0, %v1529
      %1531 = vmatmul.bf16.gmra.mxu0 %v997
      %v1532 = vpop.f32.mrf.mxu0
      %v1533 = vadd.f32 0.0, %v1532
      %v1534 = vpop.f32.mrf.mxu0
      %v1535 = vadd.f32 0.0, %v1534
      %1536 = vmatmul.bf16.gmra.mxu0 %v1000
      %v1537 = vpop.f32.mrf.mxu0
      %v1538 = vadd.f32 0.0, %v1537
      %v1539 = vpop.f32.mrf.mxu0
      %v1540 = vadd.f32 0.0, %v1539
      %1541 = vmatmul.bf16.gmra.mxu0 %v1003
      %v1542 = vpop.f32.mrf.mxu0
      %v1543 = vadd.f32 0.0, %v1542
      %v1544 = vpop.f32.mrf.mxu0
      %v1545 = vadd.f32 0.0, %v1544
      %1546 = vmatmul.bf16.gmra.mxu0 %v1458
      %v1547 = vpop.f32.mrf.mxu0
      %v1548 = vadd.f32 0.0, %v1547
      %v1549 = vpop.f32.mrf.mxu0
      %v1550 = vadd.f32 0.0, %v1549
      %1551 = vdwg.mxu0
      %v1552 = vadd.f32 %v1418, %v1473
      %v1553 = vadd.f32 %v1419, %v1475
      %v1554 = vadd.f32 %v1420, %v1478
      %v1555 = vadd.f32 %v1421, %v1480
      %v1556 = vadd.f32 %v1422, %v1483
      %v1557 = vadd.f32 %v1423, %v1485
      %v1558 = vadd.f32 %v1424, %v1488
      %v1559 = vadd.f32 %v1425, %v1490
      %v1560 = vadd.f32 %v1426, %v1493
      %v1561 = vadd.f32 %v1427, %v1495
      %v1562 = vadd.f32 %v1428, %v1498
      %v1563 = vadd.f32 %v1429, %v1500
      %v1564 = vadd.f32 %v1430, %v1503
      %v1565 = vadd.f32 %v1431, %v1505
      %v1566 = vadd.f32 %v1432, %v1508
      %v1567 = vadd.f32 %v1433, %v1510
      %v1568 = vadd.f32 %v1434, %v1513
      %v1569 = vadd.f32 %v1435, %v1515
      %v1570 = vadd.f32 %v1436, %v1518
      %v1571 = vadd.f32 %v1437, %v1520
      %v1572 = vadd.f32 %v1438, %v1523
      %v1573 = vadd.f32 %v1439, %v1525
      %v1574 = vadd.f32 %v1440, %v1528
      %v1575 = vadd.f32 %v1441, %v1530
      %v1576 = vadd.f32 %v1442, %v1533
      %v1577 = vadd.f32 %v1443, %v1535
      %v1578 = vadd.f32 %v1444, %v1538
      %v1579 = vadd.f32 %v1445, %v1540
      %v1580 = vadd.f32 %v1446, %v1543
      %v1581 = vadd.f32 %v1447, %v1545
      %v1582 = vadd.f32 %v1448, %v1548
      %v1583 = vadd.f32 %v1449, %v1550
      %v1585 = vshrl.u32 %v291, 16
      %v1587 = vrot.slane %v1585, 4
      %v1588 = vshll.u32 %v291, 16
      %v1590 = vrot.slane %v1588, 5
      %v1591 = vor.u32 %v1587, %v1590
      %v1592 = vrot.slane %v1591, 4
      %v1594 = vshll.u32 %v292, 16
      %v1596 = vrot.slane %v1594, 5
      %v1597 = vsel %vm300, %v1592, %v1596
      %v1598 = vshrl.u32 %v292, 16
      %v1600 = vrot.slane %v1598, 4
      %v1601 = vor.u32 %v1600, %v1596
      %v1602 = vrot.slane %v1601, 4
      %v1604 = vshll.u32 %v293, 16
      %v1606 = vrot.slane %v1604, 5
      %v1607 = vsel %vm300, %v1602, %v1606
      %s1608 = scalar_lea.vmem %s1, 16
      %v1609 = vld [vmem:[%s1608] sm:$0xf]
      %v1610 = vunpack.c.l.b16 %v1597
      %v1611 = vunpack.c.l.b16 %v1607
      %v1612 = vpack.c.b16 %v1611, %v1610
      %v1614 = vsel %vm735, %v1612, 0
      %v1617 = vsel %vm784, %v1609, 0
      %1619 = vmatpush.bf16.msra.mxu0 0
      %1620 = vmatpush.bf16.msra.mxu0 0
      %1621 = vmatpush.bf16.msra.mxu0 0
      %1622 = vmatpush.bf16.msra.mxu0 0
      %1623 = vmatpush.bf16.msra.mxu0 0
      %1624 = vmatpush.bf16.msra.mxu0 0
      %1625 = vmatpush.bf16.msra.mxu0 0
      %1626 = vmatpush.bf16.msra.mxu0 %v1617
      %1627 = vmatmul.bf16.gmra.mxu0 %v740
      %v1628 = vpop.f32.mrf.mxu0
      %v1629 = vadd.f32 0.0, %v1628
      %v1630 = vpop.f32.mrf.mxu0
      %v1631 = vadd.f32 0.0, %v1630
      %1632 = vmatmul.bf16.gmra.mxu0 %v743
      %v1633 = vpop.f32.mrf.mxu0
      %v1634 = vadd.f32 0.0, %v1633
      %v1635 = vpop.f32.mrf.mxu0
      %v1636 = vadd.f32 0.0, %v1635
      %1637 = vmatmul.bf16.gmra.mxu0 %v746
      %v1638 = vpop.f32.mrf.mxu0
      %v1639 = vadd.f32 0.0, %v1638
      %v1640 = vpop.f32.mrf.mxu0
      %v1641 = vadd.f32 0.0, %v1640
      %1642 = vmatmul.bf16.gmra.mxu0 %v749
      %v1643 = vpop.f32.mrf.mxu0
      %v1644 = vadd.f32 0.0, %v1643
      %v1645 = vpop.f32.mrf.mxu0
      %v1646 = vadd.f32 0.0, %v1645
      %1647 = vmatmul.bf16.gmra.mxu0 %v752
      %v1648 = vpop.f32.mrf.mxu0
      %v1649 = vadd.f32 0.0, %v1648
      %v1650 = vpop.f32.mrf.mxu0
      %v1651 = vadd.f32 0.0, %v1650
      %1652 = vmatmul.bf16.gmra.mxu0 %v755
      %v1653 = vpop.f32.mrf.mxu0
      %v1654 = vadd.f32 0.0, %v1653
      %v1655 = vpop.f32.mrf.mxu0
      %v1656 = vadd.f32 0.0, %v1655
      %1657 = vmatmul.bf16.gmra.mxu0 %v758
      %v1658 = vpop.f32.mrf.mxu0
      %v1659 = vadd.f32 0.0, %v1658
      %v1660 = vpop.f32.mrf.mxu0
      %v1661 = vadd.f32 0.0, %v1660
      %1662 = vmatmul.bf16.gmra.mxu0 %v761
      %v1663 = vpop.f32.mrf.mxu0
      %v1664 = vadd.f32 0.0, %v1663
      %v1665 = vpop.f32.mrf.mxu0
      %v1666 = vadd.f32 0.0, %v1665
      %1667 = vmatmul.bf16.gmra.mxu0 %v764
      %v1668 = vpop.f32.mrf.mxu0
      %v1669 = vadd.f32 0.0, %v1668
      %v1670 = vpop.f32.mrf.mxu0
      %v1671 = vadd.f32 0.0, %v1670
      %1672 = vmatmul.bf16.gmra.mxu0 %v767
      %v1673 = vpop.f32.mrf.mxu0
      %v1674 = vadd.f32 0.0, %v1673
      %v1675 = vpop.f32.mrf.mxu0
      %v1676 = vadd.f32 0.0, %v1675
      %1677 = vmatmul.bf16.gmra.mxu0 %v770
      %v1678 = vpop.f32.mrf.mxu0
      %v1679 = vadd.f32 0.0, %v1678
      %v1680 = vpop.f32.mrf.mxu0
      %v1681 = vadd.f32 0.0, %v1680
      %1682 = vmatmul.bf16.gmra.mxu0 %v773
      %v1683 = vpop.f32.mrf.mxu0
      %v1684 = vadd.f32 0.0, %v1683
      %v1685 = vpop.f32.mrf.mxu0
      %v1686 = vadd.f32 0.0, %v1685
      %1687 = vmatmul.bf16.gmra.mxu0 %v776
      %v1688 = vpop.f32.mrf.mxu0
      %v1689 = vadd.f32 0.0, %v1688
      %v1690 = vpop.f32.mrf.mxu0
      %v1691 = vadd.f32 0.0, %v1690
      %1692 = vmatmul.bf16.gmra.mxu0 %v779
      %v1693 = vpop.f32.mrf.mxu0
      %v1694 = vadd.f32 0.0, %v1693
      %v1695 = vpop.f32.mrf.mxu0
      %v1696 = vadd.f32 0.0, %v1695
      %1697 = vmatmul.bf16.gmra.mxu0 %v782
      %v1698 = vpop.f32.mrf.mxu0
      %v1699 = vadd.f32 0.0, %v1698
      %v1700 = vpop.f32.mrf.mxu0
      %v1701 = vadd.f32 0.0, %v1700
      %1702 = vmatmul.bf16.gmra.mxu0 %v1614
      %v1703 = vpop.f32.mrf.mxu0
      %v1704 = vadd.f32 0.0, %v1703
      %v1705 = vpop.f32.mrf.mxu0
      %v1706 = vadd.f32 0.0, %v1705
      %1707 = vdwg.mxu0
      %v1708 = vadd.f32 %v1552, %v1629
      %v1709 = vadd.f32 %v1553, %v1631
      %v1710 = vadd.f32 %v1554, %v1634
      %v1711 = vadd.f32 %v1555, %v1636
      %v1712 = vadd.f32 %v1556, %v1639
      %v1713 = vadd.f32 %v1557, %v1641
      %v1714 = vadd.f32 %v1558, %v1644
      %v1715 = vadd.f32 %v1559, %v1646
      %v1716 = vadd.f32 %v1560, %v1649
      %v1717 = vadd.f32 %v1561, %v1651
      %v1718 = vadd.f32 %v1562, %v1654
      %v1719 = vadd.f32 %v1563, %v1656
      %v1720 = vadd.f32 %v1564, %v1659
      %v1721 = vadd.f32 %v1565, %v1661
      %v1722 = vadd.f32 %v1566, %v1664
      %v1723 = vadd.f32 %v1567, %v1666
      %v1724 = vadd.f32 %v1568, %v1669
      %v1725 = vadd.f32 %v1569, %v1671
      %v1726 = vadd.f32 %v1570, %v1674
      %v1727 = vadd.f32 %v1571, %v1676
      %v1728 = vadd.f32 %v1572, %v1679
      %v1729 = vadd.f32 %v1573, %v1681
      %v1730 = vadd.f32 %v1574, %v1684
      %v1731 = vadd.f32 %v1575, %v1686
      %v1732 = vadd.f32 %v1576, %v1689
      %v1733 = vadd.f32 %v1577, %v1691
      %v1734 = vadd.f32 %v1578, %v1694
      %v1735 = vadd.f32 %v1579, %v1696
      %v1736 = vadd.f32 %v1580, %v1699
      %v1737 = vadd.f32 %v1581, %v1701
      %v1738 = vadd.f32 %v1582, %v1704
      %v1739 = vadd.f32 %v1583, %v1706
      %v1741 = vrot.slane %v291, 5
      %v1742 = vrot.slane %v1741, 4
      %v1743 = vrot.slane %v292, 5
      %v1744 = vsel %vm1115, %v1742, %v1743
      %v1745 = vrot.slane %v1743, 4
      %v1746 = vrot.slane %v293, 5
      %v1747 = vsel %vm1115, %v1745, %v1746
      %s1748 = scalar_lea.vmem %s1, 20
      %v1749 = vld [vmem:[%s1748] sm:$0xf]
      %v1750 = vunpack.c.l.b16 %v1744
      %v1751 = vunpack.c.l.b16 %v1747
      %v1752 = vpack.c.b16 %v1751, %v1750
      %v1754 = vsel %vm735, %v1752, 0
      %v1757 = vsel %vm784, %v1749, 0
      %1759 = vmatpush.bf16.msra.mxu0 0
      %1760 = vmatpush.bf16.msra.mxu0 0
      %1761 = vmatpush.bf16.msra.mxu0 0
      %1762 = vmatpush.bf16.msra.mxu0 0
      %1763 = vmatpush.bf16.msra.mxu0 0
      %1764 = vmatpush.bf16.msra.mxu0 0
      %1765 = vmatpush.bf16.msra.mxu0 0
      %1766 = vmatpush.bf16.msra.mxu0 %v1757
      %1767 = vmatmul.bf16.gmra.mxu0 %v1282
      %v1768 = vpop.f32.mrf.mxu0
      %v1769 = vadd.f32 0.0, %v1768
      %v1770 = vpop.f32.mrf.mxu0
      %v1771 = vadd.f32 0.0, %v1770
      %1772 = vmatmul.bf16.gmra.mxu0 %v1285
      %v1773 = vpop.f32.mrf.mxu0
      %v1774 = vadd.f32 0.0, %v1773
      %v1775 = vpop.f32.mrf.mxu0
      %v1776 = vadd.f32 0.0, %v1775
      %1777 = vmatmul.bf16.gmra.mxu0 %v1288
      %v1778 = vpop.f32.mrf.mxu0
      %v1779 = vadd.f32 0.0, %v1778
      %v1780 = vpop.f32.mrf.mxu0
      %v1781 = vadd.f32 0.0, %v1780
      %1782 = vmatmul.bf16.gmra.mxu0 %v1291
      %v1783 = vpop.f32.mrf.mxu0
      %v1784 = vadd.f32 0.0, %v1783
      %v1785 = vpop.f32.mrf.mxu0
      %v1786 = vadd.f32 0.0, %v1785
      %1787 = vmatmul.bf16.gmra.mxu0 %v1294
      %v1788 = vpop.f32.mrf.mxu0
      %v1789 = vadd.f32 0.0, %v1788
      %v1790 = vpop.f32.mrf.mxu0
      %v1791 = vadd.f32 0.0, %v1790
      %1792 = vmatmul.bf16.gmra.mxu0 %v1297
      %v1793 = vpop.f32.mrf.mxu0
      %v1794 = vadd.f32 0.0, %v1793
      %v1795 = vpop.f32.mrf.mxu0
      %v1796 = vadd.f32 0.0, %v1795
      %1797 = vmatmul.bf16.gmra.mxu0 %v1300
      %v1798 = vpop.f32.mrf.mxu0
      %v1799 = vadd.f32 0.0, %v1798
      %v1800 = vpop.f32.mrf.mxu0
      %v1801 = vadd.f32 0.0, %v1800
      %1802 = vmatmul.bf16.gmra.mxu0 %v1303
      %v1803 = vpop.f32.mrf.mxu0
      %v1804 = vadd.f32 0.0, %v1803
      %v1805 = vpop.f32.mrf.mxu0
      %v1806 = vadd.f32 0.0, %v1805
      %1807 = vmatmul.bf16.gmra.mxu0 %v1306
      %v1808 = vpop.f32.mrf.mxu0
      %v1809 = vadd.f32 0.0, %v1808
      %v1810 = vpop.f32.mrf.mxu0
      %v1811 = vadd.f32 0.0, %v1810
      %1812 = vmatmul.bf16.gmra.mxu0 %v1309
      %v1813 = vpop.f32.mrf.mxu0
      %v1814 = vadd.f32 0.0, %v1813
      %v1815 = vpop.f32.mrf.mxu0
      %v1816 = vadd.f32 0.0, %v1815
      %1817 = vmatmul.bf16.gmra.mxu0 %v1312
      %v1818 = vpop.f32.mrf.mxu0
      %v1819 = vadd.f32 0.0, %v1818
      %v1820 = vpop.f32.mrf.mxu0
      %v1821 = vadd.f32 0.0, %v1820
      %1822 = vmatmul.bf16.gmra.mxu0 %v1315
      %v1823 = vpop.f32.mrf.mxu0
      %v1824 = vadd.f32 0.0, %v1823
      %v1825 = vpop.f32.mrf.mxu0
      %v1826 = vadd.f32 0.0, %v1825
      %1827 = vmatmul.bf16.gmra.mxu0 %v1318
      %v1828 = vpop.f32.mrf.mxu0
      %v1829 = vadd.f32 0.0, %v1828
      %v1830 = vpop.f32.mrf.mxu0
      %v1831 = vadd.f32 0.0, %v1830
      %1832 = vmatmul.bf16.gmra.mxu0 %v1321
      %v1833 = vpop.f32.mrf.mxu0
      %v1834 = vadd.f32 0.0, %v1833
      %v1835 = vpop.f32.mrf.mxu0
      %v1836 = vadd.f32 0.0, %v1835
      %1837 = vmatmul.bf16.gmra.mxu0 %v1324
      %v1838 = vpop.f32.mrf.mxu0
      %v1839 = vadd.f32 0.0, %v1838
      %v1840 = vpop.f32.mrf.mxu0
      %v1841 = vadd.f32 0.0, %v1840
      %1842 = vmatmul.bf16.gmra.mxu0 %v1754
      %v1843 = vpop.f32.mrf.mxu0
      %v1844 = vadd.f32 0.0, %v1843
      %v1845 = vpop.f32.mrf.mxu0
      %v1846 = vadd.f32 0.0, %v1845
      %1847 = vdwg.mxu0
      %v1848 = vadd.f32 %v1708, %v1769
      %v1849 = vadd.f32 %v1709, %v1771
      %v1850 = vadd.f32 %v1710, %v1774
      %v1851 = vadd.f32 %v1711, %v1776
      %v1852 = vadd.f32 %v1712, %v1779
      %v1853 = vadd.f32 %v1713, %v1781
      %v1854 = vadd.f32 %v1714, %v1784
      %v1855 = vadd.f32 %v1715, %v1786
      %v1856 = vadd.f32 %v1716, %v1789
      %v1857 = vadd.f32 %v1717, %v1791
      %v1858 = vadd.f32 %v1718, %v1794
      %v1859 = vadd.f32 %v1719, %v1796
      %v1860 = vadd.f32 %v1720, %v1799
      %v1861 = vadd.f32 %v1721, %v1801
      %v1862 = vadd.f32 %v1722, %v1804
      %v1863 = vadd.f32 %v1723, %v1806
      %v1864 = vadd.f32 %v1724, %v1809
      %v1865 = vadd.f32 %v1725, %v1811
      %v1866 = vadd.f32 %v1726, %v1814
      %v1867 = vadd.f32 %v1727, %v1816
      %v1868 = vadd.f32 %v1728, %v1819
      %v1869 = vadd.f32 %v1729, %v1821
      %v1870 = vadd.f32 %v1730, %v1824
      %v1871 = vadd.f32 %v1731, %v1826
      %v1872 = vadd.f32 %v1732, %v1829
      %v1873 = vadd.f32 %v1733, %v1831
      %v1874 = vadd.f32 %v1734, %v1834
      %v1875 = vadd.f32 %v1735, %v1836
      %v1876 = vadd.f32 %v1736, %v1839
      %v1877 = vadd.f32 %v1737, %v1841
      %v1878 = vadd.f32 %v1738, %v1844
      %v1879 = vadd.f32 %v1739, %v1846
      %s1880 = scalar_lea.vmem %s1, 24
      %v1881 = vld [vmem:[%s1880] sm:$0xf]
      %v1884 = vunpack.c.l.b16 %v294
      %v1885 = vunpack.c.l.b16 %v295
      %v1886 = vpack.c.b16 %v1885, %v1884
      %v1888 = vsel %vm735, %v1886, 0
      %v1891 = vsel %vm784, %v1881, 0
      %1893 = vmatpush.bf16.msra.mxu0 0
      %1894 = vmatpush.bf16.msra.mxu0 0
      %1895 = vmatpush.bf16.msra.mxu0 0
      %1896 = vmatpush.bf16.msra.mxu0 0
      %1897 = vmatpush.bf16.msra.mxu0 0
      %1898 = vmatpush.bf16.msra.mxu0 0
      %1899 = vmatpush.bf16.msra.mxu0 0
      %1900 = vmatpush.bf16.msra.mxu0 %v1891
      %1901 = vmatmul.bf16.gmra.mxu0 %v964
      %v1902 = vpop.f32.mrf.mxu0
      %v1903 = vadd.f32 0.0, %v1902
      %v1904 = vpop.f32.mrf.mxu0
      %v1905 = vadd.f32 0.0, %v1904
      %1906 = vmatmul.bf16.gmra.mxu0 %v967
      %v1907 = vpop.f32.mrf.mxu0
      %v1908 = vadd.f32 0.0, %v1907
      %v1909 = vpop.f32.mrf.mxu0
      %v1910 = vadd.f32 0.0, %v1909
      %1911 = vmatmul.bf16.gmra.mxu0 %v970
      %v1912 = vpop.f32.mrf.mxu0
      %v1913 = vadd.f32 0.0, %v1912
      %v1914 = vpop.f32.mrf.mxu0
      %v1915 = vadd.f32 0.0, %v1914
      %1916 = vmatmul.bf16.gmra.mxu0 %v973
      %v1917 = vpop.f32.mrf.mxu0
      %v1918 = vadd.f32 0.0, %v1917
      %v1919 = vpop.f32.mrf.mxu0
      %v1920 = vadd.f32 0.0, %v1919
      %1921 = vmatmul.bf16.gmra.mxu0 %v976
      %v1922 = vpop.f32.mrf.mxu0
      %v1923 = vadd.f32 0.0, %v1922
      %v1924 = vpop.f32.mrf.mxu0
      %v1925 = vadd.f32 0.0, %v1924
      %1926 = vmatmul.bf16.gmra.mxu0 %v979
      %v1927 = vpop.f32.mrf.mxu0
      %v1928 = vadd.f32 0.0, %v1927
      %v1929 = vpop.f32.mrf.mxu0
      %v1930 = vadd.f32 0.0, %v1929
      %1931 = vmatmul.bf16.gmra.mxu0 %v982
      %v1932 = vpop.f32.mrf.mxu0
      %v1933 = vadd.f32 0.0, %v1932
      %v1934 = vpop.f32.mrf.mxu0
      %v1935 = vadd.f32 0.0, %v1934
      %1936 = vmatmul.bf16.gmra.mxu0 %v985
      %v1937 = vpop.f32.mrf.mxu0
      %v1938 = vadd.f32 0.0, %v1937
      %v1939 = vpop.f32.mrf.mxu0
      %v1940 = vadd.f32 0.0, %v1939
      %1941 = vmatmul.bf16.gmra.mxu0 %v988
      %v1942 = vpop.f32.mrf.mxu0
      %v1943 = vadd.f32 0.0, %v1942
      %v1944 = vpop.f32.mrf.mxu0
      %v1945 = vadd.f32 0.0, %v1944
      %1946 = vmatmul.bf16.gmra.mxu0 %v991
      %v1947 = vpop.f32.mrf.mxu0
      %v1948 = vadd.f32 0.0, %v1947
      %v1949 = vpop.f32.mrf.mxu0
      %v1950 = vadd.f32 0.0, %v1949
      %1951 = vmatmul.bf16.gmra.mxu0 %v994
      %v1952 = vpop.f32.mrf.mxu0
      %v1953 = vadd.f32 0.0, %v1952
      %v1954 = vpop.f32.mrf.mxu0
      %v1955 = vadd.f32 0.0, %v1954
      %1956 = vmatmul.bf16.gmra.mxu0 %v997
      %v1957 = vpop.f32.mrf.mxu0
      %v1958 = vadd.f32 0.0, %v1957
      %v1959 = vpop.f32.mrf.mxu0
      %v1960 = vadd.f32 0.0, %v1959
      %1961 = vmatmul.bf16.gmra.mxu0 %v1000
      %v1962 = vpop.f32.mrf.mxu0
      %v1963 = vadd.f32 0.0, %v1962
      %v1964 = vpop.f32.mrf.mxu0
      %v1965 = vadd.f32 0.0, %v1964
      %1966 = vmatmul.bf16.gmra.mxu0 %v1003
      %v1967 = vpop.f32.mrf.mxu0
      %v1968 = vadd.f32 0.0, %v1967
      %v1969 = vpop.f32.mrf.mxu0
      %v1970 = vadd.f32 0.0, %v1969
      %1971 = vmatmul.bf16.gmra.mxu0 %v1458
      %v1972 = vpop.f32.mrf.mxu0
      %v1973 = vadd.f32 0.0, %v1972
      %v1974 = vpop.f32.mrf.mxu0
      %v1975 = vadd.f32 0.0, %v1974
      %1976 = vmatmul.bf16.gmra.mxu0 %v1888
      %v1977 = vpop.f32.mrf.mxu0
      %v1978 = vadd.f32 0.0, %v1977
      %v1979 = vpop.f32.mrf.mxu0
      %v1980 = vadd.f32 0.0, %v1979
      %1981 = vdwg.mxu0
      %v1982 = vadd.f32 %v1848, %v1903
      %v1983 = vadd.f32 %v1849, %v1905
      %v1984 = vadd.f32 %v1850, %v1908
      %v1985 = vadd.f32 %v1851, %v1910
      %v1986 = vadd.f32 %v1852, %v1913
      %v1987 = vadd.f32 %v1853, %v1915
      %v1988 = vadd.f32 %v1854, %v1918
      %v1989 = vadd.f32 %v1855, %v1920
      %v1990 = vadd.f32 %v1856, %v1923
      %v1991 = vadd.f32 %v1857, %v1925
      %v1992 = vadd.f32 %v1858, %v1928
      %v1993 = vadd.f32 %v1859, %v1930
      %v1994 = vadd.f32 %v1860, %v1933
      %v1995 = vadd.f32 %v1861, %v1935
      %v1996 = vadd.f32 %v1862, %v1938
      %v1997 = vadd.f32 %v1863, %v1940
      %v1998 = vadd.f32 %v1864, %v1943
      %v1999 = vadd.f32 %v1865, %v1945
      %v2000 = vadd.f32 %v1866, %v1948
      %v2001 = vadd.f32 %v1867, %v1950
      %v2002 = vadd.f32 %v1868, %v1953
      %v2003 = vadd.f32 %v1869, %v1955
      %v2004 = vadd.f32 %v1870, %v1958
      %v2005 = vadd.f32 %v1871, %v1960
      %v2006 = vadd.f32 %v1872, %v1963
      %v2007 = vadd.f32 %v1873, %v1965
      %v2008 = vadd.f32 %v1874, %v1968
      %v2009 = vadd.f32 %v1875, %v1970
      %v2010 = vadd.f32 %v1876, %v1973
      %v2011 = vadd.f32 %v1877, %v1975
      %v2012 = vadd.f32 %v1878, %v1978
      %v2013 = vadd.f32 %v1879, %v1980
      %v2015 = vshrl.u32 %v294, 16
      %v2017 = vrot.slane %v2015, 4
      %v2018 = vshll.u32 %v294, 16
      %v2020 = vrot.slane %v2018, 5
      %v2021 = vor.u32 %v2017, %v2020
      %v2022 = vrot.slane %v2021, 4
      %v2024 = vshll.u32 %v295, 16
      %v2026 = vrot.slane %v2024, 5
      %v2027 = vsel %vm300, %v2022, %v2026
      %v2028 = vshrl.u32 %v295, 16
      %v2030 = vrot.slane %v2028, 4
      %v2031 = vor.u32 %v2030, %v2026
      %v2032 = vrot.slane %v2031, 4
      %v2034 = vshll.u32 %v296, 16
      %v2036 = vrot.slane %v2034, 5
      %v2037 = vsel %vm300, %v2032, %v2036
      %s2038 = scalar_lea.vmem %s1, 28
      %v2039 = vld [vmem:[%s2038] sm:$0xf]
      %v2040 = vunpack.c.l.b16 %v2027
      %v2041 = vunpack.c.l.b16 %v2037
      %v2042 = vpack.c.b16 %v2041, %v2040
      %v2044 = vsel %vm735, %v2042, 0
      %v2047 = vsel %vm784, %v2039, 0
      %2049 = vmatpush.bf16.msra.mxu0 0
      %2050 = vmatpush.bf16.msra.mxu0 0
      %2051 = vmatpush.bf16.msra.mxu0 0
      %2052 = vmatpush.bf16.msra.mxu0 0
      %2053 = vmatpush.bf16.msra.mxu0 0
      %2054 = vmatpush.bf16.msra.mxu0 0
      %2055 = vmatpush.bf16.msra.mxu0 0
      %2056 = vmatpush.bf16.msra.mxu0 %v2047
      %2057 = vmatmul.bf16.gmra.mxu0 %v743
      %v2058 = vpop.f32.mrf.mxu0
      %v2059 = vadd.f32 0.0, %v2058
      %v2060 = vpop.f32.mrf.mxu0
      %v2061 = vadd.f32 0.0, %v2060
      %2062 = vmatmul.bf16.gmra.mxu0 %v746
      %v2063 = vpop.f32.mrf.mxu0
      %v2064 = vadd.f32 0.0, %v2063
      %v2065 = vpop.f32.mrf.mxu0
      %v2066 = vadd.f32 0.0, %v2065
      %2067 = vmatmul.bf16.gmra.mxu0 %v749
      %v2068 = vpop.f32.mrf.mxu0
      %v2069 = vadd.f32 0.0, %v2068
      %v2070 = vpop.f32.mrf.mxu0
      %v2071 = vadd.f32 0.0, %v2070
      %2072 = vmatmul.bf16.gmra.mxu0 %v752
      %v2073 = vpop.f32.mrf.mxu0
      %v2074 = vadd.f32 0.0, %v2073
      %v2075 = vpop.f32.mrf.mxu0
      %v2076 = vadd.f32 0.0, %v2075
      %2077 = vmatmul.bf16.gmra.mxu0 %v755
      %v2078 = vpop.f32.mrf.mxu0
      %v2079 = vadd.f32 0.0, %v2078
      %v2080 = vpop.f32.mrf.mxu0
      %v2081 = vadd.f32 0.0, %v2080
      %2082 = vmatmul.bf16.gmra.mxu0 %v758
      %v2083 = vpop.f32.mrf.mxu0
      %v2084 = vadd.f32 0.0, %v2083
      %v2085 = vpop.f32.mrf.mxu0
      %v2086 = vadd.f32 0.0, %v2085
      %2087 = vmatmul.bf16.gmra.mxu0 %v761
      %v2088 = vpop.f32.mrf.mxu0
      %v2089 = vadd.f32 0.0, %v2088
      %v2090 = vpop.f32.mrf.mxu0
      %v2091 = vadd.f32 0.0, %v2090
      %2092 = vmatmul.bf16.gmra.mxu0 %v764
      %v2093 = vpop.f32.mrf.mxu0
      %v2094 = vadd.f32 0.0, %v2093
      %v2095 = vpop.f32.mrf.mxu0
      %v2096 = vadd.f32 0.0, %v2095
      %2097 = vmatmul.bf16.gmra.mxu0 %v767
      %v2098 = vpop.f32.mrf.mxu0
      %v2099 = vadd.f32 0.0, %v2098
      %v2100 = vpop.f32.mrf.mxu0
      %v2101 = vadd.f32 0.0, %v2100
      %2102 = vmatmul.bf16.gmra.mxu0 %v770
      %v2103 = vpop.f32.mrf.mxu0
      %v2104 = vadd.f32 0.0, %v2103
      %v2105 = vpop.f32.mrf.mxu0
      %v2106 = vadd.f32 0.0, %v2105
      %2107 = vmatmul.bf16.gmra.mxu0 %v773
      %v2108 = vpop.f32.mrf.mxu0
      %v2109 = vadd.f32 0.0, %v2108
      %v2110 = vpop.f32.mrf.mxu0
      %v2111 = vadd.f32 0.0, %v2110
      %2112 = vmatmul.bf16.gmra.mxu0 %v776
      %v2113 = vpop.f32.mrf.mxu0
      %v2114 = vadd.f32 0.0, %v2113
      %v2115 = vpop.f32.mrf.mxu0
      %v2116 = vadd.f32 0.0, %v2115
      %2117 = vmatmul.bf16.gmra.mxu0 %v779
      %v2118 = vpop.f32.mrf.mxu0
      %v2119 = vadd.f32 0.0, %v2118
      %v2120 = vpop.f32.mrf.mxu0
      %v2121 = vadd.f32 0.0, %v2120
      %2122 = vmatmul.bf16.gmra.mxu0 %v782
      %v2123 = vpop.f32.mrf.mxu0
      %v2124 = vadd.f32 0.0, %v2123
      %v2125 = vpop.f32.mrf.mxu0
      %v2126 = vadd.f32 0.0, %v2125
      %2127 = vmatmul.bf16.gmra.mxu0 %v1614
      %v2128 = vpop.f32.mrf.mxu0
      %v2129 = vadd.f32 0.0, %v2128
      %v2130 = vpop.f32.mrf.mxu0
      %v2131 = vadd.f32 0.0, %v2130
      %2132 = vmatmul.bf16.gmra.mxu0 %v2044
      %v2133 = vpop.f32.mrf.mxu0
      %v2134 = vadd.f32 0.0, %v2133
      %v2135 = vpop.f32.mrf.mxu0
      %v2136 = vadd.f32 0.0, %v2135
      %2137 = vdwg.mxu0
      %v2138 = vadd.f32 %v1982, %v2059
      %v2139 = vadd.f32 %v1983, %v2061
      %v2140 = vadd.f32 %v1984, %v2064
      %v2141 = vadd.f32 %v1985, %v2066
      %v2142 = vadd.f32 %v1986, %v2069
      %v2143 = vadd.f32 %v1987, %v2071
      %v2144 = vadd.f32 %v1988, %v2074
      %v2145 = vadd.f32 %v1989, %v2076
      %v2146 = vadd.f32 %v1990, %v2079
      %v2147 = vadd.f32 %v1991, %v2081
      %v2148 = vadd.f32 %v1992, %v2084
      %v2149 = vadd.f32 %v1993, %v2086
      %v2150 = vadd.f32 %v1994, %v2089
      %v2151 = vadd.f32 %v1995, %v2091
      %v2152 = vadd.f32 %v1996, %v2094
      %v2153 = vadd.f32 %v1997, %v2096
      %v2154 = vadd.f32 %v1998, %v2099
      %v2155 = vadd.f32 %v1999, %v2101
      %v2156 = vadd.f32 %v2000, %v2104
      %v2157 = vadd.f32 %v2001, %v2106
      %v2158 = vadd.f32 %v2002, %v2109
      %v2159 = vadd.f32 %v2003, %v2111
      %v2160 = vadd.f32 %v2004, %v2114
      %v2161 = vadd.f32 %v2005, %v2116
      %v2162 = vadd.f32 %v2006, %v2119
      %v2163 = vadd.f32 %v2007, %v2121
      %v2164 = vadd.f32 %v2008, %v2124
      %v2165 = vadd.f32 %v2009, %v2126
      %v2166 = vadd.f32 %v2010, %v2129
      %v2167 = vadd.f32 %v2011, %v2131
      %v2168 = vadd.f32 %v2012, %v2134
      %v2169 = vadd.f32 %v2013, %v2136
      %v2171 = vrot.slane %v294, 5
      %v2172 = vrot.slane %v2171, 4
      %v2173 = vrot.slane %v295, 5
      %v2174 = vsel %vm1115, %v2172, %v2173
      %v2175 = vrot.slane %v2173, 4
      %v2176 = vrot.slane %v296, 5
      %v2177 = vsel %vm1115, %v2175, %v2176
      %s2178 = scalar_lea.vmem %s1, 32
      %v2179 = vld [vmem:[%s2178] sm:$0xf]
      %v2180 = vunpack.c.l.b16 %v2174
      %v2181 = vunpack.c.l.b16 %v2177
      %v2182 = vpack.c.b16 %v2181, %v2180
      %v2184 = vsel %vm735, %v2182, 0
      %v2187 = vsel %vm784, %v2179, 0
      %2189 = vmatpush.bf16.msra.mxu0 0
      %2190 = vmatpush.bf16.msra.mxu0 0
      %2191 = vmatpush.bf16.msra.mxu0 0
      %2192 = vmatpush.bf16.msra.mxu0 0
      %2193 = vmatpush.bf16.msra.mxu0 0
      %2194 = vmatpush.bf16.msra.mxu0 0
      %2195 = vmatpush.bf16.msra.mxu0 0
      %2196 = vmatpush.bf16.msra.mxu0 %v2187
      %2197 = vmatmul.bf16.gmra.mxu0 %v1285
      %v2198 = vpop.f32.mrf.mxu0
      %v2199 = vadd.f32 0.0, %v2198
      %v2200 = vpop.f32.mrf.mxu0
      %v2201 = vadd.f32 0.0, %v2200
      %2202 = vmatmul.bf16.gmra.mxu0 %v1288
      %v2203 = vpop.f32.mrf.mxu0
      %v2204 = vadd.f32 0.0, %v2203
      %v2205 = vpop.f32.mrf.mxu0
      %v2206 = vadd.f32 0.0, %v2205
      %2207 = vmatmul.bf16.gmra.mxu0 %v1291
      %v2208 = vpop.f32.mrf.mxu0
      %v2209 = vadd.f32 0.0, %v2208
      %v2210 = vpop.f32.mrf.mxu0
      %v2211 = vadd.f32 0.0, %v2210
      %2212 = vmatmul.bf16.gmra.mxu0 %v1294
      %v2213 = vpop.f32.mrf.mxu0
      %v2214 = vadd.f32 0.0, %v2213
      %v2215 = vpop.f32.mrf.mxu0
      %v2216 = vadd.f32 0.0, %v2215
      %2217 = vmatmul.bf16.gmra.mxu0 %v1297
      %v2218 = vpop.f32.mrf.mxu0
      %v2219 = vadd.f32 0.0, %v2218
      %v2220 = vpop.f32.mrf.mxu0
      %v2221 = vadd.f32 0.0, %v2220
      %2222 = vmatmul.bf16.gmra.mxu0 %v1300
      %v2223 = vpop.f32.mrf.mxu0
      %v2224 = vadd.f32 0.0, %v2223
      %v2225 = vpop.f32.mrf.mxu0
      %v2226 = vadd.f32 0.0, %v2225
      %2227 = vmatmul.bf16.gmra.mxu0 %v1303
      %v2228 = vpop.f32.mrf.mxu0
      %v2229 = vadd.f32 0.0, %v2228
      %v2230 = vpop.f32.mrf.mxu0
      %v2231 = vadd.f32 0.0, %v2230
      %2232 = vmatmul.bf16.gmra.mxu0 %v1306
      %v2233 = vpop.f32.mrf.mxu0
      %v2234 = vadd.f32 0.0, %v2233
      %v2235 = vpop.f32.mrf.mxu0
      %v2236 = vadd.f32 0.0, %v2235
      %2237 = vmatmul.bf16.gmra.mxu0 %v1309
      %v2238 = vpop.f32.mrf.mxu0
      %v2239 = vadd.f32 0.0, %v2238
      %v2240 = vpop.f32.mrf.mxu0
      %v2241 = vadd.f32 0.0, %v2240
      %2242 = vmatmul.bf16.gmra.mxu0 %v1312
      %v2243 = vpop.f32.mrf.mxu0
      %v2244 = vadd.f32 0.0, %v2243
      %v2245 = vpop.f32.mrf.mxu0
      %v2246 = vadd.f32 0.0, %v2245
      %2247 = vmatmul.bf16.gmra.mxu0 %v1315
      %v2248 = vpop.f32.mrf.mxu0
      %v2249 = vadd.f32 0.0, %v2248
      %v2250 = vpop.f32.mrf.mxu0
      %v2251 = vadd.f32 0.0, %v2250
      %2252 = vmatmul.bf16.gmra.mxu0 %v1318
      %v2253 = vpop.f32.mrf.mxu0
      %v2254 = vadd.f32 0.0, %v2253
      %v2255 = vpop.f32.mrf.mxu0
      %v2256 = vadd.f32 0.0, %v2255
      %2257 = vmatmul.bf16.gmra.mxu0 %v1321
      %v2258 = vpop.f32.mrf.mxu0
      %v2259 = vadd.f32 0.0, %v2258
      %v2260 = vpop.f32.mrf.mxu0
      %v2261 = vadd.f32 0.0, %v2260
      %2262 = vmatmul.bf16.gmra.mxu0 %v1324
      %v2263 = vpop.f32.mrf.mxu0
      %v2264 = vadd.f32 0.0, %v2263
      %v2265 = vpop.f32.mrf.mxu0
      %v2266 = vadd.f32 0.0, %v2265
      %2267 = vmatmul.bf16.gmra.mxu0 %v1754
      %v2268 = vpop.f32.mrf.mxu0
      %v2269 = vadd.f32 0.0, %v2268
      %v2270 = vpop.f32.mrf.mxu0
      %v2271 = vadd.f32 0.0, %v2270
      %2272 = vmatmul.bf16.gmra.mxu0 %v2184
      %v2273 = vpop.f32.mrf.mxu0
      %v2274 = vadd.f32 0.0, %v2273
      %v2275 = vpop.f32.mrf.mxu0
      %v2276 = vadd.f32 0.0, %v2275
      %2277 = vdwg.mxu0
      %v2278 = vadd.f32 %v2138, %v2199
      %v2279 = vadd.f32 %v2139, %v2201
      %v2280 = vadd.f32 %v2140, %v2204
      %v2281 = vadd.f32 %v2141, %v2206
      %v2282 = vadd.f32 %v2142, %v2209
      %v2283 = vadd.f32 %v2143, %v2211
      %v2284 = vadd.f32 %v2144, %v2214
      %v2285 = vadd.f32 %v2145, %v2216
      %v2286 = vadd.f32 %v2146, %v2219
      %v2287 = vadd.f32 %v2147, %v2221
      %v2288 = vadd.f32 %v2148, %v2224
      %v2289 = vadd.f32 %v2149, %v2226
      %v2290 = vadd.f32 %v2150, %v2229
      %v2291 = vadd.f32 %v2151, %v2231
      %v2292 = vadd.f32 %v2152, %v2234
      %v2293 = vadd.f32 %v2153, %v2236
      %v2294 = vadd.f32 %v2154, %v2239
      %v2295 = vadd.f32 %v2155, %v2241
      %v2296 = vadd.f32 %v2156, %v2244
      %v2297 = vadd.f32 %v2157, %v2246
      %v2298 = vadd.f32 %v2158, %v2249
      %v2299 = vadd.f32 %v2159, %v2251
      %v2300 = vadd.f32 %v2160, %v2254
      %v2301 = vadd.f32 %v2161, %v2256
      %v2302 = vadd.f32 %v2162, %v2259
      %v2303 = vadd.f32 %v2163, %v2261
      %v2304 = vadd.f32 %v2164, %v2264
      %v2305 = vadd.f32 %v2165, %v2266
      %v2306 = vadd.f32 %v2166, %v2269
      %v2307 = vadd.f32 %v2167, %v2271
      %v2308 = vadd.f32 %v2168, %v2274
      %v2309 = vadd.f32 %v2169, %v2276
      %v2310 = vld [vmem:[%s2] sm:$0x1]
      %v2312 = vperm.slane %v2310, 0
      %v2314 = vadd.f32 %v2278, %v2312
      %v2315 = vadd.f32 %v2279, %v2312
      %v2316 = vadd.f32 %v2280, %v2312
      %v2317 = vadd.f32 %v2281, %v2312
      %v2318 = vadd.f32 %v2282, %v2312
      %v2319 = vadd.f32 %v2283, %v2312
      %v2320 = vadd.f32 %v2284, %v2312
      %v2321 = vadd.f32 %v2285, %v2312
      %v2322 = vadd.f32 %v2286, %v2312
      %v2323 = vadd.f32 %v2287, %v2312
      %v2324 = vadd.f32 %v2288, %v2312
      %v2325 = vadd.f32 %v2289, %v2312
      %v2326 = vadd.f32 %v2290, %v2312
      %v2327 = vadd.f32 %v2291, %v2312
      %v2328 = vadd.f32 %v2292, %v2312
      %v2329 = vadd.f32 %v2293, %v2312
      %v2330 = vadd.f32 %v2294, %v2312
      %v2331 = vadd.f32 %v2295, %v2312
      %v2332 = vadd.f32 %v2296, %v2312
      %v2333 = vadd.f32 %v2297, %v2312
      %v2334 = vadd.f32 %v2298, %v2312
      %v2335 = vadd.f32 %v2299, %v2312
      %v2336 = vadd.f32 %v2300, %v2312
      %v2337 = vadd.f32 %v2301, %v2312
      %v2338 = vadd.f32 %v2302, %v2312
      %v2339 = vadd.f32 %v2303, %v2312
      %v2340 = vadd.f32 %v2304, %v2312
      %v2341 = vadd.f32 %v2305, %v2312
      %v2342 = vadd.f32 %v2306, %v2312
      %v2343 = vadd.f32 %v2307, %v2312
      %v2344 = vadd.f32 %v2308, %v2312
      %v2345 = vadd.f32 %v2309, %v2312
      %2346 = vst [vmem:[#allocation2] sm:$0xff] -inf
      %2347 = vst [vmem:[#allocation2 + $0x8] sm:$0xff] -inf
      %2348 = vst [vmem:[#allocation2 + $0x10] sm:$0x3] -inf
      %2349 = vst [vmem:[#allocation2 + $0x18] sm:$0xff] -inf
      %2350 = vst [vmem:[#allocation2 + $0x20] sm:$0xff] -inf
      %2351 = vst [vmem:[#allocation2 + $0x28] sm:$0x3] -inf
      %2352 = vst [vmem:[#allocation2 + $0x30] sm:$0xff] -inf
      %2353 = vst [vmem:[#allocation2 + $0x38] sm:$0xff] -inf
      %2354 = vst [vmem:[#allocation2 + $0x40] sm:$0x3] -inf
      %2355 = vst [vmem:[#allocation2 + $0x48] sm:$0xff] -inf
      %2356 = vst [vmem:[#allocation2 + $0x50] sm:$0xff] -inf
      %2357 = vst [vmem:[#allocation2 + $0x58] sm:$0x3] -inf
      %2358 = vst [vmem:[#allocation2 + $0x60] sm:$0xff] -inf
      %2359 = vst [vmem:[#allocation2 + $0x68] sm:$0xff] -inf
      %2360 = vst [vmem:[#allocation2 + $0x70] sm:$0x3] -inf
      %2361 = vst [vmem:[#allocation2 + $0x78] sm:$0xff] -inf
      %2362 = vst [vmem:[#allocation2 + $0x80] sm:$0xff] -inf
      %2363 = vst [vmem:[#allocation2 + $0x88] sm:$0x3] -inf
      %2364 = vst [vmem:[#allocation2 + $0x90] sm:$0xff] -inf
      %2365 = vst [vmem:[#allocation2 + $0x98] sm:$0xff] -inf
      %2366 = vst [vmem:[#allocation2 + $0xa0] sm:$0x3] -inf
      %2367 = vst [vmem:[#allocation2 + $0xa8] sm:$0xff] -inf
      %2368 = vst [vmem:[#allocation2 + $0xb0] sm:$0xff] -inf
      %2369 = vst [vmem:[#allocation2 + $0xb8] sm:$0x3] -inf
      %2370 = vst [vmem:[#allocation2 + $0xc0] sm:$0xff] -inf
      %2371 = vst [vmem:[#allocation2 + $0xc8] sm:$0xff] -inf
      %2372 = vst [vmem:[#allocation2 + $0xd0] sm:$0x3] -inf
      %2373 = vst [vmem:[#allocation2 + $0xd8] sm:$0xff] -inf
      %2374 = vst [vmem:[#allocation2 + $0xe0] sm:$0xff] -inf
      %2375 = vst [vmem:[#allocation2 + $0xe8] sm:$0x3] -inf
      %2376 = vst [vmem:[#allocation2 + $0xf0] sm:$0xff] -inf
      %2377 = vst [vmem:[#allocation2 + $0xf8] sm:$0xff] -inf
      %2378 = vst [vmem:[#allocation2 + $0x100] sm:$0x3] -inf
      %2379 = vst [vmem:[#allocation2 + $0x108] sm:$0xff] -inf
      %2380 = vst [vmem:[#allocation2 + $0x110] sm:$0xff] -inf
      %2381 = vst [vmem:[#allocation2 + $0x118] sm:$0x3] -inf
      %2382 = vst [vmem:[#allocation2 + $0x120] sm:$0xff] -inf
      %2383 = vst [vmem:[#allocation2 + $0x128] sm:$0xff] -inf
      %2384 = vst [vmem:[#allocation2 + $0x130] sm:$0x3] -inf
      %2385 = vst [vmem:[#allocation2 + $0x138] sm:$0xff] -inf
      %2386 = vst [vmem:[#allocation2 + $0x140] sm:$0xff] -inf
      %2387 = vst [vmem:[#allocation2 + $0x148] sm:$0x3] -inf
      %2388 = vst [vmem:[#allocation2 + $0x150] sm:$0xff] -inf
      %2389 = vst [vmem:[#allocation2 + $0x158] sm:$0xff] -inf
      %2390 = vst [vmem:[#allocation2 + $0x160] sm:$0x3] -inf
      %2391 = vst [vmem:[#allocation2 + $0x168] sm:$0xff] -inf
      %2392 = vst [vmem:[#allocation2 + $0x170] sm:$0xff] -inf
      %2393 = vst [vmem:[#allocation2 + $0x178] sm:$0x3] -inf
      %2394 = vst [vmem:[#allocation2 + $0x180] sm:$0xff] -inf
      %2395 = vst [vmem:[#allocation2 + $0x188] sm:$0xff] -inf
      %2396 = vst [vmem:[#allocation2 + $0x190] sm:$0x3] -inf
      %2397 = vst [vmem:[#allocation2 + $0x198] sm:$0xff] -inf
      %2398 = vst [vmem:[#allocation2 + $0x1a0] sm:$0xff] -inf
      %2399 = vst [vmem:[#allocation2 + $0x1a8] sm:$0x3] -inf
      %s2400 = scalar_lea.vmem [#allocation2], 24
      %2401 = vst [vmem:[%s2400 + $0x1] sm:$0xff] %v2314
      %2402 = vst [vmem:[%s2400 + $0x9] sm:$0xff] %v2315
      %2403 = vst [vmem:[%s2400 + $0x19] sm:$0xff] %v2316
      %2404 = vst [vmem:[%s2400 + $0x21] sm:$0xff] %v2317
      %2405 = vst [vmem:[%s2400 + $0x31] sm:$0xff] %v2318
      %2406 = vst [vmem:[%s2400 + $0x39] sm:$0xff] %v2319
      %2407 = vst [vmem:[%s2400 + $0x49] sm:$0xff] %v2320
      %2408 = vst [vmem:[%s2400 + $0x51] sm:$0xff] %v2321
      %2409 = vst [vmem:[%s2400 + $0x61] sm:$0xff] %v2322
      %2410 = vst [vmem:[%s2400 + $0x69] sm:$0xff] %v2323
      %2411 = vst [vmem:[%s2400 + $0x79] sm:$0xff] %v2324
      %2412 = vst [vmem:[%s2400 + $0x81] sm:$0xff] %v2325
      %2413 = vst [vmem:[%s2400 + $0x91] sm:$0xff] %v2326
      %2414 = vst [vmem:[%s2400 + $0x99] sm:$0xff] %v2327
      %2415 = vst [vmem:[%s2400 + $0xa9] sm:$0xff] %v2328
      %2416 = vst [vmem:[%s2400 + $0xb1] sm:$0xff] %v2329
      %2417 = vst [vmem:[%s2400 + $0xc1] sm:$0xff] %v2330
      %2418 = vst [vmem:[%s2400 + $0xc9] sm:$0xff] %v2331
      %2419 = vst [vmem:[%s2400 + $0xd9] sm:$0xff] %v2332
      %2420 = vst [vmem:[%s2400 + $0xe1] sm:$0xff] %v2333
      %2421 = vst [vmem:[%s2400 + $0xf1] sm:$0xff] %v2334
      %2422 = vst [vmem:[%s2400 + $0xf9] sm:$0xff] %v2335
      %2423 = vst [vmem:[%s2400 + $0x109] sm:$0xff] %v2336
      %2424 = vst [vmem:[%s2400 + $0x111] sm:$0xff] %v2337
      %2425 = vst [vmem:[%s2400 + $0x121] sm:$0xff] %v2338
      %2426 = vst [vmem:[%s2400 + $0x129] sm:$0xff] %v2339
      %2427 = vst [vmem:[%s2400 + $0x139] sm:$0xff] %v2340
      %2428 = vst [vmem:[%s2400 + $0x141] sm:$0xff] %v2341
      %2429 = vst [vmem:[%s2400 + $0x151] sm:$0xff] %v2342
      %2430 = vst [vmem:[%s2400 + $0x159] sm:$0xff] %v2343
      %2431 = vst [vmem:[%s2400 + $0x169] sm:$0xff] %v2344
      %2432 = vst [vmem:[%s2400 + $0x171] sm:$0xff] %v2345
      %v2433 = vld [vmem:[#allocation2] sm:$0xff]
      %v2434 = vld [vmem:[#allocation2 + $0x8] sm:$0xff]
      %v2435 = vld [vmem:[#allocation2 + $0x10] sm:$0x3]
      %v2436 = vld [vmem:[#allocation2 + $0x18] sm:$0xff]
      %v2437 = vld [vmem:[#allocation2 + $0x20] sm:$0xff]
      %v2438 = vld [vmem:[#allocation2 + $0x28] sm:$0x3]
      %v2439 = vld [vmem:[#allocation2 + $0x30] sm:$0xff]
      %v2440 = vld [vmem:[#allocation2 + $0x38] sm:$0xff]
      %v2441 = vld [vmem:[#allocation2 + $0x40] sm:$0x3]
      %v2442 = vld [vmem:[#allocation2 + $0x48] sm:$0xff]
      %v2443 = vld [vmem:[#allocation2 + $0x50] sm:$0xff]
      %v2444 = vld [vmem:[#allocation2 + $0x58] sm:$0x3]
      %v2445 = vld [vmem:[#allocation2 + $0x60] sm:$0xff]
      %v2446 = vld [vmem:[#allocation2 + $0x68] sm:$0xff]
      %v2447 = vld [vmem:[#allocation2 + $0x70] sm:$0x3]
      %v2448 = vld [vmem:[#allocation2 + $0x78] sm:$0xff]
      %v2449 = vld [vmem:[#allocation2 + $0x80] sm:$0xff]
      %v2450 = vld [vmem:[#allocation2 + $0x88] sm:$0x3]
      %v2451 = vld [vmem:[#allocation2 + $0x90] sm:$0xff]
      %v2452 = vld [vmem:[#allocation2 + $0x98] sm:$0xff]
      %v2453 = vld [vmem:[#allocation2 + $0xa0] sm:$0x3]
      %v2454 = vld [vmem:[#allocation2 + $0xa8] sm:$0xff]
      %v2455 = vld [vmem:[#allocation2 + $0xb0] sm:$0xff]
      %v2456 = vld [vmem:[#allocation2 + $0xb8] sm:$0x3]
      %v2457 = vld [vmem:[#allocation2 + $0xc0] sm:$0xff]
      %v2458 = vld [vmem:[#allocation2 + $0xc8] sm:$0xff]
      %v2459 = vld [vmem:[#allocation2 + $0xd0] sm:$0x3]
      %v2460 = vld [vmem:[#allocation2 + $0xd8] sm:$0xff]
      %v2461 = vld [vmem:[#allocation2 + $0xe0] sm:$0xff]
      %v2462 = vld [vmem:[#allocation2 + $0xe8] sm:$0x3]
      %v2463 = vld [vmem:[#allocation2 + $0xf0] sm:$0xff]
      %v2464 = vld [vmem:[#allocation2 + $0xf8] sm:$0xff]
      %v2465 = vld [vmem:[#allocation2 + $0x100] sm:$0x3]
      %v2466 = vld [vmem:[#allocation2 + $0x108] sm:$0xff]
      %v2467 = vld [vmem:[#allocation2 + $0x110] sm:$0xff]
      %v2468 = vld [vmem:[#allocation2 + $0x118] sm:$0x3]
      %v2469 = vld [vmem:[#allocation2 + $0x120] sm:$0xff]
      %v2470 = vld [vmem:[#allocation2 + $0x128] sm:$0xff]
      %v2471 = vld [vmem:[#allocation2 + $0x130] sm:$0x3]
      %v2472 = vld [vmem:[#allocation2 + $0x138] sm:$0xff]
      %v2473 = vld [vmem:[#allocation2 + $0x140] sm:$0xff]
      %v2474 = vld [vmem:[#allocation2 + $0x148] sm:$0x3]
      %v2475 = vld [vmem:[#allocation2 + $0x150] sm:$0xff]
      %v2476 = vld [vmem:[#allocation2 + $0x158] sm:$0xff]
      %v2477 = vld [vmem:[#allocation2 + $0x160] sm:$0x3]
      %v2478 = vld [vmem:[#allocation2 + $0x168] sm:$0xff]
      %v2479 = vld [vmem:[#allocation2 + $0x170] sm:$0xff]
      %v2480 = vld [vmem:[#allocation2 + $0x178] sm:$0x3]
      %v2481 = vld [vmem:[#allocation2 + $0x180] sm:$0xff]
      %v2482 = vld [vmem:[#allocation2 + $0x188] sm:$0xff]
      %v2483 = vld [vmem:[#allocation2 + $0x190] sm:$0x3]
      %v2484 = vld [vmem:[#allocation2 + $0x198] sm:$0xff]
      %v2485 = vld [vmem:[#allocation2 + $0x1a0] sm:$0xff]
      %v2486 = vld [vmem:[#allocation2 + $0x1a8] sm:$0x3]
      %vm2535 = vcmask 1046528
      %v2536 = vrot.slane %v2433, 1
      %v2537 = vrot.slane %v2434, 1
      %v2538 = vsel %vm2535, %v2536, %v2537
      %v2539 = vrot.slane %v2435, 1
      %v2540 = vsel %vm2535, %v2537, %v2539
      %v2541 = vrot.slane %v2436, 1
      %v2542 = vrot.slane %v2437, 1
      %v2543 = vsel %vm2535, %v2541, %v2542
      %v2544 = vrot.slane %v2438, 1
      %v2545 = vsel %vm2535, %v2542, %v2544
      %v2546 = vrot.slane %v2439, 1
      %v2547 = vrot.slane %v2440, 1
      %v2548 = vsel %vm2535, %v2546, %v2547
      %v2549 = vrot.slane %v2441, 1
      %v2550 = vsel %vm2535, %v2547, %v2549
      %v2551 = vrot.slane %v2442, 1
      %v2552 = vrot.slane %v2443, 1
      %v2553 = vsel %vm2535, %v2551, %v2552
      %v2554 = vrot.slane %v2444, 1
      %v2555 = vsel %vm2535, %v2552, %v2554
      %v2556 = vrot.slane %v2445, 1
      %v2557 = vrot.slane %v2446, 1
      %v2558 = vsel %vm2535, %v2556, %v2557
      %v2559 = vrot.slane %v2447, 1
      %v2560 = vsel %vm2535, %v2557, %v2559
      %v2561 = vrot.slane %v2448, 1
      %v2562 = vrot.slane %v2449, 1
      %v2563 = vsel %vm2535, %v2561, %v2562
      %v2564 = vrot.slane %v2450, 1
      %v2565 = vsel %vm2535, %v2562, %v2564
      %v2566 = vrot.slane %v2451, 1
      %v2567 = vrot.slane %v2452, 1
      %v2568 = vsel %vm2535, %v2566, %v2567
      %v2569 = vrot.slane %v2453, 1
      %v2570 = vsel %vm2535, %v2567, %v2569
      %v2571 = vrot.slane %v2454, 1
      %v2572 = vrot.slane %v2455, 1
      %v2573 = vsel %vm2535, %v2571, %v2572
      %v2574 = vrot.slane %v2456, 1
      %v2575 = vsel %vm2535, %v2572, %v2574
      %v2576 = vrot.slane %v2457, 1
      %v2577 = vrot.slane %v2458, 1
      %v2578 = vsel %vm2535, %v2576, %v2577
      %v2579 = vrot.slane %v2459, 1
      %v2580 = vsel %vm2535, %v2577, %v2579
      %v2581 = vrot.slane %v2460, 1
      %v2582 = vrot.slane %v2461, 1
      %v2583 = vsel %vm2535, %v2581, %v2582
      %v2584 = vrot.slane %v2462, 1
      %v2585 = vsel %vm2535, %v2582, %v2584
      %v2586 = vrot.slane %v2463, 1
      %v2587 = vrot.slane %v2464, 1
      %v2588 = vsel %vm2535, %v2586, %v2587
      %v2589 = vrot.slane %v2465, 1
      %v2590 = vsel %vm2535, %v2587, %v2589
      %v2591 = vrot.slane %v2466, 1
      %v2592 = vrot.slane %v2467, 1
      %v2593 = vsel %vm2535, %v2591, %v2592
      %v2594 = vrot.slane %v2468, 1
      %v2595 = vsel %vm2535, %v2592, %v2594
      %v2596 = vrot.slane %v2469, 1
      %v2597 = vrot.slane %v2470, 1
      %v2598 = vsel %vm2535, %v2596, %v2597
      %v2599 = vrot.slane %v2471, 1
      %v2600 = vsel %vm2535, %v2597, %v2599
      %v2601 = vrot.slane %v2472, 1
      %v2602 = vrot.slane %v2473, 1
      %v2603 = vsel %vm2535, %v2601, %v2602
      %v2604 = vrot.slane %v2474, 1
      %v2605 = vsel %vm2535, %v2602, %v2604
      %v2606 = vrot.slane %v2475, 1
      %v2607 = vrot.slane %v2476, 1
      %v2608 = vsel %vm2535, %v2606, %v2607
      %v2609 = vrot.slane %v2477, 1
      %v2610 = vsel %vm2535, %v2607, %v2609
      %v2611 = vrot.slane %v2478, 1
      %v2612 = vrot.slane %v2479, 1
      %v2613 = vsel %vm2535, %v2611, %v2612
      %v2614 = vrot.slane %v2480, 1
      %v2615 = vsel %vm2535, %v2612, %v2614
      %v2648 = vmax.f32 %v2433, %v2538
      %v2649 = vmax.f32 %v2434, %v2540
      %v2650 = vmax.f32 %v2436, %v2543
      %v2651 = vmax.f32 %v2437, %v2545
      %v2652 = vmax.f32 %v2439, %v2548
      %v2653 = vmax.f32 %v2440, %v2550
      %v2654 = vmax.f32 %v2442, %v2553
      %v2655 = vmax.f32 %v2443, %v2555
      %v2656 = vmax.f32 %v2445, %v2558
      %v2657 = vmax.f32 %v2446, %v2560
      %v2658 = vmax.f32 %v2448, %v2563
      %v2659 = vmax.f32 %v2449, %v2565
      %v2660 = vmax.f32 %v2451, %v2568
      %v2661 = vmax.f32 %v2452, %v2570
      %v2662 = vmax.f32 %v2454, %v2573
      %v2663 = vmax.f32 %v2455, %v2575
      %v2664 = vmax.f32 %v2457, %v2578
      %v2665 = vmax.f32 %v2458, %v2580
      %v2666 = vmax.f32 %v2460, %v2583
      %v2667 = vmax.f32 %v2461, %v2585
      %v2668 = vmax.f32 %v2463, %v2588
      %v2669 = vmax.f32 %v2464, %v2590
      %v2670 = vmax.f32 %v2466, %v2593
      %v2671 = vmax.f32 %v2467, %v2595
      %v2672 = vmax.f32 %v2469, %v2598
      %v2673 = vmax.f32 %v2470, %v2600
      %v2674 = vmax.f32 %v2472, %v2603
      %v2675 = vmax.f32 %v2473, %v2605
      %v2676 = vmax.f32 %v2475, %v2608
      %v2677 = vmax.f32 %v2476, %v2610
      %v2678 = vmax.f32 %v2478, %v2613
      %v2679 = vmax.f32 %v2479, %v2615
      %vm2680 = vcmask 1045504
      %v2681 = vrot.slane %v2433, 2
      %v2682 = vrot.slane %v2434, 2
      %v2683 = vsel %vm2680, %v2681, %v2682
      %v2684 = vrot.slane %v2435, 2
      %v2685 = vsel %vm2680, %v2682, %v2684
      %v2686 = vrot.slane %v2436, 2
      %v2687 = vrot.slane %v2437, 2
      %v2688 = vsel %vm2680, %v2686, %v2687
      %v2689 = vrot.slane %v2438, 2
      %v2690 = vsel %vm2680, %v2687, %v2689
      %v2691 = vrot.slane %v2439, 2
      %v2692 = vrot.slane %v2440, 2
      %v2693 = vsel %vm2680, %v2691, %v2692
      %v2694 = vrot.slane %v2441, 2
      %v2695 = vsel %vm2680, %v2692, %v2694
      %v2696 = vrot.slane %v2442, 2
      %v2697 = vrot.slane %v2443, 2
      %v2698 = vsel %vm2680, %v2696, %v2697
      %v2699 = vrot.slane %v2444, 2
      %v2700 = vsel %vm2680, %v2697, %v2699
      %v2701 = vrot.slane %v2445, 2
      %v2702 = vrot.slane %v2446, 2
      %v2703 = vsel %vm2680, %v2701, %v2702
      %v2704 = vrot.slane %v2447, 2
      %v2705 = vsel %vm2680, %v2702, %v2704
      %v2706 = vrot.slane %v2448, 2
      %v2707 = vrot.slane %v2449, 2
      %v2708 = vsel %vm2680, %v2706, %v2707
      %v2709 = vrot.slane %v2450, 2
      %v2710 = vsel %vm2680, %v2707, %v2709
      %v2711 = vrot.slane %v2451, 2
      %v2712 = vrot.slane %v2452, 2
      %v2713 = vsel %vm2680, %v2711, %v2712
      %v2714 = vrot.slane %v2453, 2
      %v2715 = vsel %vm2680, %v2712, %v2714
      %v2716 = vrot.slane %v2454, 2
      %v2717 = vrot.slane %v2455, 2
      %v2718 = vsel %vm2680, %v2716, %v2717
      %v2719 = vrot.slane %v2456, 2
      %v2720 = vsel %vm2680, %v2717, %v2719
      %v2721 = vrot.slane %v2457, 2
      %v2722 = vrot.slane %v2458, 2
      %v2723 = vsel %vm2680, %v2721, %v2722
      %v2724 = vrot.slane %v2459, 2
      %v2725 = vsel %vm2680, %v2722, %v2724
      %v2726 = vrot.slane %v2460, 2
      %v2727 = vrot.slane %v2461, 2
      %v2728 = vsel %vm2680, %v2726, %v2727
      %v2729 = vrot.slane %v2462, 2
      %v2730 = vsel %vm2680, %v2727, %v2729
      %v2731 = vrot.slane %v2463, 2
      %v2732 = vrot.slane %v2464, 2
      %v2733 = vsel %vm2680, %v2731, %v2732
      %v2734 = vrot.slane %v2465, 2
      %v2735 = vsel %vm2680, %v2732, %v2734
      %v2736 = vrot.slane %v2466, 2
      %v2737 = vrot.slane %v2467, 2
      %v2738 = vsel %vm2680, %v2736, %v2737
      %v2739 = vrot.slane %v2468, 2
      %v2740 = vsel %vm2680, %v2737, %v2739
      %v2741 = vrot.slane %v2469, 2
      %v2742 = vrot.slane %v2470, 2
      %v2743 = vsel %vm2680, %v2741, %v2742
      %v2744 = vrot.slane %v2471, 2
      %v2745 = vsel %vm2680, %v2742, %v2744
      %v2746 = vrot.slane %v2472, 2
      %v2747 = vrot.slane %v2473, 2
      %v2748 = vsel %vm2680, %v2746, %v2747
      %v2749 = vrot.slane %v2474, 2
      %v2750 = vsel %vm2680, %v2747, %v2749
      %v2751 = vrot.slane %v2475, 2
      %v2752 = vrot.slane %v2476, 2
      %v2753 = vsel %vm2680, %v2751, %v2752
      %v2754 = vrot.slane %v2477, 2
      %v2755 = vsel %vm2680, %v2752, %v2754
      %v2756 = vrot.slane %v2478, 2
      %v2757 = vrot.slane %v2479, 2
      %v2758 = vsel %vm2680, %v2756, %v2757
      %v2759 = vrot.slane %v2480, 2
      %v2760 = vsel %vm2680, %v2757, %v2759
      %v2793 = vmax.f32 %v2648, %v2683
      %v2794 = vmax.f32 %v2649, %v2685
      %v2795 = vmax.f32 %v2650, %v2688
      %v2796 = vmax.f32 %v2651, %v2690
      %v2797 = vmax.f32 %v2652, %v2693
      %v2798 = vmax.f32 %v2653, %v2695
      %v2799 = vmax.f32 %v2654, %v2698
      %v2800 = vmax.f32 %v2655, %v2700
      %v2801 = vmax.f32 %v2656, %v2703
      %v2802 = vmax.f32 %v2657, %v2705
      %v2803 = vmax.f32 %v2658, %v2708
      %v2804 = vmax.f32 %v2659, %v2710
      %v2805 = vmax.f32 %v2660, %v2713
      %v2806 = vmax.f32 %v2661, %v2715
      %v2807 = vmax.f32 %v2662, %v2718
      %v2808 = vmax.f32 %v2663, %v2720
      %v2809 = vmax.f32 %v2664, %v2723
      %v2810 = vmax.f32 %v2665, %v2725
      %v2811 = vmax.f32 %v2666, %v2728
      %v2812 = vmax.f32 %v2667, %v2730
      %v2813 = vmax.f32 %v2668, %v2733
      %v2814 = vmax.f32 %v2669, %v2735
      %v2815 = vmax.f32 %v2670, %v2738
      %v2816 = vmax.f32 %v2671, %v2740
      %v2817 = vmax.f32 %v2672, %v2743
      %v2818 = vmax.f32 %v2673, %v2745
      %v2819 = vmax.f32 %v2674, %v2748
      %v2820 = vmax.f32 %v2675, %v2750
      %v2821 = vmax.f32 %v2676, %v2753
      %v2822 = vmax.f32 %v2677, %v2755
      %v2823 = vmax.f32 %v2678, %v2758
      %v2824 = vmax.f32 %v2679, %v2760
      %v2825 = vmax.f32 %v2793, %v2436
      %v2826 = vmax.f32 %v2794, %v2437
      %v2827 = vmax.f32 %v2795, %v2439
      %v2828 = vmax.f32 %v2796, %v2440
      %v2829 = vmax.f32 %v2797, %v2442
      %v2830 = vmax.f32 %v2798, %v2443
      %v2831 = vmax.f32 %v2799, %v2445
      %v2832 = vmax.f32 %v2800, %v2446
      %v2833 = vmax.f32 %v2801, %v2448
      %v2834 = vmax.f32 %v2802, %v2449
      %v2835 = vmax.f32 %v2803, %v2451
      %v2836 = vmax.f32 %v2804, %v2452
      %v2837 = vmax.f32 %v2805, %v2454
      %v2838 = vmax.f32 %v2806, %v2455
      %v2839 = vmax.f32 %v2807, %v2457
      %v2840 = vmax.f32 %v2808, %v2458
      %v2841 = vmax.f32 %v2809, %v2460
      %v2842 = vmax.f32 %v2810, %v2461
      %v2843 = vmax.f32 %v2811, %v2463
      %v2844 = vmax.f32 %v2812, %v2464
      %v2845 = vmax.f32 %v2813, %v2466
      %v2846 = vmax.f32 %v2814, %v2467
      %v2847 = vmax.f32 %v2815, %v2469
      %v2848 = vmax.f32 %v2816, %v2470
      %v2849 = vmax.f32 %v2817, %v2472
      %v2850 = vmax.f32 %v2818, %v2473
      %v2851 = vmax.f32 %v2819, %v2475
      %v2852 = vmax.f32 %v2820, %v2476
      %v2853 = vmax.f32 %v2821, %v2478
      %v2854 = vmax.f32 %v2822, %v2479
      %v2855 = vmax.f32 %v2823, %v2481
      %v2856 = vmax.f32 %v2824, %v2482
      %v2860 = vrot.slane %v2481, 1
      %v2861 = vrot.slane %v2482, 1
      %v2862 = vsel %vm2535, %v2860, %v2861
      %v2863 = vrot.slane %v2483, 1
      %v2864 = vsel %vm2535, %v2861, %v2863
      %v2867 = vmax.f32 %v2825, %v2543
      %v2868 = vmax.f32 %v2826, %v2545
      %v2869 = vmax.f32 %v2827, %v2548
      %v2870 = vmax.f32 %v2828, %v2550
      %v2871 = vmax.f32 %v2829, %v2553
      %v2872 = vmax.f32 %v2830, %v2555
      %v2873 = vmax.f32 %v2831, %v2558
      %v2874 = vmax.f32 %v2832, %v2560
      %v2875 = vmax.f32 %v2833, %v2563
      %v2876 = vmax.f32 %v2834, %v2565
      %v2877 = vmax.f32 %v2835, %v2568
      %v2878 = vmax.f32 %v2836, %v2570
      %v2879 = vmax.f32 %v2837, %v2573
      %v2880 = vmax.f32 %v2838, %v2575
      %v2881 = vmax.f32 %v2839, %v2578
      %v2882 = vmax.f32 %v2840, %v2580
      %v2883 = vmax.f32 %v2841, %v2583
      %v2884 = vmax.f32 %v2842, %v2585
      %v2885 = vmax.f32 %v2843, %v2588
      %v2886 = vmax.f32 %v2844, %v2590
      %v2887 = vmax.f32 %v2845, %v2593
      %v2888 = vmax.f32 %v2846, %v2595
      %v2889 = vmax.f32 %v2847, %v2598
      %v2890 = vmax.f32 %v2848, %v2600
      %v2891 = vmax.f32 %v2849, %v2603
      %v2892 = vmax.f32 %v2850, %v2605
      %v2893 = vmax.f32 %v2851, %v2608
      %v2894 = vmax.f32 %v2852, %v2610
      %v2895 = vmax.f32 %v2853, %v2613
      %v2896 = vmax.f32 %v2854, %v2615
      %v2897 = vmax.f32 %v2855, %v2862
      %v2898 = vmax.f32 %v2856, %v2864
      %v2899 = vrot.slane %v2481, 2
      %v2900 = vrot.slane %v2482, 2
      %v2901 = vsel %vm2680, %v2899, %v2900
      %v2902 = vrot.slane %v2483, 2
      %v2903 = vsel %vm2680, %v2900, %v2902
      %v2906 = vmax.f32 %v2867, %v2688
      %v2907 = vmax.f32 %v2868, %v2690
      %v2908 = vmax.f32 %v2869, %v2693
      %v2909 = vmax.f32 %v2870, %v2695
      %v2910 = vmax.f32 %v2871, %v2698
      %v2911 = vmax.f32 %v2872, %v2700
      %v2912 = vmax.f32 %v2873, %v2703
      %v2913 = vmax.f32 %v2874, %v2705
      %v2914 = vmax.f32 %v2875, %v2708
      %v2915 = vmax.f32 %v2876, %v2710
      %v2916 = vmax.f32 %v2877, %v2713
      %v2917 = vmax.f32 %v2878, %v2715
      %v2918 = vmax.f32 %v2879, %v2718
      %v2919 = vmax.f32 %v2880, %v2720
      %v2920 = vmax.f32 %v2881, %v2723
      %v2921 = vmax.f32 %v2882, %v2725
      %v2922 = vmax.f32 %v2883, %v2728
      %v2923 = vmax.f32 %v2884, %v2730
      %v2924 = vmax.f32 %v2885, %v2733
      %v2925 = vmax.f32 %v2886, %v2735
      %v2926 = vmax.f32 %v2887, %v2738
      %v2927 = vmax.f32 %v2888, %v2740
      %v2928 = vmax.f32 %v2889, %v2743
      %v2929 = vmax.f32 %v2890, %v2745
      %v2930 = vmax.f32 %v2891, %v2748
      %v2931 = vmax.f32 %v2892, %v2750
      %v2932 = vmax.f32 %v2893, %v2753
      %v2933 = vmax.f32 %v2894, %v2755
      %v2934 = vmax.f32 %v2895, %v2758
      %v2935 = vmax.f32 %v2896, %v2760
      %v2936 = vmax.f32 %v2897, %v2901
      %v2937 = vmax.f32 %v2898, %v2903
      %v2938 = vmax.f32 %v2906, %v2439
      %v2939 = vmax.f32 %v2907, %v2440
      %v2940 = vmax.f32 %v2908, %v2442
      %v2941 = vmax.f32 %v2909, %v2443
      %v2942 = vmax.f32 %v2910, %v2445
      %v2943 = vmax.f32 %v2911, %v2446
      %v2944 = vmax.f32 %v2912, %v2448
      %v2945 = vmax.f32 %v2913, %v2449
      %v2946 = vmax.f32 %v2914, %v2451
      %v2947 = vmax.f32 %v2915, %v2452
      %v2948 = vmax.f32 %v2916, %v2454
      %v2949 = vmax.f32 %v2917, %v2455
      %v2950 = vmax.f32 %v2918, %v2457
      %v2951 = vmax.f32 %v2919, %v2458
      %v2952 = vmax.f32 %v2920, %v2460
      %v2953 = vmax.f32 %v2921, %v2461
      %v2954 = vmax.f32 %v2922, %v2463
      %v2955 = vmax.f32 %v2923, %v2464
      %v2956 = vmax.f32 %v2924, %v2466
      %v2957 = vmax.f32 %v2925, %v2467
      %v2958 = vmax.f32 %v2926, %v2469
      %v2959 = vmax.f32 %v2927, %v2470
      %v2960 = vmax.f32 %v2928, %v2472
      %v2961 = vmax.f32 %v2929, %v2473
      %v2962 = vmax.f32 %v2930, %v2475
      %v2963 = vmax.f32 %v2931, %v2476
      %v2964 = vmax.f32 %v2932, %v2478
      %v2965 = vmax.f32 %v2933, %v2479
      %v2966 = vmax.f32 %v2934, %v2481
      %v2967 = vmax.f32 %v2935, %v2482
      %v2968 = vmax.f32 %v2936, %v2484
      %v2969 = vmax.f32 %v2937, %v2485
      %v2973 = vrot.slane %v2484, 1
      %v2974 = vrot.slane %v2485, 1
      %v2975 = vsel %vm2535, %v2973, %v2974
      %v2976 = vrot.slane %v2486, 1
      %v2977 = vsel %vm2535, %v2974, %v2976
      %v2980 = vmax.f32 %v2938, %v2548
      %v2981 = vmax.f32 %v2939, %v2550
      %v2982 = vmax.f32 %v2940, %v2553
      %v2983 = vmax.f32 %v2941, %v2555
      %v2984 = vmax.f32 %v2942, %v2558
      %v2985 = vmax.f32 %v2943, %v2560
      %v2986 = vmax.f32 %v2944, %v2563
      %v2987 = vmax.f32 %v2945, %v2565
      %v2988 = vmax.f32 %v2946, %v2568
      %v2989 = vmax.f32 %v2947, %v2570
      %v2990 = vmax.f32 %v2948, %v2573
      %v2991 = vmax.f32 %v2949, %v2575
      %v2992 = vmax.f32 %v2950, %v2578
      %v2993 = vmax.f32 %v2951, %v2580
      %v2994 = vmax.f32 %v2952, %v2583
      %v2995 = vmax.f32 %v2953, %v2585
      %v2996 = vmax.f32 %v2954, %v2588
      %v2997 = vmax.f32 %v2955, %v2590
      %v2998 = vmax.f32 %v2956, %v2593
      %v2999 = vmax.f32 %v2957, %v2595
      %v3000 = vmax.f32 %v2958, %v2598
      %v3001 = vmax.f32 %v2959, %v2600
      %v3002 = vmax.f32 %v2960, %v2603
      %v3003 = vmax.f32 %v2961, %v2605
      %v3004 = vmax.f32 %v2962, %v2608
      %v3005 = vmax.f32 %v2963, %v2610
      %v3006 = vmax.f32 %v2964, %v2613
      %v3007 = vmax.f32 %v2965, %v2615
      %v3008 = vmax.f32 %v2966, %v2862
      %v3009 = vmax.f32 %v2967, %v2864
      %v3010 = vmax.f32 %v2968, %v2975
      %v3011 = vmax.f32 %v2969, %v2977
      %v3012 = vrot.slane %v2484, 2
      %v3013 = vrot.slane %v2485, 2
      %v3014 = vsel %vm2680, %v3012, %v3013
      %v3015 = vrot.slane %v2486, 2
      %v3016 = vsel %vm2680, %v3013, %v3015
      %v3019 = vmax.f32 %v2980, %v2693
      %v3020 = vmax.f32 %v2981, %v2695
      %v3021 = vmax.f32 %v2982, %v2698
      %v3022 = vmax.f32 %v2983, %v2700
      %v3023 = vmax.f32 %v2984, %v2703
      %v3024 = vmax.f32 %v2985, %v2705
      %v3025 = vmax.f32 %v2986, %v2708
      %v3026 = vmax.f32 %v2987, %v2710
      %v3027 = vmax.f32 %v2988, %v2713
      %v3028 = vmax.f32 %v2989, %v2715
      %v3029 = vmax.f32 %v2990, %v2718
      %v3030 = vmax.f32 %v2991, %v2720
      %v3031 = vmax.f32 %v2992, %v2723
      %v3032 = vmax.f32 %v2993, %v2725
      %v3033 = vmax.f32 %v2994, %v2728
      %v3034 = vmax.f32 %v2995, %v2730
      %v3035 = vmax.f32 %v2996, %v2733
      %v3036 = vmax.f32 %v2997, %v2735
      %v3037 = vmax.f32 %v2998, %v2738
      %v3038 = vmax.f32 %v2999, %v2740
      %v3039 = vmax.f32 %v3000, %v2743
      %v3040 = vmax.f32 %v3001, %v2745
      %v3041 = vmax.f32 %v3002, %v2748
      %v3042 = vmax.f32 %v3003, %v2750
      %v3043 = vmax.f32 %v3004, %v2753
      %v3044 = vmax.f32 %v3005, %v2755
      %v3045 = vmax.f32 %v3006, %v2758
      %v3046 = vmax.f32 %v3007, %v2760
      %v3047 = vmax.f32 %v3008, %v2901
      %v3048 = vmax.f32 %v3009, %v2903
      %v3049 = vmax.f32 %v3010, %v3014
      %v3050 = vmax.f32 %v3011, %v3016
      %3051 = vst [vmem:[%s235] sm:$0xff] %v3019
      %3052 = vst [vmem:[%s235 + $0x8] sm:$0xff] %v3020
      %3053 = vst [vmem:[%s235 + $0x10] sm:$0xff] %v3021
      %3054 = vst [vmem:[%s235 + $0x18] sm:$0xff] %v3022
      %3055 = vst [vmem:[%s235 + $0x20] sm:$0xff] %v3023
      %3056 = vst [vmem:[%s235 + $0x28] sm:$0xff] %v3024
      %3057 = vst [vmem:[%s235 + $0x30] sm:$0xff] %v3025
      %3058 = vst [vmem:[%s235 + $0x38] sm:$0xff] %v3026
      %3059 = vst [vmem:[%s235 + $0x40] sm:$0xff] %v3027
      %3060 = vst [vmem:[%s235 + $0x48] sm:$0xff] %v3028
      %3061 = vst [vmem:[%s235 + $0x50] sm:$0xff] %v3029
      %3062 = vst [vmem:[%s235 + $0x58] sm:$0xff] %v3030
      %3063 = vst [vmem:[%s235 + $0x60] sm:$0xff] %v3031
      %3064 = vst [vmem:[%s235 + $0x68] sm:$0xff] %v3032
      %3065 = vst [vmem:[%s235 + $0x70] sm:$0xff] %v3033
      %3066 = vst [vmem:[%s235 + $0x78] sm:$0xff] %v3034
      %3067 = vst [vmem:[%s235 + $0x80] sm:$0xff] %v3035
      %3068 = vst [vmem:[%s235 + $0x88] sm:$0xff] %v3036
      %3069 = vst [vmem:[%s235 + $0x90] sm:$0xff] %v3037
      %3070 = vst [vmem:[%s235 + $0x98] sm:$0xff] %v3038
      %3071 = vst [vmem:[%s235 + $0xa0] sm:$0xff] %v3039
      %3072 = vst [vmem:[%s235 + $0xa8] sm:$0xff] %v3040
      %3073 = vst [vmem:[%s235 + $0xb0] sm:$0xff] %v3041
      %3074 = vst [vmem:[%s235 + $0xb8] sm:$0xff] %v3042
      %3075 = vst [vmem:[%s235 + $0xc0] sm:$0xff] %v3043
      %3076 = vst [vmem:[%s235 + $0xc8] sm:$0xff] %v3044
      %3077 = vst [vmem:[%s235 + $0xd0] sm:$0xff] %v3045
      %3078 = vst [vmem:[%s235 + $0xd8] sm:$0xff] %v3046
      %3079 = vst [vmem:[%s235 + $0xe0] sm:$0xff] %v3047
      %3080 = vst [vmem:[%s235 + $0xe8] sm:$0xff] %v3048
      %3081 = vst [vmem:[%s235 + $0xf0] sm:$0xff] %v3049
      %3082 = vst [vmem:[%s235 + $0xf8] sm:$0xff] %v3050
      %v3083 = vadd.f32 %v3019, %v3020
      %v3084 = vadd.f32 %v3083, %v3021
      %v3085 = vadd.f32 %v3084, %v3022
      %v3086 = vadd.f32 %v3085, %v3023
      %v3087 = vadd.f32 %v3086, %v3024
      %v3088 = vadd.f32 %v3087, %v3025
      %v3089 = vadd.f32 %v3088, %v3026
      %v3090 = vadd.f32 %v3089, %v3027
      %v3091 = vadd.f32 %v3090, %v3028
      %v3092 = vadd.f32 %v3091, %v3029
      %v3093 = vadd.f32 %v3092, %v3030
      %v3094 = vadd.f32 %v3093, %v3031
      %v3095 = vadd.f32 %v3094, %v3032
      %v3096 = vadd.f32 %v3095, %v3033
      %v3097 = vadd.f32 %v3096, %v3034
      %v3098 = vadd.f32 %v3097, %v3035
      %v3099 = vadd.f32 %v3098, %v3036
      %v3100 = vadd.f32 %v3099, %v3037
      %v3101 = vadd.f32 %v3100, %v3038
      %v3102 = vadd.f32 %v3101, %v3039
      %v3103 = vadd.f32 %v3102, %v3040
      %v3104 = vadd.f32 %v3103, %v3041
      %v3105 = vadd.f32 %v3104, %v3042
      %v3106 = vadd.f32 %v3105, %v3043
      %v3107 = vadd.f32 %v3106, %v3044
      %v3108 = vadd.f32 %v3107, %v3045
      %v3109 = vadd.f32 %v3108, %v3046
      %v3110 = vadd.f32 %v3109, %v3047
      %v3111 = vadd.f32 %v3110, %v3048
      %v3112 = vadd.f32 %v3111, %v3049
      %v3113 = vadd.f32 %v3112, %v3050
      %v3114 = vrot.slane %v3113, 4
      %v3115 = vadd.f32 %v3113, %v3114
      %v3116 = vrot.slane %v3115, 2
      %v3117 = vadd.f32 %v3115, %v3116
      %v3118 = vrot.slane %v3117, 1
      %v3119 = vadd.f32 %v3117, %v3118
      %3120 = vst [vmem:[%s238] sm:$0x1] %v3119
      %v3121 = vmul.f32 %v3019, %v3019
      %v3122 = vmul.f32 %v3020, %v3020
      %v3123 = vmul.f32 %v3021, %v3021
      %v3124 = vmul.f32 %v3022, %v3022
      %v3125 = vmul.f32 %v3023, %v3023
      %v3126 = vmul.f32 %v3024, %v3024
      %v3127 = vmul.f32 %v3025, %v3025
      %v3128 = vmul.f32 %v3026, %v3026
      %v3129 = vmul.f32 %v3027, %v3027
      %v3130 = vmul.f32 %v3028, %v3028
      %v3131 = vmul.f32 %v3029, %v3029
      %v3132 = vmul.f32 %v3030, %v3030
      %v3133 = vmul.f32 %v3031, %v3031
      %v3134 = vmul.f32 %v3032, %v3032
      %v3135 = vmul.f32 %v3033, %v3033
      %v3136 = vmul.f32 %v3034, %v3034
      %v3137 = vmul.f32 %v3035, %v3035
      %v3138 = vmul.f32 %v3036, %v3036
      %v3139 = vmul.f32 %v3037, %v3037
      %v3140 = vmul.f32 %v3038, %v3038
      %v3141 = vmul.f32 %v3039, %v3039
      %v3142 = vmul.f32 %v3040, %v3040
      %v3143 = vmul.f32 %v3041, %v3041
      %v3144 = vmul.f32 %v3042, %v3042
      %v3145 = vmul.f32 %v3043, %v3043
      %v3146 = vmul.f32 %v3044, %v3044
      %v3147 = vmul.f32 %v3045, %v3045
      %v3148 = vmul.f32 %v3046, %v3046
      %v3149 = vmul.f32 %v3047, %v3047
      %v3150 = vmul.f32 %v3048, %v3048
      %v3151 = vmul.f32 %v3049, %v3049
      %v3152 = vmul.f32 %v3050, %v3050
      %v3153 = vadd.f32 %v3121, %v3122
      %v3154 = vadd.f32 %v3153, %v3123
      %v3155 = vadd.f32 %v3154, %v3124
      %v3156 = vadd.f32 %v3155, %v3125
      %v3157 = vadd.f32 %v3156, %v3126
      %v3158 = vadd.f32 %v3157, %v3127
      %v3159 = vadd.f32 %v3158, %v3128
      %v3160 = vadd.f32 %v3159, %v3129
      %v3161 = vadd.f32 %v3160, %v3130
      %v3162 = vadd.f32 %v3161, %v3131
      %v3163 = vadd.f32 %v3162, %v3132
      %v3164 = vadd.f32 %v3163, %v3133
      %v3165 = vadd.f32 %v3164, %v3134
      %v3166 = vadd.f32 %v3165, %v3135
      %v3167 = vadd.f32 %v3166, %v3136
      %v3168 = vadd.f32 %v3167, %v3137
      %v3169 = vadd.f32 %v3168, %v3138
      %v3170 = vadd.f32 %v3169, %v3139
      %v3171 = vadd.f32 %v3170, %v3140
      %v3172 = vadd.f32 %v3171, %v3141
      %v3173 = vadd.f32 %v3172, %v3142
      %v3174 = vadd.f32 %v3173, %v3143
      %v3175 = vadd.f32 %v3174, %v3144
      %v3176 = vadd.f32 %v3175, %v3145
      %v3177 = vadd.f32 %v3176, %v3146
      %v3178 = vadd.f32 %v3177, %v3147
      %v3179 = vadd.f32 %v3178, %v3148
      %v3180 = vadd.f32 %v3179, %v3149
      %v3181 = vadd.f32 %v3180, %v3150
      %v3182 = vadd.f32 %v3181, %v3151
      %v3183 = vadd.f32 %v3182, %v3152
      %v3184 = vrot.slane %v3183, 4
      %v3185 = vadd.f32 %v3183, %v3184
      %v3186 = vrot.slane %v3185, 2
      %v3187 = vadd.f32 %v3185, %v3186
      %v3188 = vrot.slane %v3187, 1
      %v3189 = vadd.f32 %v3187, %v3188
      %3190 = vst [vmem:[%s241] sm:$0x1] %v3189
      %p3191 = scmp.lt.s32.totalorder %s17, 1
      %s3192 = scalar_select %p3191, %s17, 1
      %s3193 = smul.addr %s3192, 32
      %s3194 = smul.addr %s3193, 8
      %s3195 = scalar_lea.vmem %s3, %s3194
      %p3196 = scmp.lt.s32.totalorder %s17, 1
      %s3197 = scalar_select %p3196, %s17, 1
      %s3198 = scalar_lea.vmem %s4, %s3197
      %p3199 = scmp.lt.s32.totalorder %s17, 1
      %s3200 = scalar_select %p3199, %s17, 1
      %s3201 = scalar_lea.vmem %s5, %s3200
      // Predicated region
      $region33: #{conv2d_block.2} parent=31 // pred_check
        %p3202 = pneg %p103
      $region34: #{conv2d_block.2} parent=31 // pred_check_branch
        %3204 = sbr.rel (%p3202) target = $region36
      $region35: #{conv2d_block.2} parent=31 // pred_region
        _
      $region36: #{conv2d_block.2} parent=31 // pred_fallthru
        _
      // Predicated region
      $region37: #{conv2d_block.2} parent=31 // pred_check
        %p3205 = pneg %p129
      $region38: #{conv2d_block.2} parent=31 // pred_check_branch
        %3207 = sbr.rel (%p3205) target = $region40
      $region39: #{conv2d_block.2} parent=31 // pred_region
        _
      $region40: #{conv2d_block.2} parent=31 // pred_fallthru
        _
      // Predicated region
      $region41: #{conv2d_block.2} parent=31 // pred_check
        %p3208 = pneg %p155
      $region42: #{conv2d_block.2} parent=31 // pred_check_branch
        %3210 = sbr.rel (%p3208) target = $region44
      $region43: #{conv2d_block.2} parent=31 // pred_region
        _
      $region44: #{conv2d_block.2} parent=31 // pred_fallthru
        _
    $region32: #{conv2d_block.2} parent=5 // pred_fallthru
      _
    %p3211 = scmp.le.s32.totalorder 2, %s12
    // Predicated region
    $region45: #{conv2d_block.2} parent=5 // pred_check
      %p3212 = pneg %p3211
    $region46: #{conv2d_block.2} parent=5 // pred_check_branch
      %3214 = sbr.rel (%p3212) target = $region48
    $region47: #{conv2d_block.2} parent=5 // pred_region
      %s3215 = ssub.s32 %s12, 2
      // Predicated region
      $region49: #{conv2d_block.2} parent=47 // pred_check
        %p3216 = pneg %p109
      $region50: #{conv2d_block.2} parent=47 // pred_check_branch
        %3218 = sbr.rel (%p3216) target = $region52
      $region51: #{conv2d_block.2} parent=47 // pred_region
        %p3219 = scmp.lt.s32.totalorder %s18, 1
        %s3220 = scalar_select %p3219, %s18, 1
        %s3221 = smul.addr %s3220, 32
        %s3222 = smul.addr %s3221, 8
        %s3223 = scalar_lea.vmem %s3, %s3222
      $region52: #{conv2d_block.2} parent=47 // pred_fallthru
        _
      // Predicated region
      $region53: #{conv2d_block.2} parent=47 // pred_check
        %p3224 = pneg %p135
      $region54: #{conv2d_block.2} parent=47 // pred_check_branch
        %3226 = sbr.rel (%p3224) target = $region56
      $region55: #{conv2d_block.2} parent=47 // pred_region
        %p3227 = scmp.lt.s32.totalorder %s18, 1
        %s3228 = scalar_select %p3227, %s18, 1
        %s3229 = scalar_lea.vmem %s4, %s3228
      $region56: #{conv2d_block.2} parent=47 // pred_fallthru
        _
      // Predicated region
      $region57: #{conv2d_block.2} parent=47 // pred_check
        %p3230 = pneg %p161
      $region58: #{conv2d_block.2} parent=47 // pred_check_branch
        %3232 = sbr.rel (%p3230) target = $region60
      $region59: #{conv2d_block.2} parent=47 // pred_region
        %p3233 = scmp.lt.s32.totalorder %s18, 1
        %s3234 = scalar_select %p3233, %s18, 1
        %s3235 = scalar_lea.vmem %s5, %s3234
      $region60: #{conv2d_block.2} parent=47 // pred_fallthru
        _
    $region48: #{conv2d_block.2} parent=5 // pred_fallthru
      _
  $region6: #{conv2d_block.2} parent=0 // loop_footer
    %s16 = sadd.s32 1, %s12
  $region7: #{conv2d_block.2} parent=0 // loop_footer_branch
    %11 = sbr.rel target = $region3
  $region8: #{conv2d_block.2} parent=0 // loop_exit
    _

</llo_original>
